<compile_context>
chip_gen: v7x
topology: tpu7x:2x2x1
jax: 0.10.0
libtpu: 0.0.40
codegen_flags: <defaults>
</compile_context>

<pallas_src>
import functools

import jax
import jax.numpy as jnp
from jax.experimental import pallas as pl
from jax.experimental.pallas import tpu as pltpu

_NEG_BIG = float(-(2 ** 32) + 1)  # same constant the PyTorch code uses (-4294967295)


def _mha_kernel(q_ref, k_ref, v_ref, kpad_ref, qmask_ref,
                wq_ref, bq_ref, wk_ref, bk_ref, wv_ref, bv_ref,
                gamma_ref, beta_ref, o_ref, kp_ref, vp_ref, *,
                num_heads, causality, epsilon, use_bf16_matmul):
    cdt = jnp.bfloat16 if use_bf16_matmul else jnp.float32

    q = q_ref[0]              # (TQ, C) f32 raw query tile (also the residual input)
    key_pad = kpad_ref[0]     # (1, Tk)  1.0 where the key position is padding
    qmask = qmask_ref[0]      # (TQ, 1)  0.0 where the query position is padding

    TQ, C = q.shape
    Tk = kp_ref.shape[0]
    d = C // num_heads
    scale = 1.0 / (float(d) ** 0.5)

    # ---- K / V projections: once per batch.  The q-tile axis is "arbitrary", so the
    #      (Tk, C) projected K/V persist in VMEM scratch across all query tiles. ----
    @pl.when(pl.program_id(1) == 0)
    def _():
        k = k_ref[0].astype(cdt)
        v = v_ref[0].astype(cdt)
        kp_ref[...] = jnp.maximum(
            jnp.dot(k, wk_ref[...], preferred_element_type=jnp.float32) + bk_ref[...],
            0.0).astype(cdt)
        vp_ref[...] = jnp.maximum(
            jnp.dot(v, wv_ref[...], preferred_element_type=jnp.float32) + bv_ref[...],
            0.0).astype(cdt)

    # ---- Q projection for this tile; fold 1/sqrt(d) in once (one (TQ,C) multiply) ----
    qp = jnp.maximum(
        jnp.dot(q.astype(cdt), wq_ref[...], preferred_element_type=jnp.float32)
        + bq_ref[...], 0.0)
    qp = (qp * scale).astype(cdt)        # cast once before the head loop
    kp = kp_ref[...]
    vp = vp_ref[...]

    # ---- combined key-padding / causal mask, hoisted out of the head loop ----
    key_is_pad = key_pad > 0.5                                        # (1, Tk) bool
    if causality:
        q_base = pl.program_id(1) * TQ                                # global row offset
        row = jax.lax.broadcasted_iota(jnp.int32, (TQ, Tk), 0) + q_base
        col = jax.lax.broadcasted_iota(jnp.int32, (TQ, Tk), 1)
        mask = jnp.logical_or(key_is_pad, col > row)                  # (TQ, Tk)
    else:
        mask = jnp.broadcast_to(key_is_pad, (TQ, Tk))
    neg_big = jnp.float32(_NEG_BIG)

    ctx_parts = []
    for h in range(num_heads):  # static unrolled loop over heads
        qh = qp[:, h * d:(h + 1) * d]
        kh = kp[:, h * d:(h + 1) * d]
        vh = vp[:, h * d:(h + 1) * d]

        # attention scores: (Q_h/sqrt(d)) @ K_h^T  (scale already folded into qp)
        s = jax.lax.dot_general(qh, kh, (((1,), (1,)), ((), ())),
                                preferred_element_type=jnp.float32)
        s = jnp.where(mask, neg_big, s)

        # softmax over keys; query-padding mask fused into the (TQ,1) normalizer
        s_max = jnp.max(s, axis=-1, keepdims=True)
        p = jnp.exp(s - s_max)
        inv = pl.reciprocal(jnp.sum(p, axis=-1, keepdims=True), approx=True) * qmask
        p = (p * inv).astype(cdt)
        # TODO(synk): dropout_rate > 0 not implemented (module default p=0 -> identity)

        ctx_parts.append(jnp.dot(p, vh, preferred_element_type=jnp.float32))

    # one lane-dense (TQ, C) context value (no sub-128-lane masked VMEM stores)
    ctx = jnp.concatenate(ctx_parts, axis=-1)

    # ---- residual + layer norm (torch.std is unbiased: /(C-1); eps added to std) ----
    x = ctx + q
    mean = jnp.mean(x, axis=-1, keepdims=True)
    diff = x - mean
    var = jnp.sum(diff * diff, axis=-1, keepdims=True) * (1.0 / (C - 1))
    inv_std = pl.reciprocal(jnp.sqrt(var) + epsilon)   # exact: feeds the output directly
    o_ref[0] = (gamma_ref[...] * diff * inv_std + beta_ref[...]).astype(o_ref.dtype)


def _pick_vmem_limit():
    """Leave headroom below v7x's 64 MiB/core; use more of v5e/v6e's 128 MiB."""
    try:
        kind = jax.devices()[0].device_kind.lower()
    except Exception:
        kind = ""
    return (56 if "v7" in kind else 100) * 1024 * 1024


def multihead_attention(queries, keys, values, params, *, num_heads=8,
                        causality=False, epsilon=1e-8, q_block=128,
                        use_bf16_matmul=True):
    N, Tq, C = queries.shape
    Tk = keys.shape[1]
    assert C % num_heads == 0
    queries = queries.astype(jnp.float32)
    keys = keys.astype(jnp.float32)
    values = values.astype(jnp.float32)

    # ---- query tiling: pad Tq to a multiple of q_block (no silent tiny-tile fallback);
    #      padded rows are zero -> qmask=0 -> sliced off after the call ----
    if Tq > q_block:
        TQ = q_block
        Tq_pad = -(-Tq // TQ) * TQ
    else:
        TQ = Tq
        Tq_pad = Tq
    n_q = Tq_pad // TQ

    # tiny padding-mask vectors (O(N*T) bytes); broadcast on the VPU in-kernel
    key_pad = (jnp.sum(keys, axis=-1) == 0.0).astype(jnp.float32)[:, None, :]     # (N,1,Tk)

    q_in = queries
    if Tq_pad != Tq:
        q_in = jnp.pad(queries, ((0, 0), (0, Tq_pad - Tq), (0, 0)))
    query_mask = jnp.sign(jnp.abs(jnp.sum(q_in, axis=-1)))[:, :, None]            # (N,Tq_pad,1)

    # nn.Linear: y = x @ W.T + b -> pass W.T; weights and K/V ship as bf16 when enabled
    w_dt = jnp.bfloat16 if use_bf16_matmul else jnp.float32
    wq_t = params["wq"].T.astype(w_dt)
    wk_t = params["wk"].T.astype(w_dt)
    wv_t = params["wv"].T.astype(w_dt)
    k_in = keys.astype(w_dt)
    v_in = values.astype(w_dt)
    bq = params["bq"].reshape(1, C).astype(jnp.float32)
    bk = params["bk"].reshape(1, C).astype(jnp.float32)
    bv = params["bv"].reshape(1, C).astype(jnp.float32)
    gamma = params["gamma"].reshape(1, C).astype(jnp.float32)
    beta = params["beta"].reshape(1, C).astype(jnp.float32)

    kernel = functools.partial(_mha_kernel, num_heads=num_heads, causality=causality,
                               epsilon=epsilon, use_bf16_matmul=use_bf16_matmul)

    def _const(shape):
        # constant-index operand: never changes -> single-buffered (saves VMEM)
        zeros = (0,) * len(shape)
        return pl.BlockSpec(shape, lambda b, i, z=zeros: z,
                            pipeline_mode=pl.Buffered(1))

    grid_spec = pltpu.PrefetchScalarGridSpec(
        num_scalar_prefetch=0,
        grid=(N, n_q),
        in_specs=[
            pl.BlockSpec((1, TQ, C), lambda b, i: (b, i, 0)),      # queries tile (f32)
            pl.BlockSpec((1, Tk, C), lambda b, i: (b, 0, 0)),      # keys (full, per batch)
            pl.BlockSpec((1, Tk, C), lambda b, i: (b, 0, 0)),      # values (full, per batch)
            pl.BlockSpec((1, 1, Tk), lambda b, i: (b, 0, 0)),      # key padding (N,1,Tk)
            pl.BlockSpec((1, TQ, 1), lambda b, i: (b, i, 0)),      # query mask (N,Tq_pad,1)
            _const((C, C)),                                        # Wq^T
            _const((1, C)),                                        # bq
            _const((C, C)),                                        # Wk^T
            _const((1, C)),                                        # bk
            _const((C, C)),                                        # Wv^T
            _const((1, C)),                                        # bv
            _const((1, C)),                                        # gamma
            _const((1, C)),                                        # beta
        ],
        out_specs=pl.BlockSpec((1, TQ, C), lambda b, i: (b, i, 0)),
        # projected K/V cached across query tiles (recomputed only when the batch changes)
        scratch_shapes=[pltpu.VMEM((Tk, C), w_dt),
                        pltpu.VMEM((Tk, C), w_dt)],
    )
    # TODO(synk): for very long Tk, add a Tk grid axis with flash-style online softmax
    #             (and Buffered(1) on K/V) to bound VMEM on v7x's 64 MiB.

    # advisory roofline hint, matching the cached-K/V schedule
    itm = 2 if use_bf16_matmul else 4
    flops = int(2 * C * C * N * (Tq_pad + 2 * Tk)        # Q per tile, K/V once per batch
                + 4 * N * Tq_pad * Tk * C)               # QK^T + P@V over all heads
    transcendentals = int(N * num_heads * Tq_pad * Tk)
    bytes_accessed = int(4 * N * Tq_pad * C * 2          # q in + out (f32)
                         + itm * N * Tk * C * 2          # K, V read once per batch
                         + 4 * N * (Tk + Tq_pad)         # mask vectors
                         + itm * 3 * C * C + 4 * 5 * C)  # weights + biases/gamma/beta
    cost = pl.CostEstimate(flops=flops, transcendentals=transcendentals,
                           bytes_accessed=bytes_accessed)

    out = pl.pallas_call(
        kernel,
        out_shape=jax.ShapeDtypeStruct((N, Tq_pad, C), jnp.float32),
        grid_spec=grid_spec,
        compiler_params=pltpu.CompilerParams(
            # batch axis "parallel" (v7x megacore split); q axis must be "arbitrary"
            # so the K/V projection scratch is valid across query tiles.
            dimension_semantics=("parallel", "arbitrary"),
            vmem_limit_bytes=_pick_vmem_limit()),
        cost_estimate=cost,
    )(q_in, k_in, v_in, key_pad, query_mask,
      wq_t, bq, wk_t, bk, wv_t, bv, gamma, beta)

    if Tq_pad != Tq:
        out = out[:, :Tq, :]
    return out


def _reference(queries, keys, values, params, num_heads=8, causality=False, epsilon=1e-8):
    """Pure-JAX transcription of the PyTorch forward (HIGHEST precision), for verification."""
    hp = jax.lax.Precision.HIGHEST

    def proj(x, w, b):
        return jax.nn.relu(jnp.einsum("ntc,oc->nto", x, w, precision=hp) + b)

    Q = proj(queries, params["wq"], params["bq"])
    K = proj(keys, params["wk"], params["bk"])
    V = proj(values, params["wv"], params["bv"])
    H = num_heads

    def split(x):  # torch.cat(torch.chunk(x, H, dim=2), dim=0)
        return jnp.concatenate(jnp.split(x, H, axis=2), axis=0)

    Q_, K_, V_ = split(Q), split(K), split(V)
    dd = Q_.shape[-1]
    outputs = jnp.einsum("bqd,bkd->bqk", Q_, K_, precision=hp) / dd ** 0.5

    key_masks = jnp.sign(jnp.abs(jnp.sum(keys, axis=-1)))
    key_masks = jnp.broadcast_to(jnp.tile(key_masks, (H, 1))[:, None, :], outputs.shape)
    cond = (key_masks == 0.0).astype(jnp.float32)
    outputs = _NEG_BIG * cond + outputs * (1.0 - cond)
    if causality:
        tril = jnp.tril(jnp.ones(outputs.shape[1:], jnp.float32))
        cond = (tril == 0.0).astype(jnp.float32)[None]
        outputs = _NEG_BIG * cond + outputs * (1.0 - cond)
    outputs = jax.nn.softmax(outputs, axis=-1)

    query_masks = jnp.sign(jnp.abs(jnp.sum(queries, axis=-1)))
    query_masks = jnp.tile(query_masks, (H, 1))[:, :, None]
    outputs = outputs * query_masks

    outputs = jnp.einsum("bqk,bkd->bqd", outputs, V_, precision=hp)
    outputs = jnp.concatenate(jnp.split(outputs, H, axis=0), axis=2)
    outputs = outputs + queries

    mean = outputs.mean(-1, keepdims=True)
    std = jnp.sqrt(((outputs - mean) ** 2).sum(-1, keepdims=True)
                   / (outputs.shape[-1] - 1))
    return params["gamma"] * (outputs - mean) / (std + epsilon) + params["beta"]


if __name__ == "__main__":
    N, T, C, H = 2, 8, 32, 8
    root = jax.random.PRNGKey(0)
    kq, kk, kv, kq2, kwq, kbq, kwk, kbk, kwv, kbv = jax.random.split(root, 10)

    queries = jax.random.normal(kq, (N, T, C), jnp.float32)
    keys_in = jax.random.normal(kk, (N, T, C), jnp.float32)
    values = jax.random.normal(kv, (N, T, C), jnp.float32)
    # zero a couple of positions to exercise the key / query padding masks
    keys_in = keys_in.at[1, -1, :].set(0.0)
    values = values.at[1, -1, :].set(0.0)
    queries = queries.at[0, 0, :].set(0.0)

    params = {
        "wq": 0.1 * jax.random.normal(kwq, (C, C), jnp.float32),
        "bq": 0.1 * jax.random.normal(kbq, (C,), jnp.float32),
        "wk": 0.1 * jax.random.normal(kwk, (C, C), jnp.float32),
        "bk": 0.1 * jax.random.normal(kbk, (C,), jnp.float32),
        "wv": 0.1 * jax.random.normal(kwv, (C, C), jnp.float32),
        "bv": 0.1 * jax.random.normal(kbv, (C,), jnp.float32),
        "gamma": jnp.ones((C,), jnp.float32),   # layer_normalization.gamma
        "beta": jnp.zeros((C,), jnp.float32),   # layer_normalization.beta
    }

    def check(q, k, v, *, causal, use_bf16, q_block, tol):
        out = multihead_attention(q, k, v, params, num_heads=H, causality=causal,
                                  q_block=q_block, use_bf16_matmul=use_bf16)
        out = jax.block_until_ready(out)
        ref = _reference(q, k, v, params, num_heads=H, causality=causal)
        assert out.shape == ref.shape, (out.shape, ref.shape)
        err = float(jnp.max(jnp.abs(out - ref)))
        assert err <= tol, (f"causal={causal} bf16={use_bf16} "
                            f"q_block={q_block} max_err={err}")

    # Tolerances: the reference runs at Precision.HIGHEST, while the kernel's MXU
    # matmuls run at default f32 precision (bf16 passes) or with explicit bf16
    # operands, so ~1e-2 absolute differences are expected at these scales.
    for causal in (False, True):
        check(queries, keys_in, values, causal=causal, use_bf16=False,
              q_block=128, tol=3e-2)
        check(queries, keys_in, values, causal=causal, use_bf16=True,
              q_block=128, tol=5e-2)

    # multi-tile path: Tq=20 > q_block=8 -> TQ=8, Tq padded to 24, 3 query tiles per
    # batch, cached K/V projections reused across tiles, padded rows sliced off.
    queries2 = jax.random.normal(kq2, (N, 20, C), jnp.float32)
    queries2 = queries2.at[0, 5, :].set(0.0)   # a padded query row in the middle
    for causal in (False, True):
        check(queries2, keys_in, values, causal=causal, use_bf16=False,
              q_block=8, tol=3e-2)

    print("KERNEL_OK")
</pallas_src>

<mosaic_0001>
module attributes {stable_mosaic.version = 11 : i64} {
  func.func @_mha_kernel(%arg0: i32, %arg1: i32, %arg2: memref<1x8x32xf32, #tpu.memory_space<vmem>>, %arg3: memref<1x8x32xf32, #tpu.memory_space<vmem>>, %arg4: memref<1x8x32xf32, #tpu.memory_space<vmem>>, %arg5: memref<1x1x8xf32, #tpu.memory_space<vmem>>, %arg6: memref<1x8x1xf32, #tpu.memory_space<vmem>>, %arg7: memref<32x32xf32, #tpu.memory_space<vmem>>, %arg8: memref<1x32xf32, #tpu.memory_space<vmem>>, %arg9: memref<32x32xf32, #tpu.memory_space<vmem>>, %arg10: memref<1x32xf32, #tpu.memory_space<vmem>>, %arg11: memref<32x32xf32, #tpu.memory_space<vmem>>, %arg12: memref<1x32xf32, #tpu.memory_space<vmem>>, %arg13: memref<1x32xf32, #tpu.memory_space<vmem>>, %arg14: memref<1x32xf32, #tpu.memory_space<vmem>>, %arg15: memref<1x8x32xf32, #tpu.memory_space<vmem>>, %arg16: memref<8x32xf32, #tpu.memory_space<vmem>>, %arg17: memref<8x32xf32, #tpu.memory_space<vmem>>) attributes {dimension_semantics = [#tpu.dimension_semantics<parallel>, #tpu.dimension_semantics<arbitrary>], iteration_bounds = array<i64: 2, 1>, scalar_prefetch = 0 : i64, scratch_operands = 2 : i64, tpu.core_type = #tpu.core_type<tc>, window_params = [{transform_indices = @transform_0, window_bounds = array<i64: 1, 8, 32>}, {transform_indices = @transform_1, window_bounds = array<i64: 1, 8, 32>}, {transform_indices = @transform_2, window_bounds = array<i64: 1, 8, 32>}, {transform_indices = @transform_3, window_bounds = array<i64: 1, 1, 8>}, {transform_indices = @transform_4, window_bounds = array<i64: 1, 8, 1>}, {pipeline_mode = #tpu.pipeline_mode<synchronous>, transform_indices = @transform_5, window_bounds = array<i64: 32, 32>}, {pipeline_mode = #tpu.pipeline_mode<synchronous>, transform_indices = @transform_6, window_bounds = array<i64: 1, 32>}, {pipeline_mode = #tpu.pipeline_mode<synchronous>, transform_indices = @transform_7, window_bounds = array<i64: 32, 32>}, {pipeline_mode = #tpu.pipeline_mode<synchronous>, transform_indices = @transform_8, window_bounds = array<i64: 1, 32>}, {pipeline_mode = #tpu.pipeline_mode<synchronous>, transform_indices = @transform_9, window_bounds = array<i64: 32, 32>}, {pipeline_mode = #tpu.pipeline_mode<synchronous>, transform_indices = @transform_10, window_bounds = array<i64: 1, 32>}, {pipeline_mode = #tpu.pipeline_mode<synchronous>, transform_indices = @transform_11, window_bounds = array<i64: 1, 32>}, {pipeline_mode = #tpu.pipeline_mode<synchronous>, transform_indices = @transform_12, window_bounds = array<i64: 1, 32>}, {transform_indices = @transform_13, window_bounds = array<i64: 1, 8, 32>}]} {
    %c0 = arith.constant 0 : index
    %c0_0 = arith.constant 0 : index
    %c0_1 = arith.constant 0 : index
    %0 = vector.load %arg2[%c0, %c0_0, %c0_1] : memref<1x8x32xf32, #tpu.memory_space<vmem>>, vector<1x8x32xf32>
    %1 = vector.shape_cast %0 : vector<1x8x32xf32> to vector<8x32xf32>
    %c0_2 = arith.constant 0 : index
    %c0_3 = arith.constant 0 : index
    %c0_4 = arith.constant 0 : index
    %2 = vector.load %arg5[%c0_2, %c0_3, %c0_4] : memref<1x1x8xf32, #tpu.memory_space<vmem>>, vector<1x1x8xf32>
    %3 = vector.shape_cast %2 : vector<1x1x8xf32> to vector<1x8xf32>
    %c0_5 = arith.constant 0 : index
    %c0_6 = arith.constant 0 : index
    %c0_7 = arith.constant 0 : index
    %4 = vector.load %arg6[%c0_5, %c0_6, %c0_7] : memref<1x8x1xf32, #tpu.memory_space<vmem>>, vector<1x8x1xf32>
    %5 = vector.shape_cast %4 : vector<1x8x1xf32> to vector<8x1xf32>
    %c0_i32 = arith.constant 0 : i32
    %6 = arith.cmpi eq, %arg1, %c0_i32 : i32
    %7 = arith.extui %6 : i1 to i32
    %c0_i32_8 = arith.constant 0 : i32
    %8 = arith.cmpi ne, %7, %c0_i32_8 : i32
    scf.if %8 {
      %c0_72 = arith.constant 0 : index
      %c0_73 = arith.constant 0 : index
      %c0_74 = arith.constant 0 : index
      %196 = vector.load %arg3[%c0_72, %c0_73, %c0_74] : memref<1x8x32xf32, #tpu.memory_space<vmem>>, vector<1x8x32xf32>
      %197 = vector.shape_cast %196 : vector<1x8x32xf32> to vector<8x32xf32>
      %c0_75 = arith.constant 0 : index
      %c0_76 = arith.constant 0 : index
      %c0_77 = arith.constant 0 : index
      %198 = vector.load %arg4[%c0_75, %c0_76, %c0_77] : memref<1x8x32xf32, #tpu.memory_space<vmem>>, vector<1x8x32xf32>
      %199 = vector.shape_cast %198 : vector<1x8x32xf32> to vector<8x32xf32>
      %c0_78 = arith.constant 0 : index
      %c0_79 = arith.constant 0 : index
      %200 = vector.load %arg9[%c0_78, %c0_79] : memref<32x32xf32, #tpu.memory_space<vmem>>, vector<32x32xf32>
      %cst_80 = arith.constant dense<0.000000e+00> : vector<8x32xf32>
      %201 = tpu.matmul %197, %200, %cst_80 {dimension_numbers = #tpu.dot_dimension_numbers<[1], [0], [0], [1], [0, 0, 1, 1], [], []>} : vector<8x32xf32>, vector<32x32xf32>, vector<8x32xf32> -> vector<8x32xf32>
      %c0_81 = arith.constant 0 : index
      %c0_82 = arith.constant 0 : index
      %202 = vector.load %arg10[%c0_81, %c0_82] : memref<1x32xf32, #tpu.memory_space<vmem>>, vector<1x32xf32>
      %203 = vector.broadcast %202 : vector<1x32xf32> to vector<8x32xf32>
      %204 = arith.addf %201, %203 : vector<8x32xf32>
      %cst_83 = arith.constant 0.000000e+00 : f32
      %205 = vector.broadcast %cst_83 : f32 to vector<8x32xf32>
      %206 = arith.maximumf %204, %205 : vector<8x32xf32>
      %c0_84 = arith.constant 0 : index
      %c0_85 = arith.constant 0 : index
      %207 = vector.load %arg16[%c0_84, %c0_85] : memref<8x32xf32, #tpu.memory_space<vmem>>, vector<8x32xf32>
      tpu.vector_store %arg16[%c0_84, %c0_85], %206 {strides = array<i32>} : memref<8x32xf32, #tpu.memory_space<vmem>>, vector<8x32xf32>,
      %c0_86 = arith.constant 0 : index
      %c0_87 = arith.constant 0 : index
      %208 = vector.load %arg11[%c0_86, %c0_87] : memref<32x32xf32, #tpu.memory_space<vmem>>, vector<32x32xf32>
      %cst_88 = arith.constant dense<0.000000e+00> : vector<8x32xf32>
      %209 = tpu.matmul %199, %208, %cst_88 {dimension_numbers = #tpu.dot_dimension_numbers<[1], [0], [0], [1], [0, 0, 1, 1], [], []>} : vector<8x32xf32>, vector<32x32xf32>, vector<8x32xf32> -> vector<8x32xf32>
      %c0_89 = arith.constant 0 : index
      %c0_90 = arith.constant 0 : index
      %210 = vector.load %arg12[%c0_89, %c0_90] : memref<1x32xf32, #tpu.memory_space<vmem>>, vector<1x32xf32>
      %211 = vector.broadcast %210 : vector<1x32xf32> to vector<8x32xf32>
      %212 = arith.addf %209, %211 : vector<8x32xf32>
      %cst_91 = arith.constant 0.000000e+00 : f32
      %213 = vector.broadcast %cst_91 : f32 to vector<8x32xf32>
      %214 = arith.maximumf %212, %213 : vector<8x32xf32>
      %c0_92 = arith.constant 0 : index
      %c0_93 = arith.constant 0 : index
      %215 = vector.load %arg17[%c0_92, %c0_93] : memref<8x32xf32, #tpu.memory_space<vmem>>, vector<8x32xf32>
      tpu.vector_store %arg17[%c0_92, %c0_93], %214 {strides = array<i32>} : memref<8x32xf32, #tpu.memory_space<vmem>>, vector<8x32xf32>,
    } else {
    }
    %c0_9 = arith.constant 0 : index
    %c0_10 = arith.constant 0 : index
    %9 = vector.load %arg7[%c0_9, %c0_10] : memref<32x32xf32, #tpu.memory_space<vmem>>, vector<32x32xf32>
    %cst = arith.constant dense<0.000000e+00> : vector<8x32xf32>
    %10 = tpu.matmul %1, %9, %cst {dimension_numbers = #tpu.dot_dimension_numbers<[1], [0], [0], [1], [0, 0, 1, 1], [], []>} : vector<8x32xf32>, vector<32x32xf32>, vector<8x32xf32> -> vector<8x32xf32>
    %c0_11 = arith.constant 0 : index
    %c0_12 = arith.constant 0 : index
    %11 = vector.load %arg8[%c0_11, %c0_12] : memref<1x32xf32, #tpu.memory_space<vmem>>, vector<1x32xf32>
    %12 = vector.broadcast %11 : vector<1x32xf32> to vector<8x32xf32>
    %13 = arith.addf %10, %12 : vector<8x32xf32>
    %cst_13 = arith.constant 0.000000e+00 : f32
    %14 = vector.broadcast %cst_13 : f32 to vector<8x32xf32>
    %15 = arith.maximumf %13, %14 : vector<8x32xf32>
    %cst_14 = arith.constant 5.000000e-01 : f32
    %16 = vector.broadcast %cst_14 : f32 to vector<8x32xf32>
    %17 = arith.mulf %15, %16 : vector<8x32xf32>
    %c0_15 = arith.constant 0 : index
    %c0_16 = arith.constant 0 : index
    %18 = vector.load %arg16[%c0_15, %c0_16] : memref<8x32xf32, #tpu.memory_space<vmem>>, vector<8x32xf32>
    %c0_17 = arith.constant 0 : index
    %c0_18 = arith.constant 0 : index
    %19 = vector.load %arg17[%c0_17, %c0_18] : memref<8x32xf32, #tpu.memory_space<vmem>>, vector<8x32xf32>
    %cst_19 = arith.constant 5.000000e-01 : f32
    %20 = vector.broadcast %cst_19 : f32 to vector<1x8xf32>
    %21 = arith.cmpf ogt, %3, %20 : vector<1x8xf32>
    %22 = vector.shape_cast %21 : vector<1x8xi1> to vector<1x8xi1>
    %23 = vector.broadcast %22 : vector<1x8xi1> to vector<8x8xi1>
    %24 = vector.extract_strided_slice %17 {offsets = [0, 0], sizes = [8, 4], strides = [1, 1]} : vector<8x32xf32> to vector<8x4xf32>
    %25 = vector.extract_strided_slice %18 {offsets = [0, 0], sizes = [8, 4], strides = [1, 1]} : vector<8x32xf32> to vector<8x4xf32>
    %26 = vector.extract_strided_slice %19 {offsets = [0, 0], sizes = [8, 4], strides = [1, 1]} : vector<8x32xf32> to vector<8x4xf32>
    %cst_20 = arith.constant dense<0.000000e+00> : vector<8x8xf32>
    %27 = tpu.matmul %24, %25, %cst_20 {dimension_numbers = #tpu.dot_dimension_numbers<[1], [1], [0], [0], [0, 0, 1, 0], [], []>} : vector<8x4xf32>, vector<8x4xf32>, vector<8x8xf32> -> vector<8x8xf32>
    %cst_21 = arith.constant -4.2949673E+9 : f32
    %28 = vector.broadcast %cst_21 : f32 to vector<8x8xf32>
    %29 = arith.select %23, %28, %27 : vector<8x8xi1>, vector<8x8xf32>
    %cst_22 = arith.constant dense<0xFF800000> : vector<8xf32>
    %30 = vector.multi_reduction <maximumf>, %29, %cst_22 [1] : vector<8x8xf32> to vector<8xf32>
    %31 = vector.shape_cast %30 : vector<8xf32> to vector<8x1xf32>
    %32 = vector.broadcast %31 : vector<8x1xf32> to vector<8x8xf32>
    %33 = arith.subf %29, %32 : vector<8x8xf32>
    %34 = math.exp %33 : vector<8x8xf32>
    %cst_23 = arith.constant dense<0.000000e+00> : vector<8xf32>
    %35 = vector.multi_reduction <add>, %34, %cst_23 [1] : vector<8x8xf32> to vector<8xf32>
    %36 = vector.shape_cast %35 : vector<8xf32> to vector<8x1xf32>
    %37 = tpu.reciprocal %36 {approx = true} : vector<8x1xf32> -> vector<8x1xf32>
    %38 = arith.mulf %37, %5 : vector<8x1xf32>
    %39 = vector.broadcast %38 : vector<8x1xf32> to vector<8x8xf32>
    %40 = arith.mulf %34, %39 : vector<8x8xf32>
    %cst_24 = arith.constant dense<0.000000e+00> : vector<8x4xf32>
    %41 = tpu.matmul %40, %26, %cst_24 {dimension_numbers = #tpu.dot_dimension_numbers<[1], [0], [0], [1], [0, 0, 1, 1], [], []>} : vector<8x8xf32>, vector<8x4xf32>, vector<8x4xf32> -> vector<8x4xf32>
    %42 = vector.extract_strided_slice %17 {offsets = [0, 4], sizes = [8, 4], strides = [1, 1]} : vector<8x32xf32> to vector<8x4xf32>
    %43 = vector.extract_strided_slice %18 {offsets = [0, 4], sizes = [8, 4], strides = [1, 1]} : vector<8x32xf32> to vector<8x4xf32>
    %44 = vector.extract_strided_slice %19 {offsets = [0, 4], sizes = [8, 4], strides = [1, 1]} : vector<8x32xf32> to vector<8x4xf32>
    %cst_25 = arith.constant dense<0.000000e+00> : vector<8x8xf32>
    %45 = tpu.matmul %42, %43, %cst_25 {dimension_numbers = #tpu.dot_dimension_numbers<[1], [1], [0], [0], [0, 0, 1, 0], [], []>} : vector<8x4xf32>, vector<8x4xf32>, vector<8x8xf32> -> vector<8x8xf32>
    %cst_26 = arith.constant -4.2949673E+9 : f32
    %46 = vector.broadcast %cst_26 : f32 to vector<8x8xf32>
    %47 = arith.select %23, %46, %45 : vector<8x8xi1>, vector<8x8xf32>
    %cst_27 = arith.constant dense<0xFF800000> : vector<8xf32>
    %48 = vector.multi_reduction <maximumf>, %47, %cst_27 [1] : vector<8x8xf32> to vector<8xf32>
    %49 = vector.shape_cast %48 : vector<8xf32> to vector<8x1xf32>
    %50 = vector.broadcast %49 : vector<8x1xf32> to vector<8x8xf32>
    %51 = arith.subf %47, %50 : vector<8x8xf32>
    %52 = math.exp %51 : vector<8x8xf32>
    %cst_28 = arith.constant dense<0.000000e+00> : vector<8xf32>
    %53 = vector.multi_reduction <add>, %52, %cst_28 [1] : vector<8x8xf32> to vector<8xf32>
    %54 = vector.shape_cast %53 : vector<8xf32> to vector<8x1xf32>
    %55 = tpu.reciprocal %54 {approx = true} : vector<8x1xf32> -> vector<8x1xf32>
    %56 = arith.mulf %55, %5 : vector<8x1xf32>
    %57 = vector.broadcast %56 : vector<8x1xf32> to vector<8x8xf32>
    %58 = arith.mulf %52, %57 : vector<8x8xf32>
    %cst_29 = arith.constant dense<0.000000e+00> : vector<8x4xf32>
    %59 = tpu.matmul %58, %44, %cst_29 {dimension_numbers = #tpu.dot_dimension_numbers<[1], [0], [0], [1], [0, 0, 1, 1], [], []>} : vector<8x8xf32>, vector<8x4xf32>, vector<8x4xf32> -> vector<8x4xf32>
    %60 = vector.extract_strided_slice %17 {offsets = [0, 8], sizes = [8, 4], strides = [1, 1]} : vector<8x32xf32> to vector<8x4xf32>
    %61 = vector.extract_strided_slice %18 {offsets = [0, 8], sizes = [8, 4], strides = [1, 1]} : vector<8x32xf32> to vector<8x4xf32>
    %62 = vector.extract_strided_slice %19 {offsets = [0, 8], sizes = [8, 4], strides = [1, 1]} : vector<8x32xf32> to vector<8x4xf32>
    %cst_30 = arith.constant dense<0.000000e+00> : vector<8x8xf32>
    %63 = tpu.matmul %60, %61, %cst_30 {dimension_numbers = #tpu.dot_dimension_numbers<[1], [1], [0], [0], [0, 0, 1, 0], [], []>} : vector<8x4xf32>, vector<8x4xf32>, vector<8x8xf32> -> vector<8x8xf32>
    %cst_31 = arith.constant -4.2949673E+9 : f32
    %64 = vector.broadcast %cst_31 : f32 to vector<8x8xf32>
    %65 = arith.select %23, %64, %63 : vector<8x8xi1>, vector<8x8xf32>
    %cst_32 = arith.constant dense<0xFF800000> : vector<8xf32>
    %66 = vector.multi_reduction <maximumf>, %65, %cst_32 [1] : vector<8x8xf32> to vector<8xf32>
    %67 = vector.shape_cast %66 : vector<8xf32> to vector<8x1xf32>
    %68 = vector.broadcast %67 : vector<8x1xf32> to vector<8x8xf32>
    %69 = arith.subf %65, %68 : vector<8x8xf32>
    %70 = math.exp %69 : vector<8x8xf32>
    %cst_33 = arith.constant dense<0.000000e+00> : vector<8xf32>
    %71 = vector.multi_reduction <add>, %70, %cst_33 [1] : vector<8x8xf32> to vector<8xf32>
    %72 = vector.shape_cast %71 : vector<8xf32> to vector<8x1xf32>
    %73 = tpu.reciprocal %72 {approx = true} : vector<8x1xf32> -> vector<8x1xf32>
    %74 = arith.mulf %73, %5 : vector<8x1xf32>
    %75 = vector.broadcast %74 : vector<8x1xf32> to vector<8x8xf32>
    %76 = arith.mulf %70, %75 : vector<8x8xf32>
    %cst_34 = arith.constant dense<0.000000e+00> : vector<8x4xf32>
    %77 = tpu.matmul %76, %62, %cst_34 {dimension_numbers = #tpu.dot_dimension_numbers<[1], [0], [0], [1], [0, 0, 1, 1], [], []>} : vector<8x8xf32>, vector<8x4xf32>, vector<8x4xf32> -> vector<8x4xf32>
    %78 = vector.extract_strided_slice %17 {offsets = [0, 12], sizes = [8, 4], strides = [1, 1]} : vector<8x32xf32> to vector<8x4xf32>
    %79 = vector.extract_strided_slice %18 {offsets = [0, 12], sizes = [8, 4], strides = [1, 1]} : vector<8x32xf32> to vector<8x4xf32>
    %80 = vector.extract_strided_slice %19 {offsets = [0, 12], sizes = [8, 4], strides = [1, 1]} : vector<8x32xf32> to vector<8x4xf32>
    %cst_35 = arith.constant dense<0.000000e+00> : vector<8x8xf32>
    %81 = tpu.matmul %78, %79, %cst_35 {dimension_numbers = #tpu.dot_dimension_numbers<[1], [1], [0], [0], [0, 0, 1, 0], [], []>} : vector<8x4xf32>, vector<8x4xf32>, vector<8x8xf32> -> vector<8x8xf32>
    %cst_36 = arith.constant -4.2949673E+9 : f32
    %82 = vector.broadcast %cst_36 : f32 to vector<8x8xf32>
    %83 = arith.select %23, %82, %81 : vector<8x8xi1>, vector<8x8xf32>
    %cst_37 = arith.constant dense<0xFF800000> : vector<8xf32>
    %84 = vector.multi_reduction <maximumf>, %83, %cst_37 [1] : vector<8x8xf32> to vector<8xf32>
    %85 = vector.shape_cast %84 : vector<8xf32> to vector<8x1xf32>
    %86 = vector.broadcast %85 : vector<8x1xf32> to vector<8x8xf32>
    %87 = arith.subf %83, %86 : vector<8x8xf32>
    %88 = math.exp %87 : vector<8x8xf32>
    %cst_38 = arith.constant dense<0.000000e+00> : vector<8xf32>
    %89 = vector.multi_reduction <add>, %88, %cst_38 [1] : vector<8x8xf32> to vector<8xf32>
    %90 = vector.shape_cast %89 : vector<8xf32> to vector<8x1xf32>
    %91 = tpu.reciprocal %90 {approx = true} : vector<8x1xf32> -> vector<8x1xf32>
    %92 = arith.mulf %91, %5 : vector<8x1xf32>
    %93 = vector.broadcast %92 : vector<8x1xf32> to vector<8x8xf32>
    %94 = arith.mulf %88, %93 : vector<8x8xf32>
    %cst_39 = arith.constant dense<0.000000e+00> : vector<8x4xf32>
    %95 = tpu.matmul %94, %80, %cst_39 {dimension_numbers = #tpu.dot_dimension_numbers<[1], [0], [0], [1], [0, 0, 1, 1], [], []>} : vector<8x8xf32>, vector<8x4xf32>, vector<8x4xf32> -> vector<8x4xf32>
    %96 = vector.extract_strided_slice %17 {offsets = [0, 16], sizes = [8, 4], strides = [1, 1]} : vector<8x32xf32> to vector<8x4xf32>
    %97 = vector.extract_strided_slice %18 {offsets = [0, 16], sizes = [8, 4], strides = [1, 1]} : vector<8x32xf32> to vector<8x4xf32>
    %98 = vector.extract_strided_slice %19 {offsets = [0, 16], sizes = [8, 4], strides = [1, 1]} : vector<8x32xf32> to vector<8x4xf32>
    %cst_40 = arith.constant dense<0.000000e+00> : vector<8x8xf32>
    %99 = tpu.matmul %96, %97, %cst_40 {dimension_numbers = #tpu.dot_dimension_numbers<[1], [1], [0], [0], [0, 0, 1, 0], [], []>} : vector<8x4xf32>, vector<8x4xf32>, vector<8x8xf32> -> vector<8x8xf32>
    %cst_41 = arith.constant -4.2949673E+9 : f32
    %100 = vector.broadcast %cst_41 : f32 to vector<8x8xf32>
    %101 = arith.select %23, %100, %99 : vector<8x8xi1>, vector<8x8xf32>
    %cst_42 = arith.constant dense<0xFF800000> : vector<8xf32>
    %102 = vector.multi_reduction <maximumf>, %101, %cst_42 [1] : vector<8x8xf32> to vector<8xf32>
    %103 = vector.shape_cast %102 : vector<8xf32> to vector<8x1xf32>
    %104 = vector.broadcast %103 : vector<8x1xf32> to vector<8x8xf32>
    %105 = arith.subf %101, %104 : vector<8x8xf32>
    %106 = math.exp %105 : vector<8x8xf32>
    %cst_43 = arith.constant dense<0.000000e+00> : vector<8xf32>
    %107 = vector.multi_reduction <add>, %106, %cst_43 [1] : vector<8x8xf32> to vector<8xf32>
    %108 = vector.shape_cast %107 : vector<8xf32> to vector<8x1xf32>
    %109 = tpu.reciprocal %108 {approx = true} : vector<8x1xf32> -> vector<8x1xf32>
    %110 = arith.mulf %109, %5 : vector<8x1xf32>
    %111 = vector.broadcast %110 : vector<8x1xf32> to vector<8x8xf32>
    %112 = arith.mulf %106, %111 : vector<8x8xf32>
    %cst_44 = arith.constant dense<0.000000e+00> : vector<8x4xf32>
    %113 = tpu.matmul %112, %98, %cst_44 {dimension_numbers = #tpu.dot_dimension_numbers<[1], [0], [0], [1], [0, 0, 1, 1], [], []>} : vector<8x8xf32>, vector<8x4xf32>, vector<8x4xf32> -> vector<8x4xf32>
    %114 = vector.extract_strided_slice %17 {offsets = [0, 20], sizes = [8, 4], strides = [1, 1]} : vector<8x32xf32> to vector<8x4xf32>
    %115 = vector.extract_strided_slice %18 {offsets = [0, 20], sizes = [8, 4], strides = [1, 1]} : vector<8x32xf32> to vector<8x4xf32>
    %116 = vector.extract_strided_slice %19 {offsets = [0, 20], sizes = [8, 4], strides = [1, 1]} : vector<8x32xf32> to vector<8x4xf32>
    %cst_45 = arith.constant dense<0.000000e+00> : vector<8x8xf32>
    %117 = tpu.matmul %114, %115, %cst_45 {dimension_numbers = #tpu.dot_dimension_numbers<[1], [1], [0], [0], [0, 0, 1, 0], [], []>} : vector<8x4xf32>, vector<8x4xf32>, vector<8x8xf32> -> vector<8x8xf32>
    %cst_46 = arith.constant -4.2949673E+9 : f32
    %118 = vector.broadcast %cst_46 : f32 to vector<8x8xf32>
    %119 = arith.select %23, %118, %117 : vector<8x8xi1>, vector<8x8xf32>
    %cst_47 = arith.constant dense<0xFF800000> : vector<8xf32>
    %120 = vector.multi_reduction <maximumf>, %119, %cst_47 [1] : vector<8x8xf32> to vector<8xf32>
    %121 = vector.shape_cast %120 : vector<8xf32> to vector<8x1xf32>
    %122 = vector.broadcast %121 : vector<8x1xf32> to vector<8x8xf32>
    %123 = arith.subf %119, %122 : vector<8x8xf32>
    %124 = math.exp %123 : vector<8x8xf32>
    %cst_48 = arith.constant dense<0.000000e+00> : vector<8xf32>
    %125 = vector.multi_reduction <add>, %124, %cst_48 [1] : vector<8x8xf32> to vector<8xf32>
    %126 = vector.shape_cast %125 : vector<8xf32> to vector<8x1xf32>
    %127 = tpu.reciprocal %126 {approx = true} : vector<8x1xf32> -> vector<8x1xf32>
    %128 = arith.mulf %127, %5 : vector<8x1xf32>
    %129 = vector.broadcast %128 : vector<8x1xf32> to vector<8x8xf32>
    %130 = arith.mulf %124, %129 : vector<8x8xf32>
    %cst_49 = arith.constant dense<0.000000e+00> : vector<8x4xf32>
    %131 = tpu.matmul %130, %116, %cst_49 {dimension_numbers = #tpu.dot_dimension_numbers<[1], [0], [0], [1], [0, 0, 1, 1], [], []>} : vector<8x8xf32>, vector<8x4xf32>, vector<8x4xf32> -> vector<8x4xf32>
    %132 = vector.extract_strided_slice %17 {offsets = [0, 24], sizes = [8, 4], strides = [1, 1]} : vector<8x32xf32> to vector<8x4xf32>
    %133 = vector.extract_strided_slice %18 {offsets = [0, 24], sizes = [8, 4], strides = [1, 1]} : vector<8x32xf32> to vector<8x4xf32>
    %134 = vector.extract_strided_slice %19 {offsets = [0, 24], sizes = [8, 4], strides = [1, 1]} : vector<8x32xf32> to vector<8x4xf32>
    %cst_50 = arith.constant dense<0.000000e+00> : vector<8x8xf32>
    %135 = tpu.matmul %132, %133, %cst_50 {dimension_numbers = #tpu.dot_dimension_numbers<[1], [1], [0], [0], [0, 0, 1, 0], [], []>} : vector<8x4xf32>, vector<8x4xf32>, vector<8x8xf32> -> vector<8x8xf32>
    %cst_51 = arith.constant -4.2949673E+9 : f32
    %136 = vector.broadcast %cst_51 : f32 to vector<8x8xf32>
    %137 = arith.select %23, %136, %135 : vector<8x8xi1>, vector<8x8xf32>
    %cst_52 = arith.constant dense<0xFF800000> : vector<8xf32>
    %138 = vector.multi_reduction <maximumf>, %137, %cst_52 [1] : vector<8x8xf32> to vector<8xf32>
    %139 = vector.shape_cast %138 : vector<8xf32> to vector<8x1xf32>
    %140 = vector.broadcast %139 : vector<8x1xf32> to vector<8x8xf32>
    %141 = arith.subf %137, %140 : vector<8x8xf32>
    %142 = math.exp %141 : vector<8x8xf32>
    %cst_53 = arith.constant dense<0.000000e+00> : vector<8xf32>
    %143 = vector.multi_reduction <add>, %142, %cst_53 [1] : vector<8x8xf32> to vector<8xf32>
    %144 = vector.shape_cast %143 : vector<8xf32> to vector<8x1xf32>
    %145 = tpu.reciprocal %144 {approx = true} : vector<8x1xf32> -> vector<8x1xf32>
    %146 = arith.mulf %145, %5 : vector<8x1xf32>
    %147 = vector.broadcast %146 : vector<8x1xf32> to vector<8x8xf32>
    %148 = arith.mulf %142, %147 : vector<8x8xf32>
    %cst_54 = arith.constant dense<0.000000e+00> : vector<8x4xf32>
    %149 = tpu.matmul %148, %134, %cst_54 {dimension_numbers = #tpu.dot_dimension_numbers<[1], [0], [0], [1], [0, 0, 1, 1], [], []>} : vector<8x8xf32>, vector<8x4xf32>, vector<8x4xf32> -> vector<8x4xf32>
    %150 = vector.extract_strided_slice %17 {offsets = [0, 28], sizes = [8, 4], strides = [1, 1]} : vector<8x32xf32> to vector<8x4xf32>
    %151 = vector.extract_strided_slice %18 {offsets = [0, 28], sizes = [8, 4], strides = [1, 1]} : vector<8x32xf32> to vector<8x4xf32>
    %152 = vector.extract_strided_slice %19 {offsets = [0, 28], sizes = [8, 4], strides = [1, 1]} : vector<8x32xf32> to vector<8x4xf32>
    %cst_55 = arith.constant dense<0.000000e+00> : vector<8x8xf32>
    %153 = tpu.matmul %150, %151, %cst_55 {dimension_numbers = #tpu.dot_dimension_numbers<[1], [1], [0], [0], [0, 0, 1, 0], [], []>} : vector<8x4xf32>, vector<8x4xf32>, vector<8x8xf32> -> vector<8x8xf32>
    %cst_56 = arith.constant -4.2949673E+9 : f32
    %154 = vector.broadcast %cst_56 : f32 to vector<8x8xf32>
    %155 = arith.select %23, %154, %153 : vector<8x8xi1>, vector<8x8xf32>
    %cst_57 = arith.constant dense<0xFF800000> : vector<8xf32>
    %156 = vector.multi_reduction <maximumf>, %155, %cst_57 [1] : vector<8x8xf32> to vector<8xf32>
    %157 = vector.shape_cast %156 : vector<8xf32> to vector<8x1xf32>
    %158 = vector.broadcast %157 : vector<8x1xf32> to vector<8x8xf32>
    %159 = arith.subf %155, %158 : vector<8x8xf32>
    %160 = math.exp %159 : vector<8x8xf32>
    %cst_58 = arith.constant dense<0.000000e+00> : vector<8xf32>
    %161 = vector.multi_reduction <add>, %160, %cst_58 [1] : vector<8x8xf32> to vector<8xf32>
    %162 = vector.shape_cast %161 : vector<8xf32> to vector<8x1xf32>
    %163 = tpu.reciprocal %162 {approx = true} : vector<8x1xf32> -> vector<8x1xf32>
    %164 = arith.mulf %163, %5 : vector<8x1xf32>
    %165 = vector.broadcast %164 : vector<8x1xf32> to vector<8x8xf32>
    %166 = arith.mulf %160, %165 : vector<8x8xf32>
    %cst_59 = arith.constant dense<0.000000e+00> : vector<8x4xf32>
    %167 = tpu.matmul %166, %152, %cst_59 {dimension_numbers = #tpu.dot_dimension_numbers<[1], [0], [0], [1], [0, 0, 1, 1], [], []>} : vector<8x8xf32>, vector<8x4xf32>, vector<8x4xf32> -> vector<8x4xf32>
    %168 = tpu.concatenate %41, %59, %77, %95, %113, %131, %149, %167 in 1 : vector<8x4xf32>, vector<8x4xf32>, vector<8x4xf32>, vector<8x4xf32>, vector<8x4xf32>, vector<8x4xf32>, vector<8x4xf32>, vector<8x4xf32> -> vector<8x32xf32>
    %169 = arith.addf %168, %1 : vector<8x32xf32>
    %cst_60 = arith.constant dense<0.000000e+00> : vector<8xf32>
    %170 = vector.multi_reduction <add>, %169, %cst_60 [1] : vector<8x32xf32> to vector<8xf32>
    %171 = vector.shape_cast %170 : vector<8xf32> to vector<8x1xf32>
    %cst_61 = arith.constant 3.200000e+01 : f32
    %172 = vector.broadcast %cst_61 : f32 to vector<8x1xf32>
    %173 = arith.divf %171, %172 : vector<8x1xf32>
    %174 = vector.broadcast %173 : vector<8x1xf32> to vector<8x32xf32>
    %175 = arith.subf %169, %174 : vector<8x32xf32>
    %176 = arith.mulf %175, %175 : vector<8x32xf32>
    %cst_62 = arith.constant dense<0.000000e+00> : vector<8xf32>
    %177 = vector.multi_reduction <add>, %176, %cst_62 [1] : vector<8x32xf32> to vector<8xf32>
    %178 = vector.shape_cast %177 : vector<8xf32> to vector<8x1xf32>
    %cst_63 = arith.constant 0.0322580636 : f32
    %179 = vector.broadcast %cst_63 : f32 to vector<8x1xf32>
    %180 = arith.mulf %178, %179 : vector<8x1xf32>
    %181 = math.sqrt %180 : vector<8x1xf32>
    %cst_64 = arith.constant 9.99999993E-9 : f32
    %182 = vector.broadcast %cst_64 : f32 to vector<8x1xf32>
    %183 = arith.addf %181, %182 : vector<8x1xf32>
    %184 = tpu.reciprocal %183 : vector<8x1xf32> -> vector<8x1xf32>
    %c0_65 = arith.constant 0 : index
    %c0_66 = arith.constant 0 : index
    %185 = vector.load %arg13[%c0_65, %c0_66] : memref<1x32xf32, #tpu.memory_space<vmem>>, vector<1x32xf32>
    %186 = vector.broadcast %185 : vector<1x32xf32> to vector<8x32xf32>
    %187 = arith.mulf %186, %175 : vector<8x32xf32>
    %188 = vector.broadcast %184 : vector<8x1xf32> to vector<8x32xf32>
    %189 = arith.mulf %187, %188 : vector<8x32xf32>
    %c0_67 = arith.constant 0 : index
    %c0_68 = arith.constant 0 : index
    %190 = vector.load %arg14[%c0_67, %c0_68] : memref<1x32xf32, #tpu.memory_space<vmem>>, vector<1x32xf32>
    %191 = vector.broadcast %190 : vector<1x32xf32> to vector<8x32xf32>
    %192 = arith.addf %189, %191 : vector<8x32xf32>
    %c0_69 = arith.constant 0 : index
    %c0_70 = arith.constant 0 : index
    %c0_71 = arith.constant 0 : index
    %193 = vector.load %arg15[%c0_69, %c0_70, %c0_71] : memref<1x8x32xf32, #tpu.memory_space<vmem>>, vector<1x8x32xf32>
    %194 = vector.shape_cast %193 : vector<1x8x32xf32> to vector<8x32xf32>
    %195 = vector.shape_cast %192 : vector<8x32xf32> to vector<1x8x32xf32>
    tpu.vector_store %arg15[%c0_69, %c0_70, %c0_71], %195 {strides = array<i32>} : memref<1x8x32xf32, #tpu.memory_space<vmem>>, vector<1x8x32xf32>,
    return
  }
  func.func @transform_0(%arg0: i32, %arg1: i32) -> (i32, i32, i32) {
    %c0_i32 = arith.constant 0 : i32
    %c0_i32_0 = arith.constant 0 : i32
    return %arg0, %arg1, %c0_i32 : i32, i32, i32
  }
  func.func @transform_1(%arg0: i32, %arg1: i32) -> (i32, i32, i32) {
    %c0_i32 = arith.constant 0 : i32
    %c0_i32_0 = arith.constant 0 : i32
    %c0_i32_1 = arith.constant 0 : i32
    return %arg0, %c0_i32, %c0_i32_0 : i32, i32, i32
  }
  func.func @transform_2(%arg0: i32, %arg1: i32) -> (i32, i32, i32) {
    %c0_i32 = arith.constant 0 : i32
    %c0_i32_0 = arith.constant 0 : i32
    %c0_i32_1 = arith.constant 0 : i32
    return %arg0, %c0_i32, %c0_i32_0 : i32, i32, i32
  }
  func.func @transform_3(%arg0: i32, %arg1: i32) -> (i32, i32, i32) {
    %c0_i32 = arith.constant 0 : i32
    %c0_i32_0 = arith.constant 0 : i32
    %c0_i32_1 = arith.constant 0 : i32
    return %arg0, %c0_i32, %c0_i32_0 : i32, i32, i32
  }
  func.func @transform_4(%arg0: i32, %arg1: i32) -> (i32, i32, i32) {
    %c0_i32 = arith.constant 0 : i32
    %c0_i32_0 = arith.constant 0 : i32
    return %arg0, %arg1, %c0_i32 : i32, i32, i32
  }
  func.func @transform_5(%arg0: i32, %arg1: i32) -> (i32, i32) {
    %c0_i32 = arith.constant 0 : i32
    %c0_i32_0 = arith.constant 0 : i32
    %c0_i32_1 = arith.constant 0 : i32
    return %c0_i32, %c0_i32_0 : i32, i32
  }
  func.func @transform_6(%arg0: i32, %arg1: i32) -> (i32, i32) {
    %c0_i32 = arith.constant 0 : i32
    %c0_i32_0 = arith.constant 0 : i32
    %c0_i32_1 = arith.constant 0 : i32
    return %c0_i32, %c0_i32_0 : i32, i32
  }
  func.func @transform_7(%arg0: i32, %arg1: i32) -> (i32, i32) {
    %c0_i32 = arith.constant 0 : i32
    %c0_i32_0 = arith.constant 0 : i32
    %c0_i32_1 = arith.constant 0 : i32
    return %c0_i32, %c0_i32_0 : i32, i32
  }
  func.func @transform_8(%arg0: i32, %arg1: i32) -> (i32, i32) {
    %c0_i32 = arith.constant 0 : i32
    %c0_i32_0 = arith.constant 0 : i32
    %c0_i32_1 = arith.constant 0 : i32
    return %c0_i32, %c0_i32_0 : i32, i32
  }
  func.func @transform_9(%arg0: i32, %arg1: i32) -> (i32, i32) {
    %c0_i32 = arith.constant 0 : i32
    %c0_i32_0 = arith.constant 0 : i32
    %c0_i32_1 = arith.constant 0 : i32
    return %c0_i32, %c0_i32_0 : i32, i32
  }
  func.func @transform_10(%arg0: i32, %arg1: i32) -> (i32, i32) {
    %c0_i32 = arith.constant 0 : i32
    %c0_i32_0 = arith.constant 0 : i32
    %c0_i32_1 = arith.constant 0 : i32
    return %c0_i32, %c0_i32_0 : i32, i32
  }
  func.func @transform_11(%arg0: i32, %arg1: i32) -> (i32, i32) {
    %c0_i32 = arith.constant 0 : i32
    %c0_i32_0 = arith.constant 0 : i32
    %c0_i32_1 = arith.constant 0 : i32
    return %c0_i32, %c0_i32_0 : i32, i32
  }
  func.func @transform_12(%arg0: i32, %arg1: i32) -> (i32, i32) {
    %c0_i32 = arith.constant 0 : i32
    %c0_i32_0 = arith.constant 0 : i32
    %c0_i32_1 = arith.constant 0 : i32
    return %c0_i32, %c0_i32_0 : i32, i32
  }
  func.func @transform_13(%arg0: i32, %arg1: i32) -> (i32, i32, i32) {
    %c0_i32 = arith.constant 0 : i32
    %c0_i32_0 = arith.constant 0 : i32
    return %arg0, %arg1, %c0_i32 : i32, i32, i32
  }
}

</mosaic_0001>

<llo_original>
// kernel: tpu_custom_call.1
$region0: #{tpu_custom_call.1}
  #allocation0 [shape = 'u32[]', space=smem, size = 0x4, offset = 0x4, fixed_abs, tag = 'smem constant byte address 0x4 - core index']
  #allocation1 [shape = 'u32[144,128]{1,0:T(1,128)}', space=vmem, size = 0x12000, scoped, tag = 'internal scratch']
  #allocation2 [shape = 'f32[8,32]{1,0:T(8,128)}', space=vmem, size = 0x1000, scoped, tag = 'scratch operand']
  #allocation3 [shape = 'f32[8,32]{1,0:T(8,128)}', space=vmem, size = 0x1000, scoped, tag = 'scratch operand']
  %s0 = inlined_call_operand.hbm [shape: f32[2,8,32], index: 0, kind: input, shape index: {}]
  %s1 = inlined_call_operand.hbm [shape: f32[2,8,32], index: 1, kind: input, shape index: {}]
  %s2 = inlined_call_operand.hbm [shape: f32[2,8,32], index: 2, kind: input, shape index: {}]
  %s3 = inlined_call_operand.hbm [shape: f32[2,1,8], index: 3, kind: input, shape index: {}]
  %s4 = inlined_call_operand.hbm [shape: f32[2,8,1], index: 4, kind: input, shape index: {}]
  %s5 = inlined_call_operand.hbm [shape: f32[32,32], index: 5, kind: input, shape index: {}]
  %s6 = inlined_call_operand.hbm [shape: f32[1,32], index: 6, kind: input, shape index: {}]
  %s7 = inlined_call_operand.hbm [shape: f32[32,32], index: 7, kind: input, shape index: {}]
  %s8 = inlined_call_operand.hbm [shape: f32[1,32], index: 8, kind: input, shape index: {}]
  %s9 = inlined_call_operand.hbm [shape: f32[32,32], index: 9, kind: input, shape index: {}]
  %s10 = inlined_call_operand.hbm [shape: f32[1,32], index: 10, kind: input, shape index: {}]
  %s11 = inlined_call_operand.hbm [shape: f32[1,32], index: 11, kind: input, shape index: {}]
  %s12 = inlined_call_operand.hbm [shape: f32[1,32], index: 12, kind: input, shape index: {}]
  %s13 = inlined_call_operand.hbm [shape: f32[2,8,32], index: 13, kind: output, shape index: {}]
  %s14 = sld [smem:[#allocation0]]
  $region141: #{tpu_custom_call.1} parent=0
    _
  %s16 = ssub.s32 1, %s14
  %s17 = scalar_select 0, %s16, %s14
  $region1: #{tpu_custom_call.1} parent=0
    #allocation4 [shape = 'u8[8192]{0}', space=vmem, size = 0x2000, scoped, tag = 'input window, operand 0']
    #allocation5 [shape = 's32[2]{0}', space=sflag, size = 0x8, scoped, tag = 'scoped memory for tpu_custom_call.1']
    #allocation6 [shape = 's32[2]{0}', space=sflag, size = 0x8, scoped, tag = 'scoped memory for tpu_custom_call.1']
    #allocation7 [shape = 'u8[8192]{0}', space=vmem, size = 0x2000, scoped, tag = 'input window, operand 1']
    #allocation8 [shape = 's32[2]{0}', space=sflag, size = 0x8, scoped, tag = 'scoped memory for tpu_custom_call.1']
    #allocation9 [shape = 'u8[8192]{0}', space=vmem, size = 0x2000, scoped, tag = 'input window, operand 2']
    #allocation10 [shape = 'u8[1024]{0}', space=vmem, size = 0x400, scoped, tag = 'input window, operand 3']
    #allocation11 [shape = 's32[2]{0}', space=sflag, size = 0x8, scoped, tag = 'scoped memory for tpu_custom_call.1']
    #allocation12 [shape = 'u8[8192]{0}', space=vmem, size = 0x2000, scoped, tag = 'input window, operand 4']
    #allocation13 [shape = 'u8[16384]{0}', space=vmem, size = 0x4000, scoped, tag = 'input window, operand 5, single buffered']
    #allocation14 [shape = 's32[1]{0}', space=sflag, size = 0x4, scoped, tag = 'scoped memory for tpu_custom_call.1']
    #allocation15 [shape = 'u8[512]{0}', space=vmem, size = 0x400, scoped, tag = 'input window, operand 6, single buffered']
    #allocation16 [shape = 'u8[16384]{0}', space=vmem, size = 0x4000, scoped, tag = 'input window, operand 7, single buffered']
    #allocation17 [shape = 's32[1]{0}', space=sflag, size = 0x4, scoped, tag = 'scoped memory for tpu_custom_call.1']
    #allocation18 [shape = 'u8[512]{0}', space=vmem, size = 0x400, scoped, tag = 'input window, operand 8, single buffered']
    #allocation19 [shape = 'u8[16384]{0}', space=vmem, size = 0x4000, scoped, tag = 'input window, operand 9, single buffered']
    #allocation20 [shape = 's32[1]{0}', space=sflag, size = 0x4, scoped, tag = 'scoped memory for tpu_custom_call.1']
    #allocation21 [shape = 'u8[512]{0}', space=vmem, size = 0x400, scoped, tag = 'input window, operand 10, single buffered']
    #allocation22 [shape = 'u8[512]{0}', space=vmem, size = 0x400, scoped, tag = 'input window, operand 11, single buffered']
    #allocation23 [shape = 's32[1]{0}', space=sflag, size = 0x4, scoped, tag = 'scoped memory for tpu_custom_call.1']
    #allocation24 [shape = 'u8[512]{0}', space=vmem, size = 0x400, scoped, tag = 'input window, operand 12, single buffered']
    #allocation25 [shape = 'u8[8192]{0}', space=vmem, size = 0x2000, scoped, tag = 'output window, operand 0']
    %18 = vsyncpa [#allocation5], 0
    %s19 = scalar_lea.sflag [#allocation5], 1
    %20 = vsyncpa %s19, 0
    %21 = vsyncpa [#allocation8], 0
    %s22 = scalar_lea.sflag [#allocation8], 1
    %23 = vsyncpa %s22, 0
    %24 = vsyncpa [#allocation11], 0
    %s25 = scalar_lea.sflag [#allocation11], 1
    %26 = vsyncpa %s25, 0
    %27 = vsyncpa [#allocation14], 0
    %28 = vsyncpa [#allocation17], 0
    %29 = vsyncpa [#allocation20], 0
    %30 = vsyncpa [#allocation23], 0
    %31 = vsyncpa [#allocation6], 0
    %s32 = scalar_lea.sflag [#allocation6], 1
    %33 = vsyncpa %s32, 0
    loop: start=0, step=1, limit=4
    $region2: #{tpu_custom_call.1} parent=1 // loop_pre_header
      _
    $region3: #{tpu_custom_call.1} parent=1 // loop_header
      %s35 = sphi 0, %s39
      %p36 = scmp.ge.s32.totalorder %s35, 4
      %s42 = sphi 0, %s54
      %s43 = sphi 0, %s50
      %s44 = sphi 0, %s42
      %s45 = sphi 0, %s43
      %s46 = sphi 0, %s44
      %s47 = sphi 0, %s45
      %s59 = sphi 0, %s61
      %s62 = sphi 0, %s59
      %s63 = sphi 0, %s62
      %s79 = sphi 0, %s63
      %s85 = sphi 0, %s87
      %s88 = sphi 0, %s85
      %s89 = sphi 0, %s88
      %s105 = sphi 0, %s89
      %s111 = sphi 0, %s113
      %s114 = sphi 0, %s111
      %s115 = sphi 0, %s114
      %s131 = sphi 0, %s115
      %s137 = sphi 0, %s139
      %s140 = sphi 0, %s137
      %s141 = sphi 0, %s140
      %s157 = sphi 0, %s141
      %s165 = sphi 0, %s167
      %s168 = sphi 0, %s165
      %s169 = sphi 0, %s168
      %s185 = sphi 0, %s169
      %s189 = sphi 0, %s189
      %s191 = sphi 0, %s189
      %s192 = sphi 0, %s191
      %s206 = sphi 0, %s192
      %s210 = sphi 0, %s210
      %s212 = sphi 0, %s210
      %s213 = sphi 0, %s212
      %s227 = sphi 0, %s213
      %s231 = sphi 0, %s231
      %s233 = sphi 0, %s231
      %s234 = sphi 0, %s233
      %s248 = sphi 0, %s234
      %s252 = sphi 0, %s252
      %s254 = sphi 0, %s252
      %s255 = sphi 0, %s254
      %s269 = sphi 0, %s255
      %s273 = sphi 0, %s273
      %s275 = sphi 0, %s273
      %s276 = sphi 0, %s275
      %s290 = sphi 0, %s276
      %s294 = sphi 0, %s294
      %s296 = sphi 0, %s294
      %s297 = sphi 0, %s296
      %s311 = sphi 0, %s297
      %s315 = sphi 0, %s315
      %s317 = sphi 0, %s315
      %s318 = sphi 0, %s317
      %s332 = sphi 0, %s318
      %s336 = sphi 0, %s336
      %s338 = sphi 0, %s336
      %s339 = sphi 0, %s338
      %s353 = sphi 0, %s339
      %s361 = sphi 0, %s363
      %s364 = sphi 0, %s361
      %s365 = sphi 0, %s364
      %s381 = sphi 0, %s365
    $region4: #{tpu_custom_call.1} parent=1 // loop_header_branch
      %38 = sbr.rel (%p36) target = $region8
    $region5: #{tpu_custom_call.1} parent=1 // loop_body
      %s40 = ssub.s32 %s35, 1
      %s41 = ssub.s32 %s35, 2
      %s48 = sadd.s32 1, %s43
      %p49 = scmp.ge.s32.totalorder %s48, 1
      %s50 = scalar_select %p49, 0, %s48
      %s51 = sadd.s32 1, %s42
      %s52 = scalar_select %p49, %s51, %s42
      %p53 = scmp.ge.s32.totalorder %s52, 2
      %s54 = scalar_select %p53, 0, %s52
      %s55 = ssub.s32 %s42, %s54
      %s56 = ssub.s32 %s43, %s50
      %s57 = sor.u32 %s55, %s56
      %p58 = scmp.eq.s32.totalorder %s57, 0
      %s60 = sadd.s32 %s59, 1
      %s61 = scalar_select %p58, %s59, %s60
      %p64 = pneg %p58
      %p65 = scmp.eq.s32.totalorder %s35, 1
      %p66 = por %p64, %p65
      %p67 = scmp.ne.s32.totalorder %s59, %s62
      %p68 = scmp.eq.s32.totalorder %s35, 0
      %p69 = por %p67, %p68
      %p70 = scmp.ne.s32.totalorder %s59, %s62
      %p71 = scmp.eq.s32.totalorder %s40, 1
      %p72 = por %p70, %p71
      %p73 = scmp.ne.s32.totalorder %s62, %s63
      %p74 = scmp.eq.s32.totalorder %s40, 0
      %p75 = por %p73, %p74
      %p76 = scmp.ne.s32.totalorder %s62, %s63
      %p77 = scmp.eq.s32.totalorder %s41, 1
      %p78 = por %p76, %p77
      %p80 = scmp.ne.s32.totalorder %s63, %s79
      %p81 = scmp.eq.s32.totalorder %s41, 0
      %p82 = por %p80, %p81
      %s83 = ssub.s32 %s42, %s54
      %p84 = scmp.eq.s32.totalorder %s83, 0
      %s86 = sadd.s32 %s85, 1
      %s87 = scalar_select %p84, %s85, %s86
      %p90 = pneg %p84
      %p91 = scmp.eq.s32.totalorder %s35, 1
      %p92 = por %p90, %p91
      %p93 = scmp.ne.s32.totalorder %s85, %s88
      %p94 = scmp.eq.s32.totalorder %s35, 0
      %p95 = por %p93, %p94
      %p96 = scmp.ne.s32.totalorder %s85, %s88
      %p97 = scmp.eq.s32.totalorder %s40, 1
      %p98 = por %p96, %p97
      %p99 = scmp.ne.s32.totalorder %s88, %s89
      %p100 = scmp.eq.s32.totalorder %s40, 0
      %p101 = por %p99, %p100
      %p102 = scmp.ne.s32.totalorder %s88, %s89
      %p103 = scmp.eq.s32.totalorder %s41, 1
      %p104 = por %p102, %p103
      %p106 = scmp.ne.s32.totalorder %s89, %s105
      %p107 = scmp.eq.s32.totalorder %s41, 0
      %p108 = por %p106, %p107
      %s109 = ssub.s32 %s42, %s54
      %p110 = scmp.eq.s32.totalorder %s109, 0
      %s112 = sadd.s32 %s111, 1
      %s113 = scalar_select %p110, %s111, %s112
      %p116 = pneg %p110
      %p117 = scmp.eq.s32.totalorder %s35, 1
      %p118 = por %p116, %p117
      %p119 = scmp.ne.s32.totalorder %s111, %s114
      %p120 = scmp.eq.s32.totalorder %s35, 0
      %p121 = por %p119, %p120
      %p122 = scmp.ne.s32.totalorder %s111, %s114
      %p123 = scmp.eq.s32.totalorder %s40, 1
      %p124 = por %p122, %p123
      %p125 = scmp.ne.s32.totalorder %s114, %s115
      %p126 = scmp.eq.s32.totalorder %s40, 0
      %p127 = por %p125, %p126
      %p128 = scmp.ne.s32.totalorder %s114, %s115
      %p129 = scmp.eq.s32.totalorder %s41, 1
      %p130 = por %p128, %p129
      %p132 = scmp.ne.s32.totalorder %s115, %s131
      %p133 = scmp.eq.s32.totalorder %s41, 0
      %p134 = por %p132, %p133
      %s135 = ssub.s32 %s42, %s54
      %p136 = scmp.eq.s32.totalorder %s135, 0
      %s138 = sadd.s32 %s137, 1
      %s139 = scalar_select %p136, %s137, %s138
      %p142 = pneg %p136
      %p143 = scmp.eq.s32.totalorder %s35, 1
      %p144 = por %p142, %p143
      %p145 = scmp.ne.s32.totalorder %s137, %s140
      %p146 = scmp.eq.s32.totalorder %s35, 0
      %p147 = por %p145, %p146
      %p148 = scmp.ne.s32.totalorder %s137, %s140
      %p149 = scmp.eq.s32.totalorder %s40, 1
      %p150 = por %p148, %p149
      %p151 = scmp.ne.s32.totalorder %s140, %s141
      %p152 = scmp.eq.s32.totalorder %s40, 0
      %p153 = por %p151, %p152
      %p154 = scmp.ne.s32.totalorder %s140, %s141
      %p155 = scmp.eq.s32.totalorder %s41, 1
      %p156 = por %p154, %p155
      %p158 = scmp.ne.s32.totalorder %s141, %s157
      %p159 = scmp.eq.s32.totalorder %s41, 0
      %p160 = por %p158, %p159
      %s161 = ssub.s32 %s42, %s54
      %s162 = ssub.s32 %s43, %s50
      %s163 = sor.u32 %s161, %s162
      %p164 = scmp.eq.s32.totalorder %s163, 0
      %s166 = sadd.s32 %s165, 1
      %s167 = scalar_select %p164, %s165, %s166
      %p170 = pneg %p164
      %p171 = scmp.eq.s32.totalorder %s35, 1
      %p172 = por %p170, %p171
      %p173 = scmp.ne.s32.totalorder %s165, %s168
      %p174 = scmp.eq.s32.totalorder %s35, 0
      %p175 = por %p173, %p174
      %p176 = scmp.ne.s32.totalorder %s165, %s168
      %p177 = scmp.eq.s32.totalorder %s40, 1
      %p178 = por %p176, %p177
      %p179 = scmp.ne.s32.totalorder %s168, %s169
      %p180 = scmp.eq.s32.totalorder %s40, 0
      %p181 = por %p179, %p180
      %p182 = scmp.ne.s32.totalorder %s168, %s169
      %p183 = scmp.eq.s32.totalorder %s41, 1
      %p184 = por %p182, %p183
      %p186 = scmp.ne.s32.totalorder %s169, %s185
      %p187 = scmp.eq.s32.totalorder %s41, 0
      %p188 = por %p186, %p187
      %s190 = sadd.s32 %s189, 1
      %p193 = scmp.eq.s32.totalorder %s35, 1
      %p194 = scmp.ne.s32.totalorder %s189, %s191
      %p195 = scmp.eq.s32.totalorder %s35, 0
      %p196 = por %p194, %p195
      %p197 = scmp.ne.s32.totalorder %s189, %s191
      %p198 = scmp.eq.s32.totalorder %s40, 1
      %p199 = por %p197, %p198
      %p200 = scmp.ne.s32.totalorder %s191, %s192
      %p201 = scmp.eq.s32.totalorder %s40, 0
      %p202 = por %p200, %p201
      %p203 = scmp.ne.s32.totalorder %s191, %s192
      %p204 = scmp.eq.s32.totalorder %s41, 1
      %p205 = por %p203, %p204
      %p207 = scmp.ne.s32.totalorder %s192, %s206
      %p208 = scmp.eq.s32.totalorder %s41, 0
      %p209 = por %p207, %p208
      %s211 = sadd.s32 %s210, 1
      %p214 = scmp.eq.s32.totalorder %s35, 1
      %p215 = scmp.ne.s32.totalorder %s210, %s212
      %p216 = scmp.eq.s32.totalorder %s35, 0
      %p217 = por %p215, %p216
      %p218 = scmp.ne.s32.totalorder %s210, %s212
      %p219 = scmp.eq.s32.totalorder %s40, 1
      %p220 = por %p218, %p219
      %p221 = scmp.ne.s32.totalorder %s212, %s213
      %p222 = scmp.eq.s32.totalorder %s40, 0
      %p223 = por %p221, %p222
      %p224 = scmp.ne.s32.totalorder %s212, %s213
      %p225 = scmp.eq.s32.totalorder %s41, 1
      %p226 = por %p224, %p225
      %p228 = scmp.ne.s32.totalorder %s213, %s227
      %p229 = scmp.eq.s32.totalorder %s41, 0
      %p230 = por %p228, %p229
      %s232 = sadd.s32 %s231, 1
      %p235 = scmp.eq.s32.totalorder %s35, 1
      %p236 = scmp.ne.s32.totalorder %s231, %s233
      %p237 = scmp.eq.s32.totalorder %s35, 0
      %p238 = por %p236, %p237
      %p239 = scmp.ne.s32.totalorder %s231, %s233
      %p240 = scmp.eq.s32.totalorder %s40, 1
      %p241 = por %p239, %p240
      %p242 = scmp.ne.s32.totalorder %s233, %s234
      %p243 = scmp.eq.s32.totalorder %s40, 0
      %p244 = por %p242, %p243
      %p245 = scmp.ne.s32.totalorder %s233, %s234
      %p246 = scmp.eq.s32.totalorder %s41, 1
      %p247 = por %p245, %p246
      %p249 = scmp.ne.s32.totalorder %s234, %s248
      %p250 = scmp.eq.s32.totalorder %s41, 0
      %p251 = por %p249, %p250
      %s253 = sadd.s32 %s252, 1
      %p256 = scmp.eq.s32.totalorder %s35, 1
      %p257 = scmp.ne.s32.totalorder %s252, %s254
      %p258 = scmp.eq.s32.totalorder %s35, 0
      %p259 = por %p257, %p258
      %p260 = scmp.ne.s32.totalorder %s252, %s254
      %p261 = scmp.eq.s32.totalorder %s40, 1
      %p262 = por %p260, %p261
      %p263 = scmp.ne.s32.totalorder %s254, %s255
      %p264 = scmp.eq.s32.totalorder %s40, 0
      %p265 = por %p263, %p264
      %p266 = scmp.ne.s32.totalorder %s254, %s255
      %p267 = scmp.eq.s32.totalorder %s41, 1
      %p268 = por %p266, %p267
      %p270 = scmp.ne.s32.totalorder %s255, %s269
      %p271 = scmp.eq.s32.totalorder %s41, 0
      %p272 = por %p270, %p271
      %s274 = sadd.s32 %s273, 1
      %p277 = scmp.eq.s32.totalorder %s35, 1
      %p278 = scmp.ne.s32.totalorder %s273, %s275
      %p279 = scmp.eq.s32.totalorder %s35, 0
      %p280 = por %p278, %p279
      %p281 = scmp.ne.s32.totalorder %s273, %s275
      %p282 = scmp.eq.s32.totalorder %s40, 1
      %p283 = por %p281, %p282
      %p284 = scmp.ne.s32.totalorder %s275, %s276
      %p285 = scmp.eq.s32.totalorder %s40, 0
      %p286 = por %p284, %p285
      %p287 = scmp.ne.s32.totalorder %s275, %s276
      %p288 = scmp.eq.s32.totalorder %s41, 1
      %p289 = por %p287, %p288
      %p291 = scmp.ne.s32.totalorder %s276, %s290
      %p292 = scmp.eq.s32.totalorder %s41, 0
      %p293 = por %p291, %p292
      %s295 = sadd.s32 %s294, 1
      %p298 = scmp.eq.s32.totalorder %s35, 1
      %p299 = scmp.ne.s32.totalorder %s294, %s296
      %p300 = scmp.eq.s32.totalorder %s35, 0
      %p301 = por %p299, %p300
      %p302 = scmp.ne.s32.totalorder %s294, %s296
      %p303 = scmp.eq.s32.totalorder %s40, 1
      %p304 = por %p302, %p303
      %p305 = scmp.ne.s32.totalorder %s296, %s297
      %p306 = scmp.eq.s32.totalorder %s40, 0
      %p307 = por %p305, %p306
      %p308 = scmp.ne.s32.totalorder %s296, %s297
      %p309 = scmp.eq.s32.totalorder %s41, 1
      %p310 = por %p308, %p309
      %p312 = scmp.ne.s32.totalorder %s297, %s311
      %p313 = scmp.eq.s32.totalorder %s41, 0
      %p314 = por %p312, %p313
      %s316 = sadd.s32 %s315, 1
      %p319 = scmp.eq.s32.totalorder %s35, 1
      %p320 = scmp.ne.s32.totalorder %s315, %s317
      %p321 = scmp.eq.s32.totalorder %s35, 0
      %p322 = por %p320, %p321
      %p323 = scmp.ne.s32.totalorder %s315, %s317
      %p324 = scmp.eq.s32.totalorder %s40, 1
      %p325 = por %p323, %p324
      %p326 = scmp.ne.s32.totalorder %s317, %s318
      %p327 = scmp.eq.s32.totalorder %s40, 0
      %p328 = por %p326, %p327
      %p329 = scmp.ne.s32.totalorder %s317, %s318
      %p330 = scmp.eq.s32.totalorder %s41, 1
      %p331 = por %p329, %p330
      %p333 = scmp.ne.s32.totalorder %s318, %s332
      %p334 = scmp.eq.s32.totalorder %s41, 0
      %p335 = por %p333, %p334
      %s337 = sadd.s32 %s336, 1
      %p340 = scmp.eq.s32.totalorder %s35, 1
      %p341 = scmp.ne.s32.totalorder %s336, %s338
      %p342 = scmp.eq.s32.totalorder %s35, 0
      %p343 = por %p341, %p342
      %p344 = scmp.ne.s32.totalorder %s336, %s338
      %p345 = scmp.eq.s32.totalorder %s40, 1
      %p346 = por %p344, %p345
      %p347 = scmp.ne.s32.totalorder %s338, %s339
      %p348 = scmp.eq.s32.totalorder %s40, 0
      %p349 = por %p347, %p348
      %p350 = scmp.ne.s32.totalorder %s338, %s339
      %p351 = scmp.eq.s32.totalorder %s41, 1
      %p352 = por %p350, %p351
      %p354 = scmp.ne.s32.totalorder %s339, %s353
      %p355 = scmp.eq.s32.totalorder %s41, 0
      %p356 = por %p354, %p355
      %s357 = ssub.s32 %s42, %s54
      %s358 = ssub.s32 %s43, %s50
      %s359 = sor.u32 %s357, %s358
      %p360 = scmp.eq.s32.totalorder %s359, 0
      %s362 = sadd.s32 %s361, 1
      %s363 = scalar_select %p360, %s361, %s362
      %p366 = pneg %p360
      %p367 = scmp.eq.s32.totalorder %s35, 1
      %p368 = por %p366, %p367
      %p369 = scmp.ne.s32.totalorder %s361, %s364
      %p370 = scmp.eq.s32.totalorder %s35, 0
      %p371 = por %p369, %p370
      %p372 = scmp.ne.s32.totalorder %s361, %s364
      %p373 = scmp.eq.s32.totalorder %s40, 1
      %p374 = por %p372, %p373
      %p375 = scmp.ne.s32.totalorder %s364, %s365
      %p376 = scmp.eq.s32.totalorder %s40, 0
      %p377 = por %p375, %p376
      %p378 = scmp.ne.s32.totalorder %s364, %s365
      %p379 = scmp.eq.s32.totalorder %s41, 1
      %p380 = por %p378, %p379
      %p382 = scmp.ne.s32.totalorder %s365, %s381
      %p383 = scmp.eq.s32.totalorder %s41, 0
      %p384 = por %p382, %p383
      %p385 = scmp.le.s32.totalorder 1, %s35
      %p386 = scmp.lt.s32.totalorder %s35, 3
      %p387 = pnand %p385, %p386
      %p388 = pneg %p387
      // Predicated region
      $region9: #{tpu_custom_call.1} parent=5 // pred_check
        _
      $region10: #{tpu_custom_call.1} parent=5 // pred_check_branch
        %390 = sbr.rel (%p387) target = $region12
      $region11: #{tpu_custom_call.1} parent=5 // pred_region
        %s391 = ssub.s32 %s35, 1
        // Predicated region
        $region13: #{tpu_custom_call.1} parent=11 // pred_check
          %p392 = pneg %p202
        $region14: #{tpu_custom_call.1} parent=11 // pred_check_branch
          %394 = sbr.rel (%p392) target = $region16
        $region15: #{tpu_custom_call.1} parent=11 // pred_region
          %s396 = ssub.s32 512, 512
          %397 = vsyncadd [#allocation14], %s396
          %s398 = sshll.u32 [#allocation13], 4
          %s399 = int_to_ptr.vmem [resolvable:$true] %s398
          %404 = dma.hbm_to_vmem [thread:$0]  %s5, 512, %s399, [#allocation14], 128, 128, 8
        $region16: #{tpu_custom_call.1} parent=11 // pred_fallthru
          _
        // Predicated region
        $region17: #{tpu_custom_call.1} parent=11 // pred_check
          %p405 = pneg %p223
        $region18: #{tpu_custom_call.1} parent=11 // pred_check_branch
          %407 = sbr.rel (%p405) target = $region20
        $region19: #{tpu_custom_call.1} parent=11 // pred_region
          %s409 = ssub.s32 16, 16
          %410 = vsyncadd [#allocation14], %s409
          %s412 = sshll.u32 [#allocation15], 4
          %s413 = int_to_ptr.vmem [resolvable:$true] %s412
          %415 = dma.hbm_to_vmem [thread:$0]  %s6, 16, %s413, [#allocation14]
        $region20: #{tpu_custom_call.1} parent=11 // pred_fallthru
          _
        // Predicated region
        $region21: #{tpu_custom_call.1} parent=11 // pred_check
          %p416 = pneg %p244
        $region22: #{tpu_custom_call.1} parent=11 // pred_check_branch
          %418 = sbr.rel (%p416) target = $region24
        $region23: #{tpu_custom_call.1} parent=11 // pred_region
          %s420 = ssub.s32 512, 512
          %421 = vsyncadd [#allocation17], %s420
          %s422 = sshll.u32 [#allocation16], 4
          %s423 = int_to_ptr.vmem [resolvable:$true] %s422
          %428 = dma.hbm_to_vmem [thread:$0]  %s7, 512, %s423, [#allocation17], 128, 128, 8
        $region24: #{tpu_custom_call.1} parent=11 // pred_fallthru
          _
        // Predicated region
        $region25: #{tpu_custom_call.1} parent=11 // pred_check
          %p429 = pneg %p265
        $region26: #{tpu_custom_call.1} parent=11 // pred_check_branch
          %431 = sbr.rel (%p429) target = $region28
        $region27: #{tpu_custom_call.1} parent=11 // pred_region
          %s433 = ssub.s32 16, 16
          %434 = vsyncadd [#allocation17], %s433
          %s436 = sshll.u32 [#allocation18], 4
          %s437 = int_to_ptr.vmem [resolvable:$true] %s436
          %439 = dma.hbm_to_vmem [thread:$0]  %s8, 16, %s437, [#allocation17]
        $region28: #{tpu_custom_call.1} parent=11 // pred_fallthru
          _
        // Predicated region
        $region29: #{tpu_custom_call.1} parent=11 // pred_check
          %p440 = pneg %p286
        $region30: #{tpu_custom_call.1} parent=11 // pred_check_branch
          %442 = sbr.rel (%p440) target = $region32
        $region31: #{tpu_custom_call.1} parent=11 // pred_region
          %s444 = ssub.s32 512, 512
          %445 = vsyncadd [#allocation20], %s444
          %s446 = sshll.u32 [#allocation19], 4
          %s447 = int_to_ptr.vmem [resolvable:$true] %s446
          %452 = dma.hbm_to_vmem [thread:$0]  %s9, 512, %s447, [#allocation20], 128, 128, 8
        $region32: #{tpu_custom_call.1} parent=11 // pred_fallthru
          _
        // Predicated region
        $region33: #{tpu_custom_call.1} parent=11 // pred_check
          %p453 = pneg %p307
        $region34: #{tpu_custom_call.1} parent=11 // pred_check_branch
          %455 = sbr.rel (%p453) target = $region36
        $region35: #{tpu_custom_call.1} parent=11 // pred_region
          %s457 = ssub.s32 16, 16
          %458 = vsyncadd [#allocation20], %s457
          %s460 = sshll.u32 [#allocation21], 4
          %s461 = int_to_ptr.vmem [resolvable:$true] %s460
          %463 = dma.hbm_to_vmem [thread:$0]  %s10, 16, %s461, [#allocation20]
        $region36: #{tpu_custom_call.1} parent=11 // pred_fallthru
          _
        // Predicated region
        $region37: #{tpu_custom_call.1} parent=11 // pred_check
          %p464 = pneg %p328
        $region38: #{tpu_custom_call.1} parent=11 // pred_check_branch
          %466 = sbr.rel (%p464) target = $region40
        $region39: #{tpu_custom_call.1} parent=11 // pred_region
          %s468 = ssub.s32 16, 16
          %469 = vsyncadd [#allocation23], %s468
          %s471 = sshll.u32 [#allocation22], 4
          %s472 = int_to_ptr.vmem [resolvable:$true] %s471
          %474 = dma.hbm_to_vmem [thread:$0]  %s11, 16, %s472, [#allocation23]
        $region40: #{tpu_custom_call.1} parent=11 // pred_fallthru
          _
        // Predicated region
        $region41: #{tpu_custom_call.1} parent=11 // pred_check
          %p475 = pneg %p349
        $region42: #{tpu_custom_call.1} parent=11 // pred_check_branch
          %477 = sbr.rel (%p475) target = $region44
        $region43: #{tpu_custom_call.1} parent=11 // pred_region
          %s479 = ssub.s32 16, 16
          %480 = vsyncadd [#allocation23], %s479
          %s482 = sshll.u32 [#allocation24], 4
          %s483 = int_to_ptr.vmem [resolvable:$true] %s482
          %485 = dma.hbm_to_vmem [thread:$0]  %s12, 16, %s483, [#allocation23]
        $region44: #{tpu_custom_call.1} parent=11 // pred_fallthru
          _
      $region12: #{tpu_custom_call.1} parent=5 // pred_fallthru
        _
      %p486 = scmp.lt.s32.totalorder %s35, 2
      // Predicated region
      $region45: #{tpu_custom_call.1} parent=5 // pred_check
        %p487 = pneg %p486
      $region46: #{tpu_custom_call.1} parent=5 // pred_check_branch
        %489 = sbr.rel (%p487) target = $region48
      $region47: #{tpu_custom_call.1} parent=5 // pred_region
        // Predicated region
        $region49: #{tpu_custom_call.1} parent=47 // pred_check
          %p490 = pneg %p69
        $region50: #{tpu_custom_call.1} parent=47 // pred_check_branch
          %492 = sbr.rel (%p490) target = $region52
        $region51: #{tpu_custom_call.1} parent=47 // pred_region
          %s493 = sand.u32 %s59, 1
          %s494 = scalar_lea.sflag [#allocation5], %s493
          %s495 = sand.u32 %s59, 1
          %s496 = smul.addr %s495, 8
          %s497 = scalar_lea.vmem [#allocation4], %s496
          %s499 = ssub.s32 128, 128
          %500 = vsyncadd %s494, %s499
          %s501 = sadd.s32 %s43, %s42
          %s502 = smul.addr %s501, 128
          %s503 = scalar_lea.hbm %s0, %s502
          %s505 = sshll.u32 %s497, 4
          %s506 = int_to_ptr.vmem [resolvable:$true] %s505
          %508 = dma.hbm_to_vmem [thread:$0]  %s503, 128, %s506, %s494
        $region52: #{tpu_custom_call.1} parent=47 // pred_fallthru
          _
        // Predicated region
        $region53: #{tpu_custom_call.1} parent=47 // pred_check
          %p509 = pneg %p95
        $region54: #{tpu_custom_call.1} parent=47 // pred_check_branch
          %511 = sbr.rel (%p509) target = $region56
        $region55: #{tpu_custom_call.1} parent=47 // pred_region
          %s512 = sand.u32 %s35, 1
          %s513 = scalar_lea.sflag [#allocation8], %s512
          %s514 = sand.u32 %s85, 1
          %s515 = smul.addr %s514, 8
          %s516 = scalar_lea.vmem [#allocation7], %s515
          %s518 = ssub.s32 128, 128
          %519 = vsyncadd %s513, %s518
          %s520 = smul.addr %s42, 128
          %s521 = scalar_lea.hbm %s1, %s520
          %s523 = sshll.u32 %s516, 4
          %s524 = int_to_ptr.vmem [resolvable:$true] %s523
          %526 = dma.hbm_to_vmem [thread:$0]  %s521, 128, %s524, %s513
        $region56: #{tpu_custom_call.1} parent=47 // pred_fallthru
          _
        // Predicated region
        $region57: #{tpu_custom_call.1} parent=47 // pred_check
          %p527 = pneg %p121
        $region58: #{tpu_custom_call.1} parent=47 // pred_check_branch
          %529 = sbr.rel (%p527) target = $region60
        $region59: #{tpu_custom_call.1} parent=47 // pred_region
          %s530 = sand.u32 %s35, 1
          %s531 = scalar_lea.sflag [#allocation8], %s530
          %s532 = sand.u32 %s111, 1
          %s533 = smul.addr %s532, 8
          %s534 = scalar_lea.vmem [#allocation9], %s533
          %s536 = ssub.s32 128, 128
          %537 = vsyncadd %s531, %s536
          %s538 = smul.addr %s42, 128
          %s539 = scalar_lea.hbm %s2, %s538
          %s541 = sshll.u32 %s534, 4
          %s542 = int_to_ptr.vmem [resolvable:$true] %s541
          %544 = dma.hbm_to_vmem [thread:$0]  %s539, 128, %s542, %s531
        $region60: #{tpu_custom_call.1} parent=47 // pred_fallthru
          _
        // Predicated region
        $region61: #{tpu_custom_call.1} parent=47 // pred_check
          %p545 = pneg %p147
        $region62: #{tpu_custom_call.1} parent=47 // pred_check_branch
          %547 = sbr.rel (%p545) target = $region64
        $region63: #{tpu_custom_call.1} parent=47 // pred_region
          %s548 = sand.u32 %s35, 1
          %s549 = scalar_lea.sflag [#allocation11], %s548
          %s550 = sand.u32 %s137, 1
          %s551 = scalar_lea.vmem [#allocation10], %s550
          %s553 = ssub.s32 16, 16
          %554 = vsyncadd %s549, %s553
          %s555 = smul.addr %s42, 16
          %s556 = scalar_lea.hbm %s3, %s555
          %s558 = sshll.u32 %s551, 4
          %s559 = int_to_ptr.vmem [resolvable:$true] %s558
          %561 = dma.hbm_to_vmem [thread:$0]  %s556, 16, %s559, %s549
        $region64: #{tpu_custom_call.1} parent=47 // pred_fallthru
          _
        // Predicated region
        $region65: #{tpu_custom_call.1} parent=47 // pred_check
          %p562 = pneg %p175
        $region66: #{tpu_custom_call.1} parent=47 // pred_check_branch
          %564 = sbr.rel (%p562) target = $region68
        $region67: #{tpu_custom_call.1} parent=47 // pred_region
          %s565 = sand.u32 %s35, 1
          %s566 = scalar_lea.sflag [#allocation11], %s565
          %s567 = sand.u32 %s165, 1
          %s568 = smul.addr %s567, 8
          %s569 = scalar_lea.vmem [#allocation12], %s568
          %s571 = ssub.s32 128, 128
          %572 = vsyncadd %s566, %s571
          %s573 = sadd.s32 %s43, %s42
          %s574 = smul.addr %s573, 128
          %s575 = scalar_lea.hbm %s4, %s574
          %s577 = sshll.u32 %s569, 4
          %s578 = int_to_ptr.vmem [resolvable:$true] %s577
          %580 = dma.hbm_to_vmem [thread:$0]  %s575, 128, %s578, %s566
        $region68: #{tpu_custom_call.1} parent=47 // pred_fallthru
          _
      $region48: #{tpu_custom_call.1} parent=5 // pred_fallthru
        _
      %p581 = scmp.le.s32.totalorder 1, %s35
      %p582 = scmp.lt.s32.totalorder %s35, 3
      %p583 = pnand %p581, %p582
      %p584 = pneg %p583
      // Predicated region
      $region69: #{tpu_custom_call.1} parent=5 // pred_check
        _
      $region70: #{tpu_custom_call.1} parent=5 // pred_check_branch
        %586 = sbr.rel (%p583) target = $region72
      $region71: #{tpu_custom_call.1} parent=5 // pred_region
        %s587 = ssub.s32 %s35, 1
        %s588 = sand.u32 %s62, 1
        %s589 = scalar_lea.sflag [#allocation5], %s588
        %s590 = sand.u32 %s62, 1
        %s591 = smul.addr %s590, 8
        %s592 = scalar_lea.vmem [#allocation4], %s591
        // Predicated region
        $region73: #{tpu_custom_call.1} parent=71 // pred_check
          %p593 = pneg %p75
        $region74: #{tpu_custom_call.1} parent=71 // pred_check_branch
          %595 = sbr.rel (%p593) target = $region76
        $region75: #{tpu_custom_call.1} parent=71 // pred_region
          %596 = dma.done %s589, 128
        $region76: #{tpu_custom_call.1} parent=71 // pred_fallthru
          _
        %s597 = sand.u32 %s40, 1
        %s598 = scalar_lea.sflag [#allocation8], %s597
        %s599 = sand.u32 %s88, 1
        %s600 = smul.addr %s599, 8
        %s601 = scalar_lea.vmem [#allocation7], %s600
        // Predicated region
        $region77: #{tpu_custom_call.1} parent=71 // pred_check
          %p602 = pneg %p101
        $region78: #{tpu_custom_call.1} parent=71 // pred_check_branch
          %604 = sbr.rel (%p602) target = $region80
        $region79: #{tpu_custom_call.1} parent=71 // pred_region
          %605 = dma.done %s598, 128
        $region80: #{tpu_custom_call.1} parent=71 // pred_fallthru
          _
        %s606 = sand.u32 %s40, 1
        %s607 = scalar_lea.sflag [#allocation8], %s606
        %s608 = sand.u32 %s114, 1
        %s609 = smul.addr %s608, 8
        %s610 = scalar_lea.vmem [#allocation9], %s609
        // Predicated region
        $region81: #{tpu_custom_call.1} parent=71 // pred_check
          %p611 = pneg %p127
        $region82: #{tpu_custom_call.1} parent=71 // pred_check_branch
          %613 = sbr.rel (%p611) target = $region84
        $region83: #{tpu_custom_call.1} parent=71 // pred_region
          %614 = dma.done %s607, 128
        $region84: #{tpu_custom_call.1} parent=71 // pred_fallthru
          _
        %s615 = sand.u32 %s40, 1
        %s616 = scalar_lea.sflag [#allocation11], %s615
        %s617 = sand.u32 %s140, 1
        %s618 = scalar_lea.vmem [#allocation10], %s617
        // Predicated region
        $region85: #{tpu_custom_call.1} parent=71 // pred_check
          %p619 = pneg %p153
        $region86: #{tpu_custom_call.1} parent=71 // pred_check_branch
          %621 = sbr.rel (%p619) target = $region88
        $region87: #{tpu_custom_call.1} parent=71 // pred_region
          %622 = dma.done %s616, 16
        $region88: #{tpu_custom_call.1} parent=71 // pred_fallthru
          _
        %s623 = sand.u32 %s40, 1
        %s624 = scalar_lea.sflag [#allocation11], %s623
        %s625 = sand.u32 %s168, 1
        %s626 = smul.addr %s625, 8
        %s627 = scalar_lea.vmem [#allocation12], %s626
        // Predicated region
        $region89: #{tpu_custom_call.1} parent=71 // pred_check
          %p628 = pneg %p181
        $region90: #{tpu_custom_call.1} parent=71 // pred_check_branch
          %630 = sbr.rel (%p628) target = $region92
        $region91: #{tpu_custom_call.1} parent=71 // pred_region
          %631 = dma.done %s624, 128
        $region92: #{tpu_custom_call.1} parent=71 // pred_fallthru
          _
        // Predicated region
        $region93: #{tpu_custom_call.1} parent=71 // pred_check
          %p632 = pneg %p202
        $region94: #{tpu_custom_call.1} parent=71 // pred_check_branch
          %634 = sbr.rel (%p632) target = $region96
        $region95: #{tpu_custom_call.1} parent=71 // pred_region
          %635 = dma.done [#allocation14], 512
        $region96: #{tpu_custom_call.1} parent=71 // pred_fallthru
          _
        // Predicated region
        $region97: #{tpu_custom_call.1} parent=71 // pred_check
          %p636 = pneg %p223
        $region98: #{tpu_custom_call.1} parent=71 // pred_check_branch
          %638 = sbr.rel (%p636) target = $region100
        $region99: #{tpu_custom_call.1} parent=71 // pred_region
          %639 = dma.done [#allocation14], 16
        $region100: #{tpu_custom_call.1} parent=71 // pred_fallthru
          _
        // Predicated region
        $region101: #{tpu_custom_call.1} parent=71 // pred_check
          %p640 = pneg %p244
        $region102: #{tpu_custom_call.1} parent=71 // pred_check_branch
          %642 = sbr.rel (%p640) target = $region104
        $region103: #{tpu_custom_call.1} parent=71 // pred_region
          %643 = dma.done [#allocation17], 512
        $region104: #{tpu_custom_call.1} parent=71 // pred_fallthru
          _
        // Predicated region
        $region105: #{tpu_custom_call.1} parent=71 // pred_check
          %p644 = pneg %p265
        $region106: #{tpu_custom_call.1} parent=71 // pred_check_branch
          %646 = sbr.rel (%p644) target = $region108
        $region107: #{tpu_custom_call.1} parent=71 // pred_region
          %647 = dma.done [#allocation17], 16
        $region108: #{tpu_custom_call.1} parent=71 // pred_fallthru
          _
        // Predicated region
        $region109: #{tpu_custom_call.1} parent=71 // pred_check
          %p648 = pneg %p286
        $region110: #{tpu_custom_call.1} parent=71 // pred_check_branch
          %650 = sbr.rel (%p648) target = $region112
        $region111: #{tpu_custom_call.1} parent=71 // pred_region
          %651 = dma.done [#allocation20], 512
        $region112: #{tpu_custom_call.1} parent=71 // pred_fallthru
          _
        // Predicated region
        $region113: #{tpu_custom_call.1} parent=71 // pred_check
          %p652 = pneg %p307
        $region114: #{tpu_custom_call.1} parent=71 // pred_check_branch
          %654 = sbr.rel (%p652) target = $region116
        $region115: #{tpu_custom_call.1} parent=71 // pred_region
          %655 = dma.done [#allocation20], 16
        $region116: #{tpu_custom_call.1} parent=71 // pred_fallthru
          _
        // Predicated region
        $region117: #{tpu_custom_call.1} parent=71 // pred_check
          %p656 = pneg %p328
        $region118: #{tpu_custom_call.1} parent=71 // pred_check_branch
          %658 = sbr.rel (%p656) target = $region120
        $region119: #{tpu_custom_call.1} parent=71 // pred_region
          %659 = dma.done [#allocation23], 16
        $region120: #{tpu_custom_call.1} parent=71 // pred_fallthru
          _
        // Predicated region
        $region121: #{tpu_custom_call.1} parent=71 // pred_check
          %p660 = pneg %p349
        $region122: #{tpu_custom_call.1} parent=71 // pred_check_branch
          %662 = sbr.rel (%p660) target = $region124
        $region123: #{tpu_custom_call.1} parent=71 // pred_region
          %663 = dma.done [#allocation23], 16
        $region124: #{tpu_custom_call.1} parent=71 // pred_fallthru
          _
        %s664 = sand.u32 %s62, 1
        %s665 = scalar_lea.sflag [#allocation5], %s664
        %s666 = sand.u32 %s62, 1
        %s667 = smul.addr %s666, 8
        %s668 = scalar_lea.vmem [#allocation4], %s667
        %p669 = pneg %p75
        %p670 = pneg %p72
        %s671 = sand.u32 %s40, 1
        %s672 = scalar_lea.sflag [#allocation8], %s671
        %s673 = sand.u32 %s88, 1
        %s674 = smul.addr %s673, 8
        %s675 = scalar_lea.vmem [#allocation7], %s674
        %p676 = pneg %p101
        %p677 = pneg %p98
        %s678 = sand.u32 %s40, 1
        %s679 = scalar_lea.sflag [#allocation8], %s678
        %s680 = sand.u32 %s114, 1
        %s681 = smul.addr %s680, 8
        %s682 = scalar_lea.vmem [#allocation9], %s681
        %p683 = pneg %p127
        %p684 = pneg %p124
        %s685 = sand.u32 %s40, 1
        %s686 = scalar_lea.sflag [#allocation11], %s685
        %s687 = sand.u32 %s140, 1
        %s688 = scalar_lea.vmem [#allocation10], %s687
        %p689 = pneg %p153
        %p690 = pneg %p150
        %s691 = sand.u32 %s40, 1
        %s692 = scalar_lea.sflag [#allocation11], %s691
        %s693 = sand.u32 %s168, 1
        %s694 = smul.addr %s693, 8
        %s695 = scalar_lea.vmem [#allocation12], %s694
        %p696 = pneg %p181
        %p697 = pneg %p178
        %p698 = pneg %p202
        %p699 = pneg %p199
        %p700 = pneg %p223
        %p701 = pneg %p220
        %p702 = pneg %p244
        %p703 = pneg %p241
        %p704 = pneg %p265
        %p705 = pneg %p262
        %p706 = pneg %p286
        %p707 = pneg %p283
        %p708 = pneg %p307
        %p709 = pneg %p304
        %p710 = pneg %p328
        %p711 = pneg %p325
        %p712 = pneg %p349
        %p713 = pneg %p346
        %p714 = pneg %p377
        %p715 = pneg %p374
        %s716 = sand.u32 %s364, 1
        %s717 = scalar_lea.sflag [#allocation6], %s716
        %s718 = sand.u32 %s364, 1
        %s719 = smul.addr %s718, 8
        %s720 = scalar_lea.vmem [#allocation25], %s719
        %v721 = vld [vmem:[%s592] sm:$0xff]
        %v722 = vld [vmem:[%s618] sm:$0x1]
        %v723 = vld [vmem:[%s627] sm:$0xff]
        %p724 = scmp.eq.s32.totalorder %s45, 0
        // Predicated region
        $region125: #{tpu_custom_call.1} parent=71 // pred_check
          %p725 = pneg %p724
        $region126: #{tpu_custom_call.1} parent=71 // pred_check_branch
          %727 = sbr.rel (%p725) target = $region128
        $region127: #{tpu_custom_call.1} parent=71 // pred_region
          %v728 = vld [vmem:[%s601] sm:$0xff]
          %v729 = vld [vmem:[%s610] sm:$0xff]
          %v730 = vld [vmem:[#allocation16] sm:$0xff]
          %v731 = vld [vmem:[#allocation16 + $0x8] sm:$0xff]
          %v732 = vld [vmem:[#allocation16 + $0x10] sm:$0xff]
          %v733 = vld [vmem:[#allocation16 + $0x18] sm:$0xff]
          %v734 = vld [vmem:[#allocation18] sm:$0x1]
          %v736 = vlaneseq
          %v737 = vshrl.u32 %v736, 7
          %v738 = vsub.s32 0, %v737
          %v739 = vrot.slane %v734, %v738
          %vm741 = vcmask 261120
          %v743 = vsel %vm741, %v728, 0
          %745 = vmatprep.subr.mxu0 0.0
          %746 = vmatpush1.msra.mxu0 %v730
          %747 = vmatprep.subr.mxu0 0.0
          %748 = vmatpush1.msra.mxu0 %v731
          %749 = vmatprep.subr.mxu0 0.0
          %750 = vmatpush1.msra.mxu0 %v732
          %751 = vmatprep.subr.mxu0 0.0
          %752 = vmatpush1.msra.mxu0 %v733
          %753 = vmatprep.subr.mxu0 0.0
          %754 = vmatpush1.msra.mxu0 0.0
          %755 = vmatprep.subr.mxu0 0.0
          %756 = vmatpush1.msra.mxu0 0.0
          %757 = vmatprep.subr.mxu0 0.0
          %758 = vmatpush1.msra.mxu0 0.0
          %759 = vmatprep.subr.mxu0 0.0
          %760 = vmatpush1.msra.mxu0 0.0
          %761 = vmatprep.subr.mxu0 0.0
          %762 = vmatpush1.msra.mxu0 0.0
          %763 = vmatprep.subr.mxu0 0.0
          %764 = vmatpush1.msra.mxu0 0.0
          %765 = vmatprep.subr.mxu0 0.0
          %766 = vmatpush1.msra.mxu0 0.0
          %767 = vmatprep.subr.mxu0 0.0
          %768 = vmatpush1.msra.mxu0 0.0
          %769 = vmatprep.subr.mxu0 0.0
          %770 = vmatpush1.msra.mxu0 0.0
          %771 = vmatprep.subr.mxu0 0.0
          %772 = vmatpush1.msra.mxu0 0.0
          %773 = vmatprep.subr.mxu0 0.0
          %774 = vmatpush1.msra.mxu0 0.0
          %775 = vmatprep.subr.mxu0 0.0
          %776 = vmatpush1.msra.mxu0 0.0
          %777 = vmatprep.subr.mxu0 0.0
          %778 = vmatpush1.msra.mxu0 0.0
          %779 = vmatprep.subr.mxu0 0.0
          %780 = vmatpush1.msra.mxu0 0.0
          %781 = vmatprep.subr.mxu0 0.0
          %782 = vmatpush1.msra.mxu0 0.0
          %783 = vmatprep.subr.mxu0 0.0
          %784 = vmatpush1.msra.mxu0 0.0
          %785 = vmatprep.subr.mxu0 0.0
          %786 = vmatpush1.msra.mxu0 0.0
          %787 = vmatprep.subr.mxu0 0.0
          %788 = vmatpush1.msra.mxu0 0.0
          %789 = vmatprep.subr.mxu0 0.0
          %790 = vmatpush1.msra.mxu0 0.0
          %791 = vmatprep.subr.mxu0 0.0
          %792 = vmatpush1.msra.mxu0 0.0
          %793 = vmatprep.subr.mxu0 0.0
          %794 = vmatpush1.msra.mxu0 0.0
          %795 = vmatprep.subr.mxu0 0.0
          %796 = vmatpush1.msra.mxu0 0.0
          %797 = vmatprep.subr.mxu0 0.0
          %798 = vmatpush1.msra.mxu0 0.0
          %799 = vmatprep.subr.mxu0 0.0
          %800 = vmatpush1.msra.mxu0 0.0
          %801 = vmatprep.subr.mxu0 0.0
          %802 = vmatpush1.msra.mxu0 0.0
          %803 = vmatprep.subr.mxu0 0.0
          %804 = vmatpush1.msra.mxu0 0.0
          %805 = vmatprep.subr.mxu0 0.0
          %806 = vmatpush1.msra.mxu0 0.0
          %807 = vmatprep.subr.mxu0 0.0
          %808 = vmatpush1.msra.mxu0 0.0
          %809 = vmatprep.mubr.f32.mxu0 0.0
          %810 = vmatmul.mubr.f32.gmra.mrb[0].mxu0 %v743
          %v811 = vpop.f32.mrb[0].mxu0
          %v812 = vadd.f32 %v739, %v811
          %v813 = vpop.f32.mrb[0].mxu0
          %814 = vdwg.mxu0
          %v815 = vmax.f32 %v812, 0.0
          %816 = vst.msk [vmem:[#allocation2] sm:$0xff] %vm741, %v815
          %v817 = vld [vmem:[#allocation19] sm:$0xff]
          %v818 = vld [vmem:[#allocation19 + $0x8] sm:$0xff]
          %v819 = vld [vmem:[#allocation19 + $0x10] sm:$0xff]
          %v820 = vld [vmem:[#allocation19 + $0x18] sm:$0xff]
          %v821 = vld [vmem:[#allocation21] sm:$0x1]
          %v823 = vlaneseq
          %v824 = vshrl.u32 %v823, 7
          %v825 = vsub.s32 0, %v824
          %v826 = vrot.slane %v821, %v825
          %v829 = vsel %vm741, %v729, 0
          %831 = vmatprep.subr.mxu0 0.0
          %832 = vmatpush1.msra.mxu0 %v817
          %833 = vmatprep.subr.mxu0 0.0
          %834 = vmatpush1.msra.mxu0 %v818
          %835 = vmatprep.subr.mxu0 0.0
          %836 = vmatpush1.msra.mxu0 %v819
          %837 = vmatprep.subr.mxu0 0.0
          %838 = vmatpush1.msra.mxu0 %v820
          %839 = vmatprep.subr.mxu0 0.0
          %840 = vmatpush1.msra.mxu0 0.0
          %841 = vmatprep.subr.mxu0 0.0
          %842 = vmatpush1.msra.mxu0 0.0
          %843 = vmatprep.subr.mxu0 0.0
          %844 = vmatpush1.msra.mxu0 0.0
          %845 = vmatprep.subr.mxu0 0.0
          %846 = vmatpush1.msra.mxu0 0.0
          %847 = vmatprep.subr.mxu0 0.0
          %848 = vmatpush1.msra.mxu0 0.0
          %849 = vmatprep.subr.mxu0 0.0
          %850 = vmatpush1.msra.mxu0 0.0
          %851 = vmatprep.subr.mxu0 0.0
          %852 = vmatpush1.msra.mxu0 0.0
          %853 = vmatprep.subr.mxu0 0.0
          %854 = vmatpush1.msra.mxu0 0.0
          %855 = vmatprep.subr.mxu0 0.0
          %856 = vmatpush1.msra.mxu0 0.0
          %857 = vmatprep.subr.mxu0 0.0
          %858 = vmatpush1.msra.mxu0 0.0
          %859 = vmatprep.subr.mxu0 0.0
          %860 = vmatpush1.msra.mxu0 0.0
          %861 = vmatprep.subr.mxu0 0.0
          %862 = vmatpush1.msra.mxu0 0.0
          %863 = vmatprep.subr.mxu0 0.0
          %864 = vmatpush1.msra.mxu0 0.0
          %865 = vmatprep.subr.mxu0 0.0
          %866 = vmatpush1.msra.mxu0 0.0
          %867 = vmatprep.subr.mxu0 0.0
          %868 = vmatpush1.msra.mxu0 0.0
          %869 = vmatprep.subr.mxu0 0.0
          %870 = vmatpush1.msra.mxu0 0.0
          %871 = vmatprep.subr.mxu0 0.0
          %872 = vmatpush1.msra.mxu0 0.0
          %873 = vmatprep.subr.mxu0 0.0
          %874 = vmatpush1.msra.mxu0 0.0
          %875 = vmatprep.subr.mxu0 0.0
          %876 = vmatpush1.msra.mxu0 0.0
          %877 = vmatprep.subr.mxu0 0.0
          %878 = vmatpush1.msra.mxu0 0.0
          %879 = vmatprep.subr.mxu0 0.0
          %880 = vmatpush1.msra.mxu0 0.0
          %881 = vmatprep.subr.mxu0 0.0
          %882 = vmatpush1.msra.mxu0 0.0
          %883 = vmatprep.subr.mxu0 0.0
          %884 = vmatpush1.msra.mxu0 0.0
          %885 = vmatprep.subr.mxu0 0.0
          %886 = vmatpush1.msra.mxu0 0.0
          %887 = vmatprep.subr.mxu0 0.0
          %888 = vmatpush1.msra.mxu0 0.0
          %889 = vmatprep.subr.mxu0 0.0
          %890 = vmatpush1.msra.mxu0 0.0
          %891 = vmatprep.subr.mxu0 0.0
          %892 = vmatpush1.msra.mxu0 0.0
          %893 = vmatprep.subr.mxu0 0.0
          %894 = vmatpush1.msra.mxu0 0.0
          %895 = vmatprep.mubr.f32.mxu0 0.0
          %896 = vmatmul.mubr.f32.gmra.mrb[0].mxu0 %v829
          %v897 = vpop.f32.mrb[0].mxu0
          %v898 = vadd.f32 %v826, %v897
          %v899 = vpop.f32.mrb[0].mxu0
          %900 = vdwg.mxu0
          %v901 = vmax.f32 %v898, 0.0
          %902 = vst.msk [vmem:[#allocation3] sm:$0xff] %vm741, %v901
        $region128: #{tpu_custom_call.1} parent=71 // pred_fallthru
          _
        %v903 = vld [vmem:[#allocation13] sm:$0xff]
        %v904 = vld [vmem:[#allocation13 + $0x8] sm:$0xff]
        %v905 = vld [vmem:[#allocation13 + $0x10] sm:$0xff]
        %v906 = vld [vmem:[#allocation13 + $0x18] sm:$0xff]
        %v907 = vld [vmem:[#allocation15] sm:$0x1]
        %v909 = vlaneseq
        %v910 = vshrl.u32 %v909, 7
        %v911 = vsub.s32 0, %v910
        %v912 = vrot.slane %v907, %v911
        %vm914 = vcmask 261120
        %v916 = vsel %vm914, %v721, 0
        %918 = vmatprep.subr.mxu0 0.0
        %919 = vmatpush1.msra.mxu0 %v903
        %920 = vmatprep.subr.mxu0 0.0
        %921 = vmatpush1.msra.mxu0 %v904
        %922 = vmatprep.subr.mxu0 0.0
        %923 = vmatpush1.msra.mxu0 %v905
        %924 = vmatprep.subr.mxu0 0.0
        %925 = vmatpush1.msra.mxu0 %v906
        %926 = vmatprep.subr.mxu0 0.0
        %927 = vmatpush1.msra.mxu0 0.0
        %928 = vmatprep.subr.mxu0 0.0
        %929 = vmatpush1.msra.mxu0 0.0
        %930 = vmatprep.subr.mxu0 0.0
        %931 = vmatpush1.msra.mxu0 0.0
        %932 = vmatprep.subr.mxu0 0.0
        %933 = vmatpush1.msra.mxu0 0.0
        %934 = vmatprep.subr.mxu0 0.0
        %935 = vmatpush1.msra.mxu0 0.0
        %936 = vmatprep.subr.mxu0 0.0
        %937 = vmatpush1.msra.mxu0 0.0
        %938 = vmatprep.subr.mxu0 0.0
        %939 = vmatpush1.msra.mxu0 0.0
        %940 = vmatprep.subr.mxu0 0.0
        %941 = vmatpush1.msra.mxu0 0.0
        %942 = vmatprep.subr.mxu0 0.0
        %943 = vmatpush1.msra.mxu0 0.0
        %944 = vmatprep.subr.mxu0 0.0
        %945 = vmatpush1.msra.mxu0 0.0
        %946 = vmatprep.subr.mxu0 0.0
        %947 = vmatpush1.msra.mxu0 0.0
        %948 = vmatprep.subr.mxu0 0.0
        %949 = vmatpush1.msra.mxu0 0.0
        %950 = vmatprep.subr.mxu0 0.0
        %951 = vmatpush1.msra.mxu0 0.0
        %952 = vmatprep.subr.mxu0 0.0
        %953 = vmatpush1.msra.mxu0 0.0
        %954 = vmatprep.subr.mxu0 0.0
        %955 = vmatpush1.msra.mxu0 0.0
        %956 = vmatprep.subr.mxu0 0.0
        %957 = vmatpush1.msra.mxu0 0.0
        %958 = vmatprep.subr.mxu0 0.0
        %959 = vmatpush1.msra.mxu0 0.0
        %960 = vmatprep.subr.mxu0 0.0
        %961 = vmatpush1.msra.mxu0 0.0
        %962 = vmatprep.subr.mxu0 0.0
        %963 = vmatpush1.msra.mxu0 0.0
        %964 = vmatprep.subr.mxu0 0.0
        %965 = vmatpush1.msra.mxu0 0.0
        %966 = vmatprep.subr.mxu0 0.0
        %967 = vmatpush1.msra.mxu0 0.0
        %968 = vmatprep.subr.mxu0 0.0
        %969 = vmatpush1.msra.mxu0 0.0
        %970 = vmatprep.subr.mxu0 0.0
        %971 = vmatpush1.msra.mxu0 0.0
        %972 = vmatprep.subr.mxu0 0.0
        %973 = vmatpush1.msra.mxu0 0.0
        %974 = vmatprep.subr.mxu0 0.0
        %975 = vmatpush1.msra.mxu0 0.0
        %976 = vmatprep.subr.mxu0 0.0
        %977 = vmatpush1.msra.mxu0 0.0
        %978 = vmatprep.subr.mxu0 0.0
        %979 = vmatpush1.msra.mxu0 0.0
        %980 = vmatprep.subr.mxu0 0.0
        %981 = vmatpush1.msra.mxu0 0.0
        %982 = vmatprep.mubr.f32.mxu0 0.0
        %983 = vmatmul.mubr.f32.gmra.mrb[0].mxu0 %v916
        %v984 = vpop.f32.mrb[0].mxu0
        %v985 = vadd.f32 %v912, %v984
        %v986 = vpop.f32.mrb[0].mxu0
        %987 = vdwg.mxu0
        %v988 = vmax.f32 %v985, 0.0
        %v989 = vmul.f32 %v988, 0.5
        %v990 = vld [vmem:[#allocation2] sm:$0xff]
        %v991 = vld [vmem:[#allocation3] sm:$0xff]
        %vm992 = vcmp.gt.f32.partialorder %v722, 0.5
        %v993 = vsel %vm992, 1, 0
        %v994 = vlaneseq
        %v995 = vshrl.u32 %v994, 7
        %v996 = vsub.s32 0, %v995
        %v997 = vrot.slane %v993, %v996
        %vm998 = vcmp.eq.s32.totalorder %v997, 1
        %vm999 = vcmask 31744
        %v1001 = vsel %vm999, %v989, 0
        %v1004 = vsel %vm999, %v990, 0
        %1006 = vmatprep.subr.mxu0 0.0
        %1007 = vmatpush1.xpose.msra.mxu0 %v1004
        %1008 = vmatprep.subr.mxu0 0.0
        %1009 = vmatpush1.xpose.msra.mxu0 0.0
        %1010 = vmatprep.subr.mxu0 0.0
        %1011 = vmatpush1.xpose.msra.mxu0 0.0
        %1012 = vmatprep.subr.mxu0 0.0
        %1013 = vmatpush1.xpose.msra.mxu0 0.0
        %1014 = vmatprep.subr.mxu0 0.0
        %1015 = vmatpush1.xpose.msra.mxu0 0.0
        %1016 = vmatprep.subr.mxu0 0.0
        %1017 = vmatpush1.xpose.msra.mxu0 0.0
        %1018 = vmatprep.subr.mxu0 0.0
        %1019 = vmatpush1.xpose.msra.mxu0 0.0
        %1020 = vmatprep.subr.mxu0 0.0
        %1021 = vmatpush1.xpose.msra.mxu0 0.0
        %1022 = vmatprep.subr.mxu0 0.0
        %1023 = vmatpush1.xpose.msra.mxu0 0.0
        %1024 = vmatprep.subr.mxu0 0.0
        %1025 = vmatpush1.xpose.msra.mxu0 0.0
        %1026 = vmatprep.subr.mxu0 0.0
        %1027 = vmatpush1.xpose.msra.mxu0 0.0
        %1028 = vmatprep.subr.mxu0 0.0
        %1029 = vmatpush1.xpose.msra.mxu0 0.0
        %1030 = vmatprep.subr.mxu0 0.0
        %1031 = vmatpush1.xpose.msra.mxu0 0.0
        %1032 = vmatprep.subr.mxu0 0.0
        %1033 = vmatpush1.xpose.msra.mxu0 0.0
        %1034 = vmatprep.subr.mxu0 0.0
        %1035 = vmatpush1.xpose.msra.mxu0 0.0
        %1036 = vmatprep.subr.mxu0 0.0
        %1037 = vmatpush1.xpose.msra.mxu0 0.0
        %1038 = vmatprep.subr.mxu0 0.0
        %1039 = vmatpush1.xpose.msra.mxu0 0.0
        %1040 = vmatprep.subr.mxu0 0.0
        %1041 = vmatpush1.xpose.msra.mxu0 0.0
        %1042 = vmatprep.subr.mxu0 0.0
        %1043 = vmatpush1.xpose.msra.mxu0 0.0
        %1044 = vmatprep.subr.mxu0 0.0
        %1045 = vmatpush1.xpose.msra.mxu0 0.0
        %1046 = vmatprep.subr.mxu0 0.0
        %1047 = vmatpush1.xpose.msra.mxu0 0.0
        %1048 = vmatprep.subr.mxu0 0.0
        %1049 = vmatpush1.xpose.msra.mxu0 0.0
        %1050 = vmatprep.subr.mxu0 0.0
        %1051 = vmatpush1.xpose.msra.mxu0 0.0
        %1052 = vmatprep.subr.mxu0 0.0
        %1053 = vmatpush1.xpose.msra.mxu0 0.0
        %1054 = vmatprep.subr.mxu0 0.0
        %1055 = vmatpush1.xpose.msra.mxu0 0.0
        %1056 = vmatprep.subr.mxu0 0.0
        %1057 = vmatpush1.xpose.msra.mxu0 0.0
        %1058 = vmatprep.subr.mxu0 0.0
        %1059 = vmatpush1.xpose.msra.mxu0 0.0
        %1060 = vmatprep.subr.mxu0 0.0
        %1061 = vmatpush1.xpose.msra.mxu0 0.0
        %1062 = vmatprep.subr.mxu0 0.0
        %1063 = vmatpush1.xpose.msra.mxu0 0.0
        %1064 = vmatprep.subr.mxu0 0.0
        %1065 = vmatpush1.xpose.msra.mxu0 0.0
        %1066 = vmatprep.subr.mxu0 0.0
        %1067 = vmatpush1.xpose.msra.mxu0 0.0
        %1068 = vmatprep.subr.mxu0 0.0
        %1069 = vmatpush1.xpose.msra.mxu0 0.0
        %1070 = vmatprep.mubr.f32.mxu0 0.0
        %1071 = vmatmul.mubr.f32.gmra.mrb[0].mxu0 %v1001
        %v1072 = vpop.f32.mrb[0].mxu0
        %v1073 = vadd.f32 0.0, %v1072
        %v1074 = vpop.f32.mrb[0].mxu0
        %1075 = vdwg.mxu0
        %v1076 = vsel %vm998, -4.2949673e+09, %v1073
        %vm1077 = vcmask 64512
        %v1078 = vsel %vm1077, %v1076, -inf
        %1079 = vmax.xlane.f32.xlu0 %v1078
        %v1080 = vpop.xlane.xlu0 %1079
        %v1081 = vsub.f32 %v1076, %v1080
        %v1082 = vmul.f32 %v1081, 1.442695
        %v1083 = vpow.pop %v1082
        %v1084 = vsel %vm1077, %v1083, 0.0
        %1085 = vadd.xlane.f32.xlu0 %v1084
        %v1086 = vpop.xlane.xlu0 %1085
        %v1087 = vrcp.pop %v1086
        %v1088 = vmul.f32 %v1087, %v723
        %1090 = vset.pattern.permute.xlu0 0
        %1091 = vperm.xlu0 %1090, %v1088
        %v1092 = vpop.permute.xlu0 %1091
        %v1094 = vmul.f32 %v1083, %v1092
        %v1096 = vsel %vm1077, %v1094, 0
        %1098 = vmatprep.subr.mxu0 0.0
        %1099 = vmatpush1.msra.mxu0 %v991
        %1100 = vmatprep.subr.mxu0 0.0
        %1101 = vmatpush1.msra.mxu0 0.0
        %1102 = vmatprep.subr.mxu0 0.0
        %1103 = vmatpush1.msra.mxu0 0.0
        %1104 = vmatprep.subr.mxu0 0.0
        %1105 = vmatpush1.msra.mxu0 0.0
        %1106 = vmatprep.subr.mxu0 0.0
        %1107 = vmatpush1.msra.mxu0 0.0
        %1108 = vmatprep.subr.mxu0 0.0
        %1109 = vmatpush1.msra.mxu0 0.0
        %1110 = vmatprep.subr.mxu0 0.0
        %1111 = vmatpush1.msra.mxu0 0.0
        %1112 = vmatprep.subr.mxu0 0.0
        %1113 = vmatpush1.msra.mxu0 0.0
        %1114 = vmatprep.subr.mxu0 0.0
        %1115 = vmatpush1.msra.mxu0 0.0
        %1116 = vmatprep.subr.mxu0 0.0
        %1117 = vmatpush1.msra.mxu0 0.0
        %1118 = vmatprep.subr.mxu0 0.0
        %1119 = vmatpush1.msra.mxu0 0.0
        %1120 = vmatprep.subr.mxu0 0.0
        %1121 = vmatpush1.msra.mxu0 0.0
        %1122 = vmatprep.subr.mxu0 0.0
        %1123 = vmatpush1.msra.mxu0 0.0
        %1124 = vmatprep.subr.mxu0 0.0
        %1125 = vmatpush1.msra.mxu0 0.0
        %1126 = vmatprep.subr.mxu0 0.0
        %1127 = vmatpush1.msra.mxu0 0.0
        %1128 = vmatprep.subr.mxu0 0.0
        %1129 = vmatpush1.msra.mxu0 0.0
        %1130 = vmatprep.subr.mxu0 0.0
        %1131 = vmatpush1.msra.mxu0 0.0
        %1132 = vmatprep.subr.mxu0 0.0
        %1133 = vmatpush1.msra.mxu0 0.0
        %1134 = vmatprep.subr.mxu0 0.0
        %1135 = vmatpush1.msra.mxu0 0.0
        %1136 = vmatprep.subr.mxu0 0.0
        %1137 = vmatpush1.msra.mxu0 0.0
        %1138 = vmatprep.subr.mxu0 0.0
        %1139 = vmatpush1.msra.mxu0 0.0
        %1140 = vmatprep.subr.mxu0 0.0
        %1141 = vmatpush1.msra.mxu0 0.0
        %1142 = vmatprep.subr.mxu0 0.0
        %1143 = vmatpush1.msra.mxu0 0.0
        %1144 = vmatprep.subr.mxu0 0.0
        %1145 = vmatpush1.msra.mxu0 0.0
        %1146 = vmatprep.subr.mxu0 0.0
        %1147 = vmatpush1.msra.mxu0 0.0
        %1148 = vmatprep.subr.mxu0 0.0
        %1149 = vmatpush1.msra.mxu0 0.0
        %1150 = vmatprep.subr.mxu0 0.0
        %1151 = vmatpush1.msra.mxu0 0.0
        %1152 = vmatprep.subr.mxu0 0.0
        %1153 = vmatpush1.msra.mxu0 0.0
        %1154 = vmatprep.subr.mxu0 0.0
        %1155 = vmatpush1.msra.mxu0 0.0
        %1156 = vmatprep.subr.mxu0 0.0
        %1157 = vmatpush1.msra.mxu0 0.0
        %1158 = vmatprep.subr.mxu0 0.0
        %1159 = vmatpush1.msra.mxu0 0.0
        %1160 = vmatprep.subr.mxu0 0.0
        %1161 = vmatpush1.msra.mxu0 0.0
        %1162 = vmatprep.mubr.f32.mxu0 0.0
        %1163 = vmatmul.mubr.f32.gmra.mrb[0].mxu0 %v1096
        %v1164 = vpop.f32.mrb[0].mxu0
        %v1165 = vadd.f32 0.0, %v1164
        %v1166 = vpop.f32.mrb[0].mxu0
        %1167 = vdwg.mxu0
        %1168 = vrot.lane.b32.xlu0 %v989, 124
        %v1169 = vpop.permute.xlu0 %1168
        %1170 = vrot.lane.b32.xlu0 %v990, 124
        %v1171 = vpop.permute.xlu0 %1170
        %v1172 = vsel %vm999, %v1169, 0
        %v1174 = vsel %vm999, %v1171, 0
        %1176 = vmatprep.subr.mxu0 0.0
        %1177 = vmatpush1.xpose.msra.mxu0 %v1174
        %1178 = vmatprep.subr.mxu0 0.0
        %1179 = vmatpush1.xpose.msra.mxu0 0.0
        %1180 = vmatprep.subr.mxu0 0.0
        %1181 = vmatpush1.xpose.msra.mxu0 0.0
        %1182 = vmatprep.subr.mxu0 0.0
        %1183 = vmatpush1.xpose.msra.mxu0 0.0
        %1184 = vmatprep.subr.mxu0 0.0
        %1185 = vmatpush1.xpose.msra.mxu0 0.0
        %1186 = vmatprep.subr.mxu0 0.0
        %1187 = vmatpush1.xpose.msra.mxu0 0.0
        %1188 = vmatprep.subr.mxu0 0.0
        %1189 = vmatpush1.xpose.msra.mxu0 0.0
        %1190 = vmatprep.subr.mxu0 0.0
        %1191 = vmatpush1.xpose.msra.mxu0 0.0
        %1192 = vmatprep.subr.mxu0 0.0
        %1193 = vmatpush1.xpose.msra.mxu0 0.0
        %1194 = vmatprep.subr.mxu0 0.0
        %1195 = vmatpush1.xpose.msra.mxu0 0.0
        %1196 = vmatprep.subr.mxu0 0.0
        %1197 = vmatpush1.xpose.msra.mxu0 0.0
        %1198 = vmatprep.subr.mxu0 0.0
        %1199 = vmatpush1.xpose.msra.mxu0 0.0
        %1200 = vmatprep.subr.mxu0 0.0
        %1201 = vmatpush1.xpose.msra.mxu0 0.0
        %1202 = vmatprep.subr.mxu0 0.0
        %1203 = vmatpush1.xpose.msra.mxu0 0.0
        %1204 = vmatprep.subr.mxu0 0.0
        %1205 = vmatpush1.xpose.msra.mxu0 0.0
        %1206 = vmatprep.subr.mxu0 0.0
        %1207 = vmatpush1.xpose.msra.mxu0 0.0
        %1208 = vmatprep.subr.mxu0 0.0
        %1209 = vmatpush1.xpose.msra.mxu0 0.0
        %1210 = vmatprep.subr.mxu0 0.0
        %1211 = vmatpush1.xpose.msra.mxu0 0.0
        %1212 = vmatprep.subr.mxu0 0.0
        %1213 = vmatpush1.xpose.msra.mxu0 0.0
        %1214 = vmatprep.subr.mxu0 0.0
        %1215 = vmatpush1.xpose.msra.mxu0 0.0
        %1216 = vmatprep.subr.mxu0 0.0
        %1217 = vmatpush1.xpose.msra.mxu0 0.0
        %1218 = vmatprep.subr.mxu0 0.0
        %1219 = vmatpush1.xpose.msra.mxu0 0.0
        %1220 = vmatprep.subr.mxu0 0.0
        %1221 = vmatpush1.xpose.msra.mxu0 0.0
        %1222 = vmatprep.subr.mxu0 0.0
        %1223 = vmatpush1.xpose.msra.mxu0 0.0
        %1224 = vmatprep.subr.mxu0 0.0
        %1225 = vmatpush1.xpose.msra.mxu0 0.0
        %1226 = vmatprep.subr.mxu0 0.0
        %1227 = vmatpush1.xpose.msra.mxu0 0.0
        %1228 = vmatprep.subr.mxu0 0.0
        %1229 = vmatpush1.xpose.msra.mxu0 0.0
        %1230 = vmatprep.subr.mxu0 0.0
        %1231 = vmatpush1.xpose.msra.mxu0 0.0
        %1232 = vmatprep.subr.mxu0 0.0
        %1233 = vmatpush1.xpose.msra.mxu0 0.0
        %1234 = vmatprep.subr.mxu0 0.0
        %1235 = vmatpush1.xpose.msra.mxu0 0.0
        %1236 = vmatprep.subr.mxu0 0.0
        %1237 = vmatpush1.xpose.msra.mxu0 0.0
        %1238 = vmatprep.subr.mxu0 0.0
        %1239 = vmatpush1.xpose.msra.mxu0 0.0
        %1240 = vmatprep.mubr.f32.mxu0 0.0
        %1241 = vmatmul.mubr.f32.gmra.mrb[0].mxu0 %v1172
        %v1242 = vpop.f32.mrb[0].mxu0
        %v1243 = vadd.f32 0.0, %v1242
        %v1244 = vpop.f32.mrb[0].mxu0
        %1245 = vdwg.mxu0
        %v1246 = vsel %vm998, -4.2949673e+09, %v1243
        %v1247 = vsel %vm1077, %v1246, -inf
        %1248 = vmax.xlane.f32.xlu0 %v1247
        %v1249 = vpop.xlane.xlu0 %1248
        %v1250 = vsub.f32 %v1246, %v1249
        %v1251 = vmul.f32 %v1250, 1.442695
        %v1252 = vpow.pop %v1251
        %v1253 = vsel %vm1077, %v1252, 0.0
        %1254 = vadd.xlane.f32.xlu0 %v1253
        %v1255 = vpop.xlane.xlu0 %1254
        %v1256 = vrcp.pop %v1255
        %v1257 = vmul.f32 %v1256, %v723
        %1259 = vset.pattern.permute.xlu0 0
        %1260 = vperm.xlu0 %1259, %v1257
        %v1261 = vpop.permute.xlu0 %1260
        %v1263 = vmul.f32 %v1252, %v1261
        %1265 = vrot.lane.b32.xlu0 %v991, 124
        %v1266 = vpop.permute.xlu0 %1265
        %v1269 = vsel %vm1077, %v1263, 0
        %1271 = vmatprep.subr.mxu0 0.0
        %1272 = vmatpush1.msra.mxu0 %v1266
        %1273 = vmatprep.subr.mxu0 0.0
        %1274 = vmatpush1.msra.mxu0 0.0
        %1275 = vmatprep.subr.mxu0 0.0
        %1276 = vmatpush1.msra.mxu0 0.0
        %1277 = vmatprep.subr.mxu0 0.0
        %1278 = vmatpush1.msra.mxu0 0.0
        %1279 = vmatprep.subr.mxu0 0.0
        %1280 = vmatpush1.msra.mxu0 0.0
        %1281 = vmatprep.subr.mxu0 0.0
        %1282 = vmatpush1.msra.mxu0 0.0
        %1283 = vmatprep.subr.mxu0 0.0
        %1284 = vmatpush1.msra.mxu0 0.0
        %1285 = vmatprep.subr.mxu0 0.0
        %1286 = vmatpush1.msra.mxu0 0.0
        %1287 = vmatprep.subr.mxu0 0.0
        %1288 = vmatpush1.msra.mxu0 0.0
        %1289 = vmatprep.subr.mxu0 0.0
        %1290 = vmatpush1.msra.mxu0 0.0
        %1291 = vmatprep.subr.mxu0 0.0
        %1292 = vmatpush1.msra.mxu0 0.0
        %1293 = vmatprep.subr.mxu0 0.0
        %1294 = vmatpush1.msra.mxu0 0.0
        %1295 = vmatprep.subr.mxu0 0.0
        %1296 = vmatpush1.msra.mxu0 0.0
        %1297 = vmatprep.subr.mxu0 0.0
        %1298 = vmatpush1.msra.mxu0 0.0
        %1299 = vmatprep.subr.mxu0 0.0
        %1300 = vmatpush1.msra.mxu0 0.0
        %1301 = vmatprep.subr.mxu0 0.0
        %1302 = vmatpush1.msra.mxu0 0.0
        %1303 = vmatprep.subr.mxu0 0.0
        %1304 = vmatpush1.msra.mxu0 0.0
        %1305 = vmatprep.subr.mxu0 0.0
        %1306 = vmatpush1.msra.mxu0 0.0
        %1307 = vmatprep.subr.mxu0 0.0
        %1308 = vmatpush1.msra.mxu0 0.0
        %1309 = vmatprep.subr.mxu0 0.0
        %1310 = vmatpush1.msra.mxu0 0.0
        %1311 = vmatprep.subr.mxu0 0.0
        %1312 = vmatpush1.msra.mxu0 0.0
        %1313 = vmatprep.subr.mxu0 0.0
        %1314 = vmatpush1.msra.mxu0 0.0
        %1315 = vmatprep.subr.mxu0 0.0
        %1316 = vmatpush1.msra.mxu0 0.0
        %1317 = vmatprep.subr.mxu0 0.0
        %1318 = vmatpush1.msra.mxu0 0.0
        %1319 = vmatprep.subr.mxu0 0.0
        %1320 = vmatpush1.msra.mxu0 0.0
        %1321 = vmatprep.subr.mxu0 0.0
        %1322 = vmatpush1.msra.mxu0 0.0
        %1323 = vmatprep.subr.mxu0 0.0
        %1324 = vmatpush1.msra.mxu0 0.0
        %1325 = vmatprep.subr.mxu0 0.0
        %1326 = vmatpush1.msra.mxu0 0.0
        %1327 = vmatprep.subr.mxu0 0.0
        %1328 = vmatpush1.msra.mxu0 0.0
        %1329 = vmatprep.subr.mxu0 0.0
        %1330 = vmatpush1.msra.mxu0 0.0
        %1331 = vmatprep.subr.mxu0 0.0
        %1332 = vmatpush1.msra.mxu0 0.0
        %1333 = vmatprep.subr.mxu0 0.0
        %1334 = vmatpush1.msra.mxu0 0.0
        %1335 = vmatprep.mubr.f32.mxu0 0.0
        %1336 = vmatmul.mubr.f32.gmra.mrb[0].mxu0 %v1269
        %v1337 = vpop.f32.mrb[0].mxu0
        %v1338 = vadd.f32 0.0, %v1337
        %v1339 = vpop.f32.mrb[0].mxu0
        %1340 = vdwg.mxu0
        %1341 = vrot.lane.b32.xlu0 %v989, 120
        %v1342 = vpop.permute.xlu0 %1341
        %1343 = vrot.lane.b32.xlu0 %v990, 120
        %v1344 = vpop.permute.xlu0 %1343
        %v1345 = vsel %vm999, %v1342, 0
        %v1347 = vsel %vm999, %v1344, 0
        %1349 = vmatprep.subr.mxu0 0.0
        %1350 = vmatpush1.xpose.msra.mxu0 %v1347
        %1351 = vmatprep.subr.mxu0 0.0
        %1352 = vmatpush1.xpose.msra.mxu0 0.0
        %1353 = vmatprep.subr.mxu0 0.0
        %1354 = vmatpush1.xpose.msra.mxu0 0.0
        %1355 = vmatprep.subr.mxu0 0.0
        %1356 = vmatpush1.xpose.msra.mxu0 0.0
        %1357 = vmatprep.subr.mxu0 0.0
        %1358 = vmatpush1.xpose.msra.mxu0 0.0
        %1359 = vmatprep.subr.mxu0 0.0
        %1360 = vmatpush1.xpose.msra.mxu0 0.0
        %1361 = vmatprep.subr.mxu0 0.0
        %1362 = vmatpush1.xpose.msra.mxu0 0.0
        %1363 = vmatprep.subr.mxu0 0.0
        %1364 = vmatpush1.xpose.msra.mxu0 0.0
        %1365 = vmatprep.subr.mxu0 0.0
        %1366 = vmatpush1.xpose.msra.mxu0 0.0
        %1367 = vmatprep.subr.mxu0 0.0
        %1368 = vmatpush1.xpose.msra.mxu0 0.0
        %1369 = vmatprep.subr.mxu0 0.0
        %1370 = vmatpush1.xpose.msra.mxu0 0.0
        %1371 = vmatprep.subr.mxu0 0.0
        %1372 = vmatpush1.xpose.msra.mxu0 0.0
        %1373 = vmatprep.subr.mxu0 0.0
        %1374 = vmatpush1.xpose.msra.mxu0 0.0
        %1375 = vmatprep.subr.mxu0 0.0
        %1376 = vmatpush1.xpose.msra.mxu0 0.0
        %1377 = vmatprep.subr.mxu0 0.0
        %1378 = vmatpush1.xpose.msra.mxu0 0.0
        %1379 = vmatprep.subr.mxu0 0.0
        %1380 = vmatpush1.xpose.msra.mxu0 0.0
        %1381 = vmatprep.subr.mxu0 0.0
        %1382 = vmatpush1.xpose.msra.mxu0 0.0
        %1383 = vmatprep.subr.mxu0 0.0
        %1384 = vmatpush1.xpose.msra.mxu0 0.0
        %1385 = vmatprep.subr.mxu0 0.0
        %1386 = vmatpush1.xpose.msra.mxu0 0.0
        %1387 = vmatprep.subr.mxu0 0.0
        %1388 = vmatpush1.xpose.msra.mxu0 0.0
        %1389 = vmatprep.subr.mxu0 0.0
        %1390 = vmatpush1.xpose.msra.mxu0 0.0
        %1391 = vmatprep.subr.mxu0 0.0
        %1392 = vmatpush1.xpose.msra.mxu0 0.0
        %1393 = vmatprep.subr.mxu0 0.0
        %1394 = vmatpush1.xpose.msra.mxu0 0.0
        %1395 = vmatprep.subr.mxu0 0.0
        %1396 = vmatpush1.xpose.msra.mxu0 0.0
        %1397 = vmatprep.subr.mxu0 0.0
        %1398 = vmatpush1.xpose.msra.mxu0 0.0
        %1399 = vmatprep.subr.mxu0 0.0
        %1400 = vmatpush1.xpose.msra.mxu0 0.0
        %1401 = vmatprep.subr.mxu0 0.0
        %1402 = vmatpush1.xpose.msra.mxu0 0.0
        %1403 = vmatprep.subr.mxu0 0.0
        %1404 = vmatpush1.xpose.msra.mxu0 0.0
        %1405 = vmatprep.subr.mxu0 0.0
        %1406 = vmatpush1.xpose.msra.mxu0 0.0
        %1407 = vmatprep.subr.mxu0 0.0
        %1408 = vmatpush1.xpose.msra.mxu0 0.0
        %1409 = vmatprep.subr.mxu0 0.0
        %1410 = vmatpush1.xpose.msra.mxu0 0.0
        %1411 = vmatprep.subr.mxu0 0.0
        %1412 = vmatpush1.xpose.msra.mxu0 0.0
        %1413 = vmatprep.mubr.f32.mxu0 0.0
        %1414 = vmatmul.mubr.f32.gmra.mrb[0].mxu0 %v1345
        %v1415 = vpop.f32.mrb[0].mxu0
        %v1416 = vadd.f32 0.0, %v1415
        %v1417 = vpop.f32.mrb[0].mxu0
        %1418 = vdwg.mxu0
        %v1419 = vsel %vm998, -4.2949673e+09, %v1416
        %v1420 = vsel %vm1077, %v1419, -inf
        %1421 = vmax.xlane.f32.xlu0 %v1420
        %v1422 = vpop.xlane.xlu0 %1421
        %v1423 = vsub.f32 %v1419, %v1422
        %v1424 = vmul.f32 %v1423, 1.442695
        %v1425 = vpow.pop %v1424
        %v1426 = vsel %vm1077, %v1425, 0.0
        %1427 = vadd.xlane.f32.xlu0 %v1426
        %v1428 = vpop.xlane.xlu0 %1427
        %v1429 = vrcp.pop %v1428
        %v1430 = vmul.f32 %v1429, %v723
        %1432 = vset.pattern.permute.xlu0 0
        %1433 = vperm.xlu0 %1432, %v1430
        %v1434 = vpop.permute.xlu0 %1433
        %v1436 = vmul.f32 %v1425, %v1434
        %1437 = vrot.lane.b32.xlu0 %v991, 120
        %v1438 = vpop.permute.xlu0 %1437
        %v1441 = vsel %vm1077, %v1436, 0
        %1443 = vmatprep.subr.mxu0 0.0
        %1444 = vmatpush1.msra.mxu0 %v1438
        %1445 = vmatprep.subr.mxu0 0.0
        %1446 = vmatpush1.msra.mxu0 0.0
        %1447 = vmatprep.subr.mxu0 0.0
        %1448 = vmatpush1.msra.mxu0 0.0
        %1449 = vmatprep.subr.mxu0 0.0
        %1450 = vmatpush1.msra.mxu0 0.0
        %1451 = vmatprep.subr.mxu0 0.0
        %1452 = vmatpush1.msra.mxu0 0.0
        %1453 = vmatprep.subr.mxu0 0.0
        %1454 = vmatpush1.msra.mxu0 0.0
        %1455 = vmatprep.subr.mxu0 0.0
        %1456 = vmatpush1.msra.mxu0 0.0
        %1457 = vmatprep.subr.mxu0 0.0
        %1458 = vmatpush1.msra.mxu0 0.0
        %1459 = vmatprep.subr.mxu0 0.0
        %1460 = vmatpush1.msra.mxu0 0.0
        %1461 = vmatprep.subr.mxu0 0.0
        %1462 = vmatpush1.msra.mxu0 0.0
        %1463 = vmatprep.subr.mxu0 0.0
        %1464 = vmatpush1.msra.mxu0 0.0
        %1465 = vmatprep.subr.mxu0 0.0
        %1466 = vmatpush1.msra.mxu0 0.0
        %1467 = vmatprep.subr.mxu0 0.0
        %1468 = vmatpush1.msra.mxu0 0.0
        %1469 = vmatprep.subr.mxu0 0.0
        %1470 = vmatpush1.msra.mxu0 0.0
        %1471 = vmatprep.subr.mxu0 0.0
        %1472 = vmatpush1.msra.mxu0 0.0
        %1473 = vmatprep.subr.mxu0 0.0
        %1474 = vmatpush1.msra.mxu0 0.0
        %1475 = vmatprep.subr.mxu0 0.0
        %1476 = vmatpush1.msra.mxu0 0.0
        %1477 = vmatprep.subr.mxu0 0.0
        %1478 = vmatpush1.msra.mxu0 0.0
        %1479 = vmatprep.subr.mxu0 0.0
        %1480 = vmatpush1.msra.mxu0 0.0
        %1481 = vmatprep.subr.mxu0 0.0
        %1482 = vmatpush1.msra.mxu0 0.0
        %1483 = vmatprep.subr.mxu0 0.0
        %1484 = vmatpush1.msra.mxu0 0.0
        %1485 = vmatprep.subr.mxu0 0.0
        %1486 = vmatpush1.msra.mxu0 0.0
        %1487 = vmatprep.subr.mxu0 0.0
        %1488 = vmatpush1.msra.mxu0 0.0
        %1489 = vmatprep.subr.mxu0 0.0
        %1490 = vmatpush1.msra.mxu0 0.0
        %1491 = vmatprep.subr.mxu0 0.0
        %1492 = vmatpush1.msra.mxu0 0.0
        %1493 = vmatprep.subr.mxu0 0.0
        %1494 = vmatpush1.msra.mxu0 0.0
        %1495 = vmatprep.subr.mxu0 0.0
        %1496 = vmatpush1.msra.mxu0 0.0
        %1497 = vmatprep.subr.mxu0 0.0
        %1498 = vmatpush1.msra.mxu0 0.0
        %1499 = vmatprep.subr.mxu0 0.0
        %1500 = vmatpush1.msra.mxu0 0.0
        %1501 = vmatprep.subr.mxu0 0.0
        %1502 = vmatpush1.msra.mxu0 0.0
        %1503 = vmatprep.subr.mxu0 0.0
        %1504 = vmatpush1.msra.mxu0 0.0
        %1505 = vmatprep.subr.mxu0 0.0
        %1506 = vmatpush1.msra.mxu0 0.0
        %1507 = vmatprep.mubr.f32.mxu0 0.0
        %1508 = vmatmul.mubr.f32.gmra.mrb[0].mxu0 %v1441
        %v1509 = vpop.f32.mrb[0].mxu0
        %v1510 = vadd.f32 0.0, %v1509
        %v1511 = vpop.f32.mrb[0].mxu0
        %1512 = vdwg.mxu0
        %1513 = vrot.lane.b32.xlu0 %v989, 116
        %v1514 = vpop.permute.xlu0 %1513
        %1515 = vrot.lane.b32.xlu0 %v990, 116
        %v1516 = vpop.permute.xlu0 %1515
        %v1517 = vsel %vm999, %v1514, 0
        %v1519 = vsel %vm999, %v1516, 0
        %1521 = vmatprep.subr.mxu0 0.0
        %1522 = vmatpush1.xpose.msra.mxu0 %v1519
        %1523 = vmatprep.subr.mxu0 0.0
        %1524 = vmatpush1.xpose.msra.mxu0 0.0
        %1525 = vmatprep.subr.mxu0 0.0
        %1526 = vmatpush1.xpose.msra.mxu0 0.0
        %1527 = vmatprep.subr.mxu0 0.0
        %1528 = vmatpush1.xpose.msra.mxu0 0.0
        %1529 = vmatprep.subr.mxu0 0.0
        %1530 = vmatpush1.xpose.msra.mxu0 0.0
        %1531 = vmatprep.subr.mxu0 0.0
        %1532 = vmatpush1.xpose.msra.mxu0 0.0
        %1533 = vmatprep.subr.mxu0 0.0
        %1534 = vmatpush1.xpose.msra.mxu0 0.0
        %1535 = vmatprep.subr.mxu0 0.0
        %1536 = vmatpush1.xpose.msra.mxu0 0.0
        %1537 = vmatprep.subr.mxu0 0.0
        %1538 = vmatpush1.xpose.msra.mxu0 0.0
        %1539 = vmatprep.subr.mxu0 0.0
        %1540 = vmatpush1.xpose.msra.mxu0 0.0
        %1541 = vmatprep.subr.mxu0 0.0
        %1542 = vmatpush1.xpose.msra.mxu0 0.0
        %1543 = vmatprep.subr.mxu0 0.0
        %1544 = vmatpush1.xpose.msra.mxu0 0.0
        %1545 = vmatprep.subr.mxu0 0.0
        %1546 = vmatpush1.xpose.msra.mxu0 0.0
        %1547 = vmatprep.subr.mxu0 0.0
        %1548 = vmatpush1.xpose.msra.mxu0 0.0
        %1549 = vmatprep.subr.mxu0 0.0
        %1550 = vmatpush1.xpose.msra.mxu0 0.0
        %1551 = vmatprep.subr.mxu0 0.0
        %1552 = vmatpush1.xpose.msra.mxu0 0.0
        %1553 = vmatprep.subr.mxu0 0.0
        %1554 = vmatpush1.xpose.msra.mxu0 0.0
        %1555 = vmatprep.subr.mxu0 0.0
        %1556 = vmatpush1.xpose.msra.mxu0 0.0
        %1557 = vmatprep.subr.mxu0 0.0
        %1558 = vmatpush1.xpose.msra.mxu0 0.0
        %1559 = vmatprep.subr.mxu0 0.0
        %1560 = vmatpush1.xpose.msra.mxu0 0.0
        %1561 = vmatprep.subr.mxu0 0.0
        %1562 = vmatpush1.xpose.msra.mxu0 0.0
        %1563 = vmatprep.subr.mxu0 0.0
        %1564 = vmatpush1.xpose.msra.mxu0 0.0
        %1565 = vmatprep.subr.mxu0 0.0
        %1566 = vmatpush1.xpose.msra.mxu0 0.0
        %1567 = vmatprep.subr.mxu0 0.0
        %1568 = vmatpush1.xpose.msra.mxu0 0.0
        %1569 = vmatprep.subr.mxu0 0.0
        %1570 = vmatpush1.xpose.msra.mxu0 0.0
        %1571 = vmatprep.subr.mxu0 0.0
        %1572 = vmatpush1.xpose.msra.mxu0 0.0
        %1573 = vmatprep.subr.mxu0 0.0
        %1574 = vmatpush1.xpose.msra.mxu0 0.0
        %1575 = vmatprep.subr.mxu0 0.0
        %1576 = vmatpush1.xpose.msra.mxu0 0.0
        %1577 = vmatprep.subr.mxu0 0.0
        %1578 = vmatpush1.xpose.msra.mxu0 0.0
        %1579 = vmatprep.subr.mxu0 0.0
        %1580 = vmatpush1.xpose.msra.mxu0 0.0
        %1581 = vmatprep.subr.mxu0 0.0
        %1582 = vmatpush1.xpose.msra.mxu0 0.0
        %1583 = vmatprep.subr.mxu0 0.0
        %1584 = vmatpush1.xpose.msra.mxu0 0.0
        %1585 = vmatprep.mubr.f32.mxu0 0.0
        %1586 = vmatmul.mubr.f32.gmra.mrb[0].mxu0 %v1517
        %v1587 = vpop.f32.mrb[0].mxu0
        %v1588 = vadd.f32 0.0, %v1587
        %v1589 = vpop.f32.mrb[0].mxu0
        %1590 = vdwg.mxu0
        %v1591 = vsel %vm998, -4.2949673e+09, %v1588
        %v1592 = vsel %vm1077, %v1591, -inf
        %1593 = vmax.xlane.f32.xlu0 %v1592
        %v1594 = vpop.xlane.xlu0 %1593
        %v1595 = vsub.f32 %v1591, %v1594
        %v1596 = vmul.f32 %v1595, 1.442695
        %v1597 = vpow.pop %v1596
        %v1598 = vsel %vm1077, %v1597, 0.0
        %1599 = vadd.xlane.f32.xlu0 %v1598
        %v1600 = vpop.xlane.xlu0 %1599
        %v1601 = vrcp.pop %v1600
        %v1602 = vmul.f32 %v1601, %v723
        %1604 = vset.pattern.permute.xlu0 0
        %1605 = vperm.xlu0 %1604, %v1602
        %v1606 = vpop.permute.xlu0 %1605
        %v1608 = vmul.f32 %v1597, %v1606
        %1609 = vrot.lane.b32.xlu0 %v991, 116
        %v1610 = vpop.permute.xlu0 %1609
        %v1613 = vsel %vm1077, %v1608, 0
        %1615 = vmatprep.subr.mxu0 0.0
        %1616 = vmatpush1.msra.mxu0 %v1610
        %1617 = vmatprep.subr.mxu0 0.0
        %1618 = vmatpush1.msra.mxu0 0.0
        %1619 = vmatprep.subr.mxu0 0.0
        %1620 = vmatpush1.msra.mxu0 0.0
        %1621 = vmatprep.subr.mxu0 0.0
        %1622 = vmatpush1.msra.mxu0 0.0
        %1623 = vmatprep.subr.mxu0 0.0
        %1624 = vmatpush1.msra.mxu0 0.0
        %1625 = vmatprep.subr.mxu0 0.0
        %1626 = vmatpush1.msra.mxu0 0.0
        %1627 = vmatprep.subr.mxu0 0.0
        %1628 = vmatpush1.msra.mxu0 0.0
        %1629 = vmatprep.subr.mxu0 0.0
        %1630 = vmatpush1.msra.mxu0 0.0
        %1631 = vmatprep.subr.mxu0 0.0
        %1632 = vmatpush1.msra.mxu0 0.0
        %1633 = vmatprep.subr.mxu0 0.0
        %1634 = vmatpush1.msra.mxu0 0.0
        %1635 = vmatprep.subr.mxu0 0.0
        %1636 = vmatpush1.msra.mxu0 0.0
        %1637 = vmatprep.subr.mxu0 0.0
        %1638 = vmatpush1.msra.mxu0 0.0
        %1639 = vmatprep.subr.mxu0 0.0
        %1640 = vmatpush1.msra.mxu0 0.0
        %1641 = vmatprep.subr.mxu0 0.0
        %1642 = vmatpush1.msra.mxu0 0.0
        %1643 = vmatprep.subr.mxu0 0.0
        %1644 = vmatpush1.msra.mxu0 0.0
        %1645 = vmatprep.subr.mxu0 0.0
        %1646 = vmatpush1.msra.mxu0 0.0
        %1647 = vmatprep.subr.mxu0 0.0
        %1648 = vmatpush1.msra.mxu0 0.0
        %1649 = vmatprep.subr.mxu0 0.0
        %1650 = vmatpush1.msra.mxu0 0.0
        %1651 = vmatprep.subr.mxu0 0.0
        %1652 = vmatpush1.msra.mxu0 0.0
        %1653 = vmatprep.subr.mxu0 0.0
        %1654 = vmatpush1.msra.mxu0 0.0
        %1655 = vmatprep.subr.mxu0 0.0
        %1656 = vmatpush1.msra.mxu0 0.0
        %1657 = vmatprep.subr.mxu0 0.0
        %1658 = vmatpush1.msra.mxu0 0.0
        %1659 = vmatprep.subr.mxu0 0.0
        %1660 = vmatpush1.msra.mxu0 0.0
        %1661 = vmatprep.subr.mxu0 0.0
        %1662 = vmatpush1.msra.mxu0 0.0
        %1663 = vmatprep.subr.mxu0 0.0
        %1664 = vmatpush1.msra.mxu0 0.0
        %1665 = vmatprep.subr.mxu0 0.0
        %1666 = vmatpush1.msra.mxu0 0.0
        %1667 = vmatprep.subr.mxu0 0.0
        %1668 = vmatpush1.msra.mxu0 0.0
        %1669 = vmatprep.subr.mxu0 0.0
        %1670 = vmatpush1.msra.mxu0 0.0
        %1671 = vmatprep.subr.mxu0 0.0
        %1672 = vmatpush1.msra.mxu0 0.0
        %1673 = vmatprep.subr.mxu0 0.0
        %1674 = vmatpush1.msra.mxu0 0.0
        %1675 = vmatprep.subr.mxu0 0.0
        %1676 = vmatpush1.msra.mxu0 0.0
        %1677 = vmatprep.subr.mxu0 0.0
        %1678 = vmatpush1.msra.mxu0 0.0
        %1679 = vmatprep.mubr.f32.mxu0 0.0
        %1680 = vmatmul.mubr.f32.gmra.mrb[0].mxu0 %v1613
        %v1681 = vpop.f32.mrb[0].mxu0
        %v1682 = vadd.f32 0.0, %v1681
        %v1683 = vpop.f32.mrb[0].mxu0
        %1684 = vdwg.mxu0
        %1685 = vrot.lane.b32.xlu0 %v989, 112
        %v1686 = vpop.permute.xlu0 %1685
        %1687 = vrot.lane.b32.xlu0 %v990, 112
        %v1688 = vpop.permute.xlu0 %1687
        %v1689 = vsel %vm999, %v1686, 0
        %v1691 = vsel %vm999, %v1688, 0
        %1693 = vmatprep.subr.mxu0 0.0
        %1694 = vmatpush1.xpose.msra.mxu0 %v1691
        %1695 = vmatprep.subr.mxu0 0.0
        %1696 = vmatpush1.xpose.msra.mxu0 0.0
        %1697 = vmatprep.subr.mxu0 0.0
        %1698 = vmatpush1.xpose.msra.mxu0 0.0
        %1699 = vmatprep.subr.mxu0 0.0
        %1700 = vmatpush1.xpose.msra.mxu0 0.0
        %1701 = vmatprep.subr.mxu0 0.0
        %1702 = vmatpush1.xpose.msra.mxu0 0.0
        %1703 = vmatprep.subr.mxu0 0.0
        %1704 = vmatpush1.xpose.msra.mxu0 0.0
        %1705 = vmatprep.subr.mxu0 0.0
        %1706 = vmatpush1.xpose.msra.mxu0 0.0
        %1707 = vmatprep.subr.mxu0 0.0
        %1708 = vmatpush1.xpose.msra.mxu0 0.0
        %1709 = vmatprep.subr.mxu0 0.0
        %1710 = vmatpush1.xpose.msra.mxu0 0.0
        %1711 = vmatprep.subr.mxu0 0.0
        %1712 = vmatpush1.xpose.msra.mxu0 0.0
        %1713 = vmatprep.subr.mxu0 0.0
        %1714 = vmatpush1.xpose.msra.mxu0 0.0
        %1715 = vmatprep.subr.mxu0 0.0
        %1716 = vmatpush1.xpose.msra.mxu0 0.0
        %1717 = vmatprep.subr.mxu0 0.0
        %1718 = vmatpush1.xpose.msra.mxu0 0.0
        %1719 = vmatprep.subr.mxu0 0.0
        %1720 = vmatpush1.xpose.msra.mxu0 0.0
        %1721 = vmatprep.subr.mxu0 0.0
        %1722 = vmatpush1.xpose.msra.mxu0 0.0
        %1723 = vmatprep.subr.mxu0 0.0
        %1724 = vmatpush1.xpose.msra.mxu0 0.0
        %1725 = vmatprep.subr.mxu0 0.0
        %1726 = vmatpush1.xpose.msra.mxu0 0.0
        %1727 = vmatprep.subr.mxu0 0.0
        %1728 = vmatpush1.xpose.msra.mxu0 0.0
        %1729 = vmatprep.subr.mxu0 0.0
        %1730 = vmatpush1.xpose.msra.mxu0 0.0
        %1731 = vmatprep.subr.mxu0 0.0
        %1732 = vmatpush1.xpose.msra.mxu0 0.0
        %1733 = vmatprep.subr.mxu0 0.0
        %1734 = vmatpush1.xpose.msra.mxu0 0.0
        %1735 = vmatprep.subr.mxu0 0.0
        %1736 = vmatpush1.xpose.msra.mxu0 0.0
        %1737 = vmatprep.subr.mxu0 0.0
        %1738 = vmatpush1.xpose.msra.mxu0 0.0
        %1739 = vmatprep.subr.mxu0 0.0
        %1740 = vmatpush1.xpose.msra.mxu0 0.0
        %1741 = vmatprep.subr.mxu0 0.0
        %1742 = vmatpush1.xpose.msra.mxu0 0.0
        %1743 = vmatprep.subr.mxu0 0.0
        %1744 = vmatpush1.xpose.msra.mxu0 0.0
        %1745 = vmatprep.subr.mxu0 0.0
        %1746 = vmatpush1.xpose.msra.mxu0 0.0
        %1747 = vmatprep.subr.mxu0 0.0
        %1748 = vmatpush1.xpose.msra.mxu0 0.0
        %1749 = vmatprep.subr.mxu0 0.0
        %1750 = vmatpush1.xpose.msra.mxu0 0.0
        %1751 = vmatprep.subr.mxu0 0.0
        %1752 = vmatpush1.xpose.msra.mxu0 0.0
        %1753 = vmatprep.subr.mxu0 0.0
        %1754 = vmatpush1.xpose.msra.mxu0 0.0
        %1755 = vmatprep.subr.mxu0 0.0
        %1756 = vmatpush1.xpose.msra.mxu0 0.0
        %1757 = vmatprep.mubr.f32.mxu0 0.0
        %1758 = vmatmul.mubr.f32.gmra.mrb[0].mxu0 %v1689
        %v1759 = vpop.f32.mrb[0].mxu0
        %v1760 = vadd.f32 0.0, %v1759
        %v1761 = vpop.f32.mrb[0].mxu0
        %1762 = vdwg.mxu0
        %v1763 = vsel %vm998, -4.2949673e+09, %v1760
        %v1764 = vsel %vm1077, %v1763, -inf
        %1765 = vmax.xlane.f32.xlu0 %v1764
        %v1766 = vpop.xlane.xlu0 %1765
        %v1767 = vsub.f32 %v1763, %v1766
        %v1768 = vmul.f32 %v1767, 1.442695
        %v1769 = vpow.pop %v1768
        %v1770 = vsel %vm1077, %v1769, 0.0
        %1771 = vadd.xlane.f32.xlu0 %v1770
        %v1772 = vpop.xlane.xlu0 %1771
        %v1773 = vrcp.pop %v1772
        %v1774 = vmul.f32 %v1773, %v723
        %1776 = vset.pattern.permute.xlu0 0
        %1777 = vperm.xlu0 %1776, %v1774
        %v1778 = vpop.permute.xlu0 %1777
        %v1780 = vmul.f32 %v1769, %v1778
        %1781 = vrot.lane.b32.xlu0 %v991, 112
        %v1782 = vpop.permute.xlu0 %1781
        %v1785 = vsel %vm1077, %v1780, 0
        %1787 = vmatprep.subr.mxu0 0.0
        %1788 = vmatpush1.msra.mxu0 %v1782
        %1789 = vmatprep.subr.mxu0 0.0
        %1790 = vmatpush1.msra.mxu0 0.0
        %1791 = vmatprep.subr.mxu0 0.0
        %1792 = vmatpush1.msra.mxu0 0.0
        %1793 = vmatprep.subr.mxu0 0.0
        %1794 = vmatpush1.msra.mxu0 0.0
        %1795 = vmatprep.subr.mxu0 0.0
        %1796 = vmatpush1.msra.mxu0 0.0
        %1797 = vmatprep.subr.mxu0 0.0
        %1798 = vmatpush1.msra.mxu0 0.0
        %1799 = vmatprep.subr.mxu0 0.0
        %1800 = vmatpush1.msra.mxu0 0.0
        %1801 = vmatprep.subr.mxu0 0.0
        %1802 = vmatpush1.msra.mxu0 0.0
        %1803 = vmatprep.subr.mxu0 0.0
        %1804 = vmatpush1.msra.mxu0 0.0
        %1805 = vmatprep.subr.mxu0 0.0
        %1806 = vmatpush1.msra.mxu0 0.0
        %1807 = vmatprep.subr.mxu0 0.0
        %1808 = vmatpush1.msra.mxu0 0.0
        %1809 = vmatprep.subr.mxu0 0.0
        %1810 = vmatpush1.msra.mxu0 0.0
        %1811 = vmatprep.subr.mxu0 0.0
        %1812 = vmatpush1.msra.mxu0 0.0
        %1813 = vmatprep.subr.mxu0 0.0
        %1814 = vmatpush1.msra.mxu0 0.0
        %1815 = vmatprep.subr.mxu0 0.0
        %1816 = vmatpush1.msra.mxu0 0.0
        %1817 = vmatprep.subr.mxu0 0.0
        %1818 = vmatpush1.msra.mxu0 0.0
        %1819 = vmatprep.subr.mxu0 0.0
        %1820 = vmatpush1.msra.mxu0 0.0
        %1821 = vmatprep.subr.mxu0 0.0
        %1822 = vmatpush1.msra.mxu0 0.0
        %1823 = vmatprep.subr.mxu0 0.0
        %1824 = vmatpush1.msra.mxu0 0.0
        %1825 = vmatprep.subr.mxu0 0.0
        %1826 = vmatpush1.msra.mxu0 0.0
        %1827 = vmatprep.subr.mxu0 0.0
        %1828 = vmatpush1.msra.mxu0 0.0
        %1829 = vmatprep.subr.mxu0 0.0
        %1830 = vmatpush1.msra.mxu0 0.0
        %1831 = vmatprep.subr.mxu0 0.0
        %1832 = vmatpush1.msra.mxu0 0.0
        %1833 = vmatprep.subr.mxu0 0.0
        %1834 = vmatpush1.msra.mxu0 0.0
        %1835 = vmatprep.subr.mxu0 0.0
        %1836 = vmatpush1.msra.mxu0 0.0
        %1837 = vmatprep.subr.mxu0 0.0
        %1838 = vmatpush1.msra.mxu0 0.0
        %1839 = vmatprep.subr.mxu0 0.0
        %1840 = vmatpush1.msra.mxu0 0.0
        %1841 = vmatprep.subr.mxu0 0.0
        %1842 = vmatpush1.msra.mxu0 0.0
        %1843 = vmatprep.subr.mxu0 0.0
        %1844 = vmatpush1.msra.mxu0 0.0
        %1845 = vmatprep.subr.mxu0 0.0
        %1846 = vmatpush1.msra.mxu0 0.0
        %1847 = vmatprep.subr.mxu0 0.0
        %1848 = vmatpush1.msra.mxu0 0.0
        %1849 = vmatprep.subr.mxu0 0.0
        %1850 = vmatpush1.msra.mxu0 0.0
        %1851 = vmatprep.mubr.f32.mxu0 0.0
        %1852 = vmatmul.mubr.f32.gmra.mrb[0].mxu0 %v1785
        %v1853 = vpop.f32.mrb[0].mxu0
        %v1854 = vadd.f32 0.0, %v1853
        %v1855 = vpop.f32.mrb[0].mxu0
        %1856 = vdwg.mxu0
        %1857 = vrot.lane.b32.xlu0 %v989, 108
        %v1858 = vpop.permute.xlu0 %1857
        %1859 = vrot.lane.b32.xlu0 %v990, 108
        %v1860 = vpop.permute.xlu0 %1859
        %v1861 = vsel %vm999, %v1858, 0
        %v1863 = vsel %vm999, %v1860, 0
        %1865 = vmatprep.subr.mxu0 0.0
        %1866 = vmatpush1.xpose.msra.mxu0 %v1863
        %1867 = vmatprep.subr.mxu0 0.0
        %1868 = vmatpush1.xpose.msra.mxu0 0.0
        %1869 = vmatprep.subr.mxu0 0.0
        %1870 = vmatpush1.xpose.msra.mxu0 0.0
        %1871 = vmatprep.subr.mxu0 0.0
        %1872 = vmatpush1.xpose.msra.mxu0 0.0
        %1873 = vmatprep.subr.mxu0 0.0
        %1874 = vmatpush1.xpose.msra.mxu0 0.0
        %1875 = vmatprep.subr.mxu0 0.0
        %1876 = vmatpush1.xpose.msra.mxu0 0.0
        %1877 = vmatprep.subr.mxu0 0.0
        %1878 = vmatpush1.xpose.msra.mxu0 0.0
        %1879 = vmatprep.subr.mxu0 0.0
        %1880 = vmatpush1.xpose.msra.mxu0 0.0
        %1881 = vmatprep.subr.mxu0 0.0
        %1882 = vmatpush1.xpose.msra.mxu0 0.0
        %1883 = vmatprep.subr.mxu0 0.0
        %1884 = vmatpush1.xpose.msra.mxu0 0.0
        %1885 = vmatprep.subr.mxu0 0.0
        %1886 = vmatpush1.xpose.msra.mxu0 0.0
        %1887 = vmatprep.subr.mxu0 0.0
        %1888 = vmatpush1.xpose.msra.mxu0 0.0
        %1889 = vmatprep.subr.mxu0 0.0
        %1890 = vmatpush1.xpose.msra.mxu0 0.0
        %1891 = vmatprep.subr.mxu0 0.0
        %1892 = vmatpush1.xpose.msra.mxu0 0.0
        %1893 = vmatprep.subr.mxu0 0.0
        %1894 = vmatpush1.xpose.msra.mxu0 0.0
        %1895 = vmatprep.subr.mxu0 0.0
        %1896 = vmatpush1.xpose.msra.mxu0 0.0
        %1897 = vmatprep.subr.mxu0 0.0
        %1898 = vmatpush1.xpose.msra.mxu0 0.0
        %1899 = vmatprep.subr.mxu0 0.0
        %1900 = vmatpush1.xpose.msra.mxu0 0.0
        %1901 = vmatprep.subr.mxu0 0.0
        %1902 = vmatpush1.xpose.msra.mxu0 0.0
        %1903 = vmatprep.subr.mxu0 0.0
        %1904 = vmatpush1.xpose.msra.mxu0 0.0
        %1905 = vmatprep.subr.mxu0 0.0
        %1906 = vmatpush1.xpose.msra.mxu0 0.0
        %1907 = vmatprep.subr.mxu0 0.0
        %1908 = vmatpush1.xpose.msra.mxu0 0.0
        %1909 = vmatprep.subr.mxu0 0.0
        %1910 = vmatpush1.xpose.msra.mxu0 0.0
        %1911 = vmatprep.subr.mxu0 0.0
        %1912 = vmatpush1.xpose.msra.mxu0 0.0
        %1913 = vmatprep.subr.mxu0 0.0
        %1914 = vmatpush1.xpose.msra.mxu0 0.0
        %1915 = vmatprep.subr.mxu0 0.0
        %1916 = vmatpush1.xpose.msra.mxu0 0.0
        %1917 = vmatprep.subr.mxu0 0.0
        %1918 = vmatpush1.xpose.msra.mxu0 0.0
        %1919 = vmatprep.subr.mxu0 0.0
        %1920 = vmatpush1.xpose.msra.mxu0 0.0
        %1921 = vmatprep.subr.mxu0 0.0
        %1922 = vmatpush1.xpose.msra.mxu0 0.0
        %1923 = vmatprep.subr.mxu0 0.0
        %1924 = vmatpush1.xpose.msra.mxu0 0.0
        %1925 = vmatprep.subr.mxu0 0.0
        %1926 = vmatpush1.xpose.msra.mxu0 0.0
        %1927 = vmatprep.subr.mxu0 0.0
        %1928 = vmatpush1.xpose.msra.mxu0 0.0
        %1929 = vmatprep.mubr.f32.mxu0 0.0
        %1930 = vmatmul.mubr.f32.gmra.mrb[0].mxu0 %v1861
        %v1931 = vpop.f32.mrb[0].mxu0
        %v1932 = vadd.f32 0.0, %v1931
        %v1933 = vpop.f32.mrb[0].mxu0
        %1934 = vdwg.mxu0
        %v1935 = vsel %vm998, -4.2949673e+09, %v1932
        %v1936 = vsel %vm1077, %v1935, -inf
        %1937 = vmax.xlane.f32.xlu0 %v1936
        %v1938 = vpop.xlane.xlu0 %1937
        %v1939 = vsub.f32 %v1935, %v1938
        %v1940 = vmul.f32 %v1939, 1.442695
        %v1941 = vpow.pop %v1940
        %v1942 = vsel %vm1077, %v1941, 0.0
        %1943 = vadd.xlane.f32.xlu0 %v1942
        %v1944 = vpop.xlane.xlu0 %1943
        %v1945 = vrcp.pop %v1944
        %v1946 = vmul.f32 %v1945, %v723
        %1948 = vset.pattern.permute.xlu0 0
        %1949 = vperm.xlu0 %1948, %v1946
        %v1950 = vpop.permute.xlu0 %1949
        %v1952 = vmul.f32 %v1941, %v1950
        %1953 = vrot.lane.b32.xlu0 %v991, 108
        %v1954 = vpop.permute.xlu0 %1953
        %v1957 = vsel %vm1077, %v1952, 0
        %1959 = vmatprep.subr.mxu0 0.0
        %1960 = vmatpush1.msra.mxu0 %v1954
        %1961 = vmatprep.subr.mxu0 0.0
        %1962 = vmatpush1.msra.mxu0 0.0
        %1963 = vmatprep.subr.mxu0 0.0
        %1964 = vmatpush1.msra.mxu0 0.0
        %1965 = vmatprep.subr.mxu0 0.0
        %1966 = vmatpush1.msra.mxu0 0.0
        %1967 = vmatprep.subr.mxu0 0.0
        %1968 = vmatpush1.msra.mxu0 0.0
        %1969 = vmatprep.subr.mxu0 0.0
        %1970 = vmatpush1.msra.mxu0 0.0
        %1971 = vmatprep.subr.mxu0 0.0
        %1972 = vmatpush1.msra.mxu0 0.0
        %1973 = vmatprep.subr.mxu0 0.0
        %1974 = vmatpush1.msra.mxu0 0.0
        %1975 = vmatprep.subr.mxu0 0.0
        %1976 = vmatpush1.msra.mxu0 0.0
        %1977 = vmatprep.subr.mxu0 0.0
        %1978 = vmatpush1.msra.mxu0 0.0
        %1979 = vmatprep.subr.mxu0 0.0
        %1980 = vmatpush1.msra.mxu0 0.0
        %1981 = vmatprep.subr.mxu0 0.0
        %1982 = vmatpush1.msra.mxu0 0.0
        %1983 = vmatprep.subr.mxu0 0.0
        %1984 = vmatpush1.msra.mxu0 0.0
        %1985 = vmatprep.subr.mxu0 0.0
        %1986 = vmatpush1.msra.mxu0 0.0
        %1987 = vmatprep.subr.mxu0 0.0
        %1988 = vmatpush1.msra.mxu0 0.0
        %1989 = vmatprep.subr.mxu0 0.0
        %1990 = vmatpush1.msra.mxu0 0.0
        %1991 = vmatprep.subr.mxu0 0.0
        %1992 = vmatpush1.msra.mxu0 0.0
        %1993 = vmatprep.subr.mxu0 0.0
        %1994 = vmatpush1.msra.mxu0 0.0
        %1995 = vmatprep.subr.mxu0 0.0
        %1996 = vmatpush1.msra.mxu0 0.0
        %1997 = vmatprep.subr.mxu0 0.0
        %1998 = vmatpush1.msra.mxu0 0.0
        %1999 = vmatprep.subr.mxu0 0.0
        %2000 = vmatpush1.msra.mxu0 0.0
        %2001 = vmatprep.subr.mxu0 0.0
        %2002 = vmatpush1.msra.mxu0 0.0
        %2003 = vmatprep.subr.mxu0 0.0
        %2004 = vmatpush1.msra.mxu0 0.0
        %2005 = vmatprep.subr.mxu0 0.0
        %2006 = vmatpush1.msra.mxu0 0.0
        %2007 = vmatprep.subr.mxu0 0.0
        %2008 = vmatpush1.msra.mxu0 0.0
        %2009 = vmatprep.subr.mxu0 0.0
        %2010 = vmatpush1.msra.mxu0 0.0
        %2011 = vmatprep.subr.mxu0 0.0
        %2012 = vmatpush1.msra.mxu0 0.0
        %2013 = vmatprep.subr.mxu0 0.0
        %2014 = vmatpush1.msra.mxu0 0.0
        %2015 = vmatprep.subr.mxu0 0.0
        %2016 = vmatpush1.msra.mxu0 0.0
        %2017 = vmatprep.subr.mxu0 0.0
        %2018 = vmatpush1.msra.mxu0 0.0
        %2019 = vmatprep.subr.mxu0 0.0
        %2020 = vmatpush1.msra.mxu0 0.0
        %2021 = vmatprep.subr.mxu0 0.0
        %2022 = vmatpush1.msra.mxu0 0.0
        %2023 = vmatprep.mubr.f32.mxu0 0.0
        %2024 = vmatmul.mubr.f32.gmra.mrb[0].mxu0 %v1957
        %v2025 = vpop.f32.mrb[0].mxu0
        %v2026 = vadd.f32 0.0, %v2025
        %v2027 = vpop.f32.mrb[0].mxu0
        %2028 = vdwg.mxu0
        %2029 = vrot.lane.b32.xlu0 %v989, 104
        %v2030 = vpop.permute.xlu0 %2029
        %2031 = vrot.lane.b32.xlu0 %v990, 104
        %v2032 = vpop.permute.xlu0 %2031
        %v2033 = vsel %vm999, %v2030, 0
        %v2035 = vsel %vm999, %v2032, 0
        %2037 = vmatprep.subr.mxu0 0.0
        %2038 = vmatpush1.xpose.msra.mxu0 %v2035
        %2039 = vmatprep.subr.mxu0 0.0
        %2040 = vmatpush1.xpose.msra.mxu0 0.0
        %2041 = vmatprep.subr.mxu0 0.0
        %2042 = vmatpush1.xpose.msra.mxu0 0.0
        %2043 = vmatprep.subr.mxu0 0.0
        %2044 = vmatpush1.xpose.msra.mxu0 0.0
        %2045 = vmatprep.subr.mxu0 0.0
        %2046 = vmatpush1.xpose.msra.mxu0 0.0
        %2047 = vmatprep.subr.mxu0 0.0
        %2048 = vmatpush1.xpose.msra.mxu0 0.0
        %2049 = vmatprep.subr.mxu0 0.0
        %2050 = vmatpush1.xpose.msra.mxu0 0.0
        %2051 = vmatprep.subr.mxu0 0.0
        %2052 = vmatpush1.xpose.msra.mxu0 0.0
        %2053 = vmatprep.subr.mxu0 0.0
        %2054 = vmatpush1.xpose.msra.mxu0 0.0
        %2055 = vmatprep.subr.mxu0 0.0
        %2056 = vmatpush1.xpose.msra.mxu0 0.0
        %2057 = vmatprep.subr.mxu0 0.0
        %2058 = vmatpush1.xpose.msra.mxu0 0.0
        %2059 = vmatprep.subr.mxu0 0.0
        %2060 = vmatpush1.xpose.msra.mxu0 0.0
        %2061 = vmatprep.subr.mxu0 0.0
        %2062 = vmatpush1.xpose.msra.mxu0 0.0
        %2063 = vmatprep.subr.mxu0 0.0
        %2064 = vmatpush1.xpose.msra.mxu0 0.0
        %2065 = vmatprep.subr.mxu0 0.0
        %2066 = vmatpush1.xpose.msra.mxu0 0.0
        %2067 = vmatprep.subr.mxu0 0.0
        %2068 = vmatpush1.xpose.msra.mxu0 0.0
        %2069 = vmatprep.subr.mxu0 0.0
        %2070 = vmatpush1.xpose.msra.mxu0 0.0
        %2071 = vmatprep.subr.mxu0 0.0
        %2072 = vmatpush1.xpose.msra.mxu0 0.0
        %2073 = vmatprep.subr.mxu0 0.0
        %2074 = vmatpush1.xpose.msra.mxu0 0.0
        %2075 = vmatprep.subr.mxu0 0.0
        %2076 = vmatpush1.xpose.msra.mxu0 0.0
        %2077 = vmatprep.subr.mxu0 0.0
        %2078 = vmatpush1.xpose.msra.mxu0 0.0
        %2079 = vmatprep.subr.mxu0 0.0
        %2080 = vmatpush1.xpose.msra.mxu0 0.0
        %2081 = vmatprep.subr.mxu0 0.0
        %2082 = vmatpush1.xpose.msra.mxu0 0.0
        %2083 = vmatprep.subr.mxu0 0.0
        %2084 = vmatpush1.xpose.msra.mxu0 0.0
        %2085 = vmatprep.subr.mxu0 0.0
        %2086 = vmatpush1.xpose.msra.mxu0 0.0
        %2087 = vmatprep.subr.mxu0 0.0
        %2088 = vmatpush1.xpose.msra.mxu0 0.0
        %2089 = vmatprep.subr.mxu0 0.0
        %2090 = vmatpush1.xpose.msra.mxu0 0.0
        %2091 = vmatprep.subr.mxu0 0.0
        %2092 = vmatpush1.xpose.msra.mxu0 0.0
        %2093 = vmatprep.subr.mxu0 0.0
        %2094 = vmatpush1.xpose.msra.mxu0 0.0
        %2095 = vmatprep.subr.mxu0 0.0
        %2096 = vmatpush1.xpose.msra.mxu0 0.0
        %2097 = vmatprep.subr.mxu0 0.0
        %2098 = vmatpush1.xpose.msra.mxu0 0.0
        %2099 = vmatprep.subr.mxu0 0.0
        %2100 = vmatpush1.xpose.msra.mxu0 0.0
        %2101 = vmatprep.mubr.f32.mxu0 0.0
        %2102 = vmatmul.mubr.f32.gmra.mrb[0].mxu0 %v2033
        %v2103 = vpop.f32.mrb[0].mxu0
        %v2104 = vadd.f32 0.0, %v2103
        %v2105 = vpop.f32.mrb[0].mxu0
        %2106 = vdwg.mxu0
        %v2107 = vsel %vm998, -4.2949673e+09, %v2104
        %v2108 = vsel %vm1077, %v2107, -inf
        %2109 = vmax.xlane.f32.xlu0 %v2108
        %v2110 = vpop.xlane.xlu0 %2109
        %v2111 = vsub.f32 %v2107, %v2110
        %v2112 = vmul.f32 %v2111, 1.442695
        %v2113 = vpow.pop %v2112
        %v2114 = vsel %vm1077, %v2113, 0.0
        %2115 = vadd.xlane.f32.xlu0 %v2114
        %v2116 = vpop.xlane.xlu0 %2115
        %v2117 = vrcp.pop %v2116
        %v2118 = vmul.f32 %v2117, %v723
        %2120 = vset.pattern.permute.xlu0 0
        %2121 = vperm.xlu0 %2120, %v2118
        %v2122 = vpop.permute.xlu0 %2121
        %v2124 = vmul.f32 %v2113, %v2122
        %2125 = vrot.lane.b32.xlu0 %v991, 104
        %v2126 = vpop.permute.xlu0 %2125
        %v2129 = vsel %vm1077, %v2124, 0
        %2131 = vmatprep.subr.mxu0 0.0
        %2132 = vmatpush1.msra.mxu0 %v2126
        %2133 = vmatprep.subr.mxu0 0.0
        %2134 = vmatpush1.msra.mxu0 0.0
        %2135 = vmatprep.subr.mxu0 0.0
        %2136 = vmatpush1.msra.mxu0 0.0
        %2137 = vmatprep.subr.mxu0 0.0
        %2138 = vmatpush1.msra.mxu0 0.0
        %2139 = vmatprep.subr.mxu0 0.0
        %2140 = vmatpush1.msra.mxu0 0.0
        %2141 = vmatprep.subr.mxu0 0.0
        %2142 = vmatpush1.msra.mxu0 0.0
        %2143 = vmatprep.subr.mxu0 0.0
        %2144 = vmatpush1.msra.mxu0 0.0
        %2145 = vmatprep.subr.mxu0 0.0
        %2146 = vmatpush1.msra.mxu0 0.0
        %2147 = vmatprep.subr.mxu0 0.0
        %2148 = vmatpush1.msra.mxu0 0.0
        %2149 = vmatprep.subr.mxu0 0.0
        %2150 = vmatpush1.msra.mxu0 0.0
        %2151 = vmatprep.subr.mxu0 0.0
        %2152 = vmatpush1.msra.mxu0 0.0
        %2153 = vmatprep.subr.mxu0 0.0
        %2154 = vmatpush1.msra.mxu0 0.0
        %2155 = vmatprep.subr.mxu0 0.0
        %2156 = vmatpush1.msra.mxu0 0.0
        %2157 = vmatprep.subr.mxu0 0.0
        %2158 = vmatpush1.msra.mxu0 0.0
        %2159 = vmatprep.subr.mxu0 0.0
        %2160 = vmatpush1.msra.mxu0 0.0
        %2161 = vmatprep.subr.mxu0 0.0
        %2162 = vmatpush1.msra.mxu0 0.0
        %2163 = vmatprep.subr.mxu0 0.0
        %2164 = vmatpush1.msra.mxu0 0.0
        %2165 = vmatprep.subr.mxu0 0.0
        %2166 = vmatpush1.msra.mxu0 0.0
        %2167 = vmatprep.subr.mxu0 0.0
        %2168 = vmatpush1.msra.mxu0 0.0
        %2169 = vmatprep.subr.mxu0 0.0
        %2170 = vmatpush1.msra.mxu0 0.0
        %2171 = vmatprep.subr.mxu0 0.0
        %2172 = vmatpush1.msra.mxu0 0.0
        %2173 = vmatprep.subr.mxu0 0.0
        %2174 = vmatpush1.msra.mxu0 0.0
        %2175 = vmatprep.subr.mxu0 0.0
        %2176 = vmatpush1.msra.mxu0 0.0
        %2177 = vmatprep.subr.mxu0 0.0
        %2178 = vmatpush1.msra.mxu0 0.0
        %2179 = vmatprep.subr.mxu0 0.0
        %2180 = vmatpush1.msra.mxu0 0.0
        %2181 = vmatprep.subr.mxu0 0.0
        %2182 = vmatpush1.msra.mxu0 0.0
        %2183 = vmatprep.subr.mxu0 0.0
        %2184 = vmatpush1.msra.mxu0 0.0
        %2185 = vmatprep.subr.mxu0 0.0
        %2186 = vmatpush1.msra.mxu0 0.0
        %2187 = vmatprep.subr.mxu0 0.0
        %2188 = vmatpush1.msra.mxu0 0.0
        %2189 = vmatprep.subr.mxu0 0.0
        %2190 = vmatpush1.msra.mxu0 0.0
        %2191 = vmatprep.subr.mxu0 0.0
        %2192 = vmatpush1.msra.mxu0 0.0
        %2193 = vmatprep.subr.mxu0 0.0
        %2194 = vmatpush1.msra.mxu0 0.0
        %2195 = vmatprep.mubr.f32.mxu0 0.0
        %2196 = vmatmul.mubr.f32.gmra.mrb[0].mxu0 %v2129
        %v2197 = vpop.f32.mrb[0].mxu0
        %v2198 = vadd.f32 0.0, %v2197
        %v2199 = vpop.f32.mrb[0].mxu0
        %2200 = vdwg.mxu0
        %2201 = vrot.lane.b32.xlu0 %v989, 100
        %v2202 = vpop.permute.xlu0 %2201
        %2203 = vrot.lane.b32.xlu0 %v990, 100
        %v2204 = vpop.permute.xlu0 %2203
        %v2205 = vsel %vm999, %v2202, 0
        %v2207 = vsel %vm999, %v2204, 0
        %2209 = vmatprep.subr.mxu0 0.0
        %2210 = vmatpush1.xpose.msra.mxu0 %v2207
        %2211 = vmatprep.subr.mxu0 0.0
        %2212 = vmatpush1.xpose.msra.mxu0 0.0
        %2213 = vmatprep.subr.mxu0 0.0
        %2214 = vmatpush1.xpose.msra.mxu0 0.0
        %2215 = vmatprep.subr.mxu0 0.0
        %2216 = vmatpush1.xpose.msra.mxu0 0.0
        %2217 = vmatprep.subr.mxu0 0.0
        %2218 = vmatpush1.xpose.msra.mxu0 0.0
        %2219 = vmatprep.subr.mxu0 0.0
        %2220 = vmatpush1.xpose.msra.mxu0 0.0
        %2221 = vmatprep.subr.mxu0 0.0
        %2222 = vmatpush1.xpose.msra.mxu0 0.0
        %2223 = vmatprep.subr.mxu0 0.0
        %2224 = vmatpush1.xpose.msra.mxu0 0.0
        %2225 = vmatprep.subr.mxu0 0.0
        %2226 = vmatpush1.xpose.msra.mxu0 0.0
        %2227 = vmatprep.subr.mxu0 0.0
        %2228 = vmatpush1.xpose.msra.mxu0 0.0
        %2229 = vmatprep.subr.mxu0 0.0
        %2230 = vmatpush1.xpose.msra.mxu0 0.0
        %2231 = vmatprep.subr.mxu0 0.0
        %2232 = vmatpush1.xpose.msra.mxu0 0.0
        %2233 = vmatprep.subr.mxu0 0.0
        %2234 = vmatpush1.xpose.msra.mxu0 0.0
        %2235 = vmatprep.subr.mxu0 0.0
        %2236 = vmatpush1.xpose.msra.mxu0 0.0
        %2237 = vmatprep.subr.mxu0 0.0
        %2238 = vmatpush1.xpose.msra.mxu0 0.0
        %2239 = vmatprep.subr.mxu0 0.0
        %2240 = vmatpush1.xpose.msra.mxu0 0.0
        %2241 = vmatprep.subr.mxu0 0.0
        %2242 = vmatpush1.xpose.msra.mxu0 0.0
        %2243 = vmatprep.subr.mxu0 0.0
        %2244 = vmatpush1.xpose.msra.mxu0 0.0
        %2245 = vmatprep.subr.mxu0 0.0
        %2246 = vmatpush1.xpose.msra.mxu0 0.0
        %2247 = vmatprep.subr.mxu0 0.0
        %2248 = vmatpush1.xpose.msra.mxu0 0.0
        %2249 = vmatprep.subr.mxu0 0.0
        %2250 = vmatpush1.xpose.msra.mxu0 0.0
        %2251 = vmatprep.subr.mxu0 0.0
        %2252 = vmatpush1.xpose.msra.mxu0 0.0
        %2253 = vmatprep.subr.mxu0 0.0
        %2254 = vmatpush1.xpose.msra.mxu0 0.0
        %2255 = vmatprep.subr.mxu0 0.0
        %2256 = vmatpush1.xpose.msra.mxu0 0.0
        %2257 = vmatprep.subr.mxu0 0.0
        %2258 = vmatpush1.xpose.msra.mxu0 0.0
        %2259 = vmatprep.subr.mxu0 0.0
        %2260 = vmatpush1.xpose.msra.mxu0 0.0
        %2261 = vmatprep.subr.mxu0 0.0
        %2262 = vmatpush1.xpose.msra.mxu0 0.0
        %2263 = vmatprep.subr.mxu0 0.0
        %2264 = vmatpush1.xpose.msra.mxu0 0.0
        %2265 = vmatprep.subr.mxu0 0.0
        %2266 = vmatpush1.xpose.msra.mxu0 0.0
        %2267 = vmatprep.subr.mxu0 0.0
        %2268 = vmatpush1.xpose.msra.mxu0 0.0
        %2269 = vmatprep.subr.mxu0 0.0
        %2270 = vmatpush1.xpose.msra.mxu0 0.0
        %2271 = vmatprep.subr.mxu0 0.0
        %2272 = vmatpush1.xpose.msra.mxu0 0.0
        %2273 = vmatprep.mubr.f32.mxu0 0.0
        %2274 = vmatmul.mubr.f32.gmra.mrb[0].mxu0 %v2205
        %v2275 = vpop.f32.mrb[0].mxu0
        %v2276 = vadd.f32 0.0, %v2275
        %v2277 = vpop.f32.mrb[0].mxu0
        %2278 = vdwg.mxu0
        %v2279 = vsel %vm998, -4.2949673e+09, %v2276
        %v2280 = vsel %vm1077, %v2279, -inf
        %2281 = vmax.xlane.f32.xlu0 %v2280
        %v2282 = vpop.xlane.xlu0 %2281
        %v2283 = vsub.f32 %v2279, %v2282
        %v2284 = vmul.f32 %v2283, 1.442695
        %v2285 = vpow.pop %v2284
        %v2286 = vsel %vm1077, %v2285, 0.0
        %2287 = vadd.xlane.f32.xlu0 %v2286
        %v2288 = vpop.xlane.xlu0 %2287
        %v2289 = vrcp.pop %v2288
        %v2290 = vmul.f32 %v2289, %v723
        %2292 = vset.pattern.permute.xlu0 0
        %2293 = vperm.xlu0 %2292, %v2290
        %v2294 = vpop.permute.xlu0 %2293
        %v2296 = vmul.f32 %v2285, %v2294
        %2297 = vrot.lane.b32.xlu0 %v991, 100
        %v2298 = vpop.permute.xlu0 %2297
        %v2301 = vsel %vm1077, %v2296, 0
        %2303 = vmatprep.subr.mxu0 0.0
        %2304 = vmatpush1.msra.mxu0 %v2298
        %2305 = vmatprep.subr.mxu0 0.0
        %2306 = vmatpush1.msra.mxu0 0.0
        %2307 = vmatprep.subr.mxu0 0.0
        %2308 = vmatpush1.msra.mxu0 0.0
        %2309 = vmatprep.subr.mxu0 0.0
        %2310 = vmatpush1.msra.mxu0 0.0
        %2311 = vmatprep.subr.mxu0 0.0
        %2312 = vmatpush1.msra.mxu0 0.0
        %2313 = vmatprep.subr.mxu0 0.0
        %2314 = vmatpush1.msra.mxu0 0.0
        %2315 = vmatprep.subr.mxu0 0.0
        %2316 = vmatpush1.msra.mxu0 0.0
        %2317 = vmatprep.subr.mxu0 0.0
        %2318 = vmatpush1.msra.mxu0 0.0
        %2319 = vmatprep.subr.mxu0 0.0
        %2320 = vmatpush1.msra.mxu0 0.0
        %2321 = vmatprep.subr.mxu0 0.0
        %2322 = vmatpush1.msra.mxu0 0.0
        %2323 = vmatprep.subr.mxu0 0.0
        %2324 = vmatpush1.msra.mxu0 0.0
        %2325 = vmatprep.subr.mxu0 0.0
        %2326 = vmatpush1.msra.mxu0 0.0
        %2327 = vmatprep.subr.mxu0 0.0
        %2328 = vmatpush1.msra.mxu0 0.0
        %2329 = vmatprep.subr.mxu0 0.0
        %2330 = vmatpush1.msra.mxu0 0.0
        %2331 = vmatprep.subr.mxu0 0.0
        %2332 = vmatpush1.msra.mxu0 0.0
        %2333 = vmatprep.subr.mxu0 0.0
        %2334 = vmatpush1.msra.mxu0 0.0
        %2335 = vmatprep.subr.mxu0 0.0
        %2336 = vmatpush1.msra.mxu0 0.0
        %2337 = vmatprep.subr.mxu0 0.0
        %2338 = vmatpush1.msra.mxu0 0.0
        %2339 = vmatprep.subr.mxu0 0.0
        %2340 = vmatpush1.msra.mxu0 0.0
        %2341 = vmatprep.subr.mxu0 0.0
        %2342 = vmatpush1.msra.mxu0 0.0
        %2343 = vmatprep.subr.mxu0 0.0
        %2344 = vmatpush1.msra.mxu0 0.0
        %2345 = vmatprep.subr.mxu0 0.0
        %2346 = vmatpush1.msra.mxu0 0.0
        %2347 = vmatprep.subr.mxu0 0.0
        %2348 = vmatpush1.msra.mxu0 0.0
        %2349 = vmatprep.subr.mxu0 0.0
        %2350 = vmatpush1.msra.mxu0 0.0
        %2351 = vmatprep.subr.mxu0 0.0
        %2352 = vmatpush1.msra.mxu0 0.0
        %2353 = vmatprep.subr.mxu0 0.0
        %2354 = vmatpush1.msra.mxu0 0.0
        %2355 = vmatprep.subr.mxu0 0.0
        %2356 = vmatpush1.msra.mxu0 0.0
        %2357 = vmatprep.subr.mxu0 0.0
        %2358 = vmatpush1.msra.mxu0 0.0
        %2359 = vmatprep.subr.mxu0 0.0
        %2360 = vmatpush1.msra.mxu0 0.0
        %2361 = vmatprep.subr.mxu0 0.0
        %2362 = vmatpush1.msra.mxu0 0.0
        %2363 = vmatprep.subr.mxu0 0.0
        %2364 = vmatpush1.msra.mxu0 0.0
        %2365 = vmatprep.subr.mxu0 0.0
        %2366 = vmatpush1.msra.mxu0 0.0
        %2367 = vmatprep.mubr.f32.mxu0 0.0
        %2368 = vmatmul.mubr.f32.gmra.mrb[0].mxu0 %v2301
        %v2369 = vpop.f32.mrb[0].mxu0
        %v2370 = vadd.f32 0.0, %v2369
        %v2371 = vpop.f32.mrb[0].mxu0
        %2372 = vdwg.mxu0
        %2374 = vrot.lane.b32.xlu0 %v1338, 4
        %v2375 = vpop.permute.xlu0 %2374
        %2378 = vrot.lane.b32.xlu0 %v1510, 8
        %v2379 = vpop.permute.xlu0 %2378
        %2382 = vrot.lane.b32.xlu0 %v1682, 12
        %v2383 = vpop.permute.xlu0 %2382
        %2386 = vrot.lane.b32.xlu0 %v1854, 16
        %v2387 = vpop.permute.xlu0 %2386
        %2390 = vrot.lane.b32.xlu0 %v2026, 20
        %v2391 = vpop.permute.xlu0 %2390
        %2394 = vrot.lane.b32.xlu0 %v2198, 24
        %v2395 = vpop.permute.xlu0 %2394
        %2398 = vrot.lane.b32.xlu0 %v2370, 28
        %v2399 = vpop.permute.xlu0 %2398
        %v2401 = vsel %vm999, %v1165, %v2375
        %v2402 = vsel %vm1077, %v2401, %v2379
        %vm2403 = vcmask 97280
        %v2404 = vsel %vm2403, %v2402, %v2383
        %vm2405 = vcmask 130048
        %v2406 = vsel %vm2405, %v2404, %v2387
        %vm2407 = vcmask 162816
        %v2408 = vsel %vm2407, %v2406, %v2391
        %vm2409 = vcmask 195584
        %v2410 = vsel %vm2409, %v2408, %v2395
        %vm2411 = vcmask 228352
        %v2412 = vsel %vm2411, %v2410, %v2399
        %v2413 = vadd.f32 %v2412, %v721
        %v2414 = vsel %vm914, %v2413, 0.0
        %2415 = vadd.xlane.f32.xlu0 %v2414
        %v2416 = vpop.xlane.xlu0 %2415
        %v2417 = vrcp.pop 32.0
        %v2418 = vmul.f32 %v2416, %v2417
        %v2419 = vsub.f32 %v2413, %v2418
        %v2420 = vmul.f32 %v2419, %v2419
        %v2421 = vsel %vm914, %v2420, 0.0
        %2422 = vadd.xlane.f32.xlu0 %v2421
        %v2423 = vpop.xlane.xlu0 %2422
        %v2424 = vmul.f32 %v2423, 0.032258064
        %v2425 = vrsqrt.pop %v2424
        %v2426 = vmul.f32 %v2424, %v2425
        %vm2427 = vcmp.eq.f32.partialorder %v2424, inf
        %v2428 = vsel %vm2427, %v2424, %v2426
        %vm2429 = vcmp.eq.f32.partialorder %v2424, 0.0
        %v2430 = vand.u32 %v2424, 2147483648
        %v2431 = vsel %vm2429, %v2430, %v2428
        %v2432 = vadd.f32 %v2431, 1e-08
        %v2433 = vrcp.pop %v2432
        %v2434 = vld [vmem:[#allocation22] sm:$0x1]
        %v2436 = vlaneseq
        %v2437 = vshrl.u32 %v2436, 7
        %v2438 = vsub.s32 0, %v2437
        %v2439 = vrot.slane %v2434, %v2438
        %v2441 = vmul.f32 %v2439, %v2419
        %v2442 = vmul.f32 %v2441, %v2433
        %v2443 = vld [vmem:[#allocation24] sm:$0x1]
        %v2445 = vlaneseq
        %v2446 = vshrl.u32 %v2445, 7
        %v2447 = vsub.s32 0, %v2446
        %v2448 = vrot.slane %v2443, %v2447
        %v2450 = vadd.f32 %v2442, %v2448
        %2451 = vst.msk [vmem:[%s720] sm:$0xff] %vm914, %v2450
        %s2452 = sand.u32 %s364, 1
        %s2453 = scalar_lea.sflag [#allocation6], %s2452
        %s2454 = sand.u32 %s364, 1
        %s2455 = smul.addr %s2454, 8
        %s2456 = scalar_lea.vmem [#allocation25], %s2455
        // Predicated region
        $region129: #{tpu_custom_call.1} parent=71 // pred_check
          %p2457 = pneg %p374
        $region130: #{tpu_custom_call.1} parent=71 // pred_check_branch
          %2459 = sbr.rel (%p2457) target = $region132
        $region131: #{tpu_custom_call.1} parent=71 // pred_region
          %s2461 = ssub.s32 128, 128
          %2462 = vsyncadd %s2453, %s2461
          %s2463 = sadd.s32 %s45, %s44
          %s2464 = smul.addr %s2463, 128
          %s2465 = scalar_lea.hbm %s13, %s2464
          %s2467 = sshll.u32 %s2456, 4
          %s2468 = int_to_ptr.vmem [resolvable:$true] %s2467
          %2470 = dma.vmem_to_hbm [thread:$0]  %s2468, 128, %s2465, %s2453
        $region132: #{tpu_custom_call.1} parent=71 // pred_fallthru
          _
      $region72: #{tpu_custom_call.1} parent=5 // pred_fallthru
        _
      %p2471 = scmp.le.s32.totalorder 2, %s35
      // Predicated region
      $region133: #{tpu_custom_call.1} parent=5 // pred_check
        %p2472 = pneg %p2471
      $region134: #{tpu_custom_call.1} parent=5 // pred_check_branch
        %2474 = sbr.rel (%p2472) target = $region136
      $region135: #{tpu_custom_call.1} parent=5 // pred_region
        %s2475 = ssub.s32 %s35, 2
        // Predicated region
        $region137: #{tpu_custom_call.1} parent=135 // pred_check
          %p2476 = pneg %p380
        $region138: #{tpu_custom_call.1} parent=135 // pred_check_branch
          %2478 = sbr.rel (%p2476) target = $region140
        $region139: #{tpu_custom_call.1} parent=135 // pred_region
          %s2479 = sand.u32 %s365, 1
          %s2480 = scalar_lea.sflag [#allocation6], %s2479
          %s2481 = sand.u32 %s365, 1
          %s2482 = smul.addr %s2481, 8
          %s2483 = scalar_lea.vmem [#allocation25], %s2482
          %2484 = dma.done %s2480, 128
        $region140: #{tpu_custom_call.1} parent=135 // pred_fallthru
          _
      $region136: #{tpu_custom_call.1} parent=5 // pred_fallthru
        _
    $region6: #{tpu_custom_call.1} parent=1 // loop_footer
      %s39 = sadd.s32 1, %s35
    $region7: #{tpu_custom_call.1} parent=1 // loop_footer_branch
      %34 = sbr.rel target = $region3
    $region8: #{tpu_custom_call.1} parent=1 // loop_exit
      _
    %2485 = vsyncpa [#allocation5], 1
    %s2486 = scalar_lea.sflag [#allocation5], 1
    %2487 = vsyncpa %s2486, 1
    %2488 = vsyncpa [#allocation8], 1
    %s2489 = scalar_lea.sflag [#allocation8], 1
    %2490 = vsyncpa %s2489, 1
    %2491 = vsyncpa [#allocation11], 1
    %s2492 = scalar_lea.sflag [#allocation11], 1
    %2493 = vsyncpa %s2492, 1
    %2494 = vsyncpa [#allocation14], 1
    %2495 = vsyncpa [#allocation17], 1
    %2496 = vsyncpa [#allocation20], 1
    %2497 = vsyncpa [#allocation23], 1
    %2498 = vsyncpa [#allocation6], 1
    %s2499 = scalar_lea.sflag [#allocation6], 1
    %2500 = vsyncpa %s2499, 1

</llo_original>
